<compile_context>
chip_gen: v7x
topology: tpu7x:2x2x1
jax: 0.10.0
libtpu: 0.0.40
codegen_flags: <defaults>
</compile_context>

<pallas_src>
import functools

import jax
import jax.numpy as jnp
from jax import lax
from jax.experimental import pallas as pl
from jax.experimental.pallas import tpu as pltpu

LANE = 128            # TPU lane width: channel / codebook slabs padded to this
N_RES_BLOCKS = 2
ROW_CAP = 1024        # max Bt*L rows per grid step (~6 MiB f32 working set)


def _round_up(n, m):
    return ((n + m - 1) // m) * m


def _pick_batch_tile(B, L, row_cap=ROW_CAP):
    """Largest divisor of B whose (Bt*L, 128) row slab fits the VMEM budget."""
    best = 1
    for d in range(1, B + 1):
        if B % d == 0 and d * L <= row_cap:
            best = d
    return best


# ----------------------------------------------------------------------------
# Fused kernel: encoder + vector quantizer + decoder for one batch group.
# ----------------------------------------------------------------------------
def _vqvae_kernel(n_res, x_ref, *refs):
    pos = [0]

    def take(n):
        out = refs[pos[0]:pos[0] + n]
        pos[0] += n
        return out

    w_in, b_in = take(2)
    enc_res = take(4 * n_res)
    e_bf16, e_f32, e2 = take(3)          # bf16 codebook, f32 codebook, ||e||^2
    w_pq, b_pq = take(2)
    w_di, b_di = take(2)
    dec_res = take(4 * n_res)
    w_out, b_out = take(2)
    o_ref, loss_ref = take(2)

    f32, bf16 = jnp.float32, jnp.bfloat16
    bt, L, cin = x_ref.shape
    rows = bt * L
    cp = b_in.shape[-1]
    Mp = e2.shape[-1]

    # Per-sequence boundary masks for the 'same'-padding k=3 taps, hoisted once
    # per grid step and reused by every conv.  Zeroing the first / last row of
    # each sequence means pltpu.roll over the flattened (Bt*L, cp) slab never
    # leaks taps across batch boundaries.
    seq_pos = lax.broadcasted_iota(jnp.int32, (rows, cp), 0) % L
    is_first = seq_pos == 0
    is_last = seq_pos == (L - 1)

    def shift_prev(y):                   # out[t] = y[t-1], 0 at sequence start
        return jnp.where(is_first, 0.0, pltpu.roll(y, 1, axis=0))

    def shift_next(y):                   # out[t] = y[t+1], 0 at sequence end
        return jnp.where(is_last, 0.0, pltpu.roll(y, rows - 1, axis=0))

    def mm(a, w2d_ref):                  # bf16 operands at the dot, f32 acc
        return jnp.dot(a.astype(bf16), w2d_ref[...], preferred_element_type=f32)

    def conv3(x, w_ref, b_ref):
        # k=3 / stride-1 / 'same' conv as three accumulated per-tap dots.
        acc = jnp.dot(shift_prev(x).astype(bf16), w_ref[0],
                      preferred_element_type=f32)
        acc = acc + jnp.dot(x.astype(bf16), w_ref[1],
                            preferred_element_type=f32)
        acc = acc + jnp.dot(shift_next(x).astype(bf16), w_ref[2],
                            preferred_element_type=f32)
        return acc + b_ref[...]

    def res_blocks(h, wrefs):
        for r in range(n_res):
            w1, b1, w2, b2 = wrefs[4 * r:4 * r + 4]
            t = jnp.maximum(conv3(jnp.maximum(h, 0.0), w1, b1), 0.0)
            h = h + mm(t, w2) + b2[...]
        return h

    # ------------------------------ Encoder ------------------------------
    # Input conv (Cin=2): three tiny tap-dots on the narrow input, then the
    # wide (rows, cp) tap results are shifted (keeps rolls on 128-lane tiles).
    x = x_ref[...].reshape(rows, cin)                          # (rows, 2) f32
    taps = [jnp.dot(x, w_in[k], preferred_element_type=f32) for k in range(3)]
    h = shift_prev(taps[0]) + taps[1] + shift_next(taps[2]) + b_in[...]
    z = res_blocks(jnp.maximum(h, 0.0), enc_res)               # (rows, cp) f32

    # -------------------------- Vector quantizer --------------------------
    # argmin_m ||z - e_m||^2  ==  argmin_m (||e_m||^2 - 2 z.e_m).  The big
    # distance matmul is bf16/bf16 -> f32; padded codebook rows carry a huge
    # ||e||^2 so they can never win.
    zeT = lax.dot_general(z.astype(bf16), e_bf16[...],
                          dimension_numbers=(((1,), (1,)), ((), ())),
                          preferred_element_type=f32)          # (rows, Mp)
    d = e2[...] - 2.0 * zeT
    min_d = jnp.min(d, axis=1, keepdims=True)
    col = lax.broadcasted_iota(jnp.int32, d.shape, 1)
    idx = jnp.min(jnp.where(d <= min_d, col, Mp), axis=1, keepdims=True)
    onehot = (col == idx).astype(f32)                          # ties -> lowest
    zq = jnp.dot(onehot, e_f32[...], preferred_element_type=f32)  # exact rows

    # Commitment-loss lane-wise partial (padded channels are exactly 0 on both
    # sides).  Cross-lane reduce + (1+beta)/count scaling happens in wrapper.
    diff = zq - z
    part = jnp.sum(diff * diff, axis=0, keepdims=True)         # (1, cp)
    row8 = lax.broadcasted_iota(jnp.int32, (8, cp), 0)
    loss_ref[...] = jnp.where(row8 == 0, part, 0.0)

    # ------------------------------ Decoder ------------------------------
    q = mm(zq, w_pq) + b_pq[...]                               # post_quant 1x1
    dch = conv3(q, w_di, b_di)
    dch = res_blocks(dch, dec_res)
    dch = jnp.maximum(dch, 0.0)
    out = conv3(dch, w_out, b_out)                             # (rows, 2)
    o_ref[...] = out.reshape(bt, L, o_ref.shape[-1]).astype(o_ref.dtype)


def _fused_forward(x_bl2, prm, n_res, bt):
    B, L, cin = x_bl2.shape
    nblk = B // bt
    cout = prm["dec_out_b"].shape[-1]
    cp = prm["enc_in_b"].shape[-1]

    weights = [prm["enc_in_w"], prm["enc_in_b"]]
    for i in range(n_res):
        weights += [prm[f"enc_r{i}_w1"], prm[f"enc_r{i}_b1"],
                    prm[f"enc_r{i}_w2"], prm[f"enc_r{i}_b2"]]
    weights += [prm["codebook_bf16"], prm["codebook_f32"], prm["e2"]]
    weights += [prm["pq_w"], prm["pq_b"], prm["dec_in_w"], prm["dec_in_b"]]
    for i in range(n_res):
        weights += [prm[f"dec_r{i}_w1"], prm[f"dec_r{i}_b1"],
                    prm[f"dec_r{i}_w2"], prm[f"dec_r{i}_b2"]]
    weights += [prm["dec_out_w"], prm["dec_out_b"]]

    vmem = pl.BlockSpec(memory_space=pltpu.MemorySpace.VMEM)
    dec, loss = pl.pallas_call(
        functools.partial(_vqvae_kernel, n_res),
        out_shape=(jax.ShapeDtypeStruct((B, L, cout), jnp.float32),
                   jax.ShapeDtypeStruct((nblk * 8, cp), jnp.float32)),
        grid=(nblk,),
        in_specs=[pl.BlockSpec((bt, L, cin), lambda b: (b, 0, 0))]
                 + [vmem] * len(weights),
        out_specs=(pl.BlockSpec((bt, L, cout), lambda b: (b, 0, 0)),
                   pl.BlockSpec((8, cp), lambda b: (b, 0))),
        # Batch groups are independent -> "parallel" (shards across both
        # TensorCores on v7x; harmless on v5e/v6e).  Working set << scoped
        # VMEM defaults, so vmem_limit_bytes is left untouched.
        compiler_params=pltpu.CompilerParams(
            dimension_semantics=("parallel",)),
    )(x_bl2, *weights)
    return dec, loss


# ----------------------------------------------------------------------------
# Parameter init (deterministic, synthetic) + lane/codebook padding, bf16 prep.
# ----------------------------------------------------------------------------
def init_params(key, hidden_dim, n_embed, embed_dim, n_res_blocks=N_RES_BLOCKS):
    assert embed_dim == hidden_dim, "quantizer acts directly on encoder output"
    keys = jax.random.split(key, 32)
    ki = iter(range(32))

    def conv_w(k, kern, cin, cout):
        return 0.1 * jax.random.normal(keys[k], (kern, cin, cout), jnp.float32)

    p = {}
    p["enc_in_w"] = conv_w(next(ki), 3, 2, hidden_dim)
    p["enc_in_b"] = jnp.zeros((hidden_dim,), jnp.float32)
    for i in range(n_res_blocks):
        p[f"enc_r{i}_w1"] = conv_w(next(ki), 3, hidden_dim, hidden_dim)
        p[f"enc_r{i}_b1"] = jnp.zeros((hidden_dim,), jnp.float32)
        p[f"enc_r{i}_w2"] = conv_w(next(ki), 1, hidden_dim, hidden_dim)
        p[f"enc_r{i}_b2"] = jnp.zeros((hidden_dim,), jnp.float32)
    p["codebook"] = jax.random.uniform(
        keys[next(ki)], (n_embed, embed_dim), jnp.float32,
        minval=-1.0 / n_embed, maxval=1.0 / n_embed)
    p["pq_w"] = conv_w(next(ki), 1, hidden_dim, hidden_dim)
    p["pq_b"] = jnp.zeros((hidden_dim,), jnp.float32)
    p["dec_in_w"] = conv_w(next(ki), 3, hidden_dim, hidden_dim)
    p["dec_in_b"] = jnp.zeros((hidden_dim,), jnp.float32)
    for i in range(n_res_blocks):
        p[f"dec_r{i}_w1"] = conv_w(next(ki), 3, hidden_dim, hidden_dim)
        p[f"dec_r{i}_b1"] = jnp.zeros((hidden_dim,), jnp.float32)
        p[f"dec_r{i}_w2"] = conv_w(next(ki), 1, hidden_dim, hidden_dim)
        p[f"dec_r{i}_b2"] = jnp.zeros((hidden_dim,), jnp.float32)
    p["dec_out_w"] = conv_w(next(ki), 3, hidden_dim, 2)
    p["dec_out_b"] = jnp.zeros((2,), jnp.float32)
    return p


def _prepare_params(p, cp, n_res):
    """Zero-pad channel dims to the 128-lane slab, pad the codebook rows to a
    multiple of 128 (padded rows get a huge ||e||^2), and cast MXU weights to
    bf16 (biases / f32 codebook stay f32).  Padded channels remain exactly 0
    end-to-end, so results equal the unpadded computation."""
    f32, bf16 = jnp.float32, jnp.bfloat16

    def pad_w3(w):                       # (3, ci, co) -> (3, cp, cp) bf16
        k, ci, co = w.shape
        return jnp.zeros((k, cp, cp), f32).at[:, :ci, :co].set(w).astype(bf16)

    def pad_w1(w):                       # (1, ci, co) -> (cp, cp) bf16
        _, ci, co = w.shape
        return jnp.zeros((cp, cp), f32).at[:ci, :co].set(w[0]).astype(bf16)

    def pad_b(b):                        # (C,) -> (1, cp) f32
        return jnp.zeros((1, cp), f32).at[0, :b.shape[0]].set(b)

    q = {}
    # input conv: Cin=2 stays narrow (3 tap-dots in-kernel), f32, cout padded
    _, ci, co = p["enc_in_w"].shape
    q["enc_in_w"] = jnp.zeros((3, ci, cp), f32).at[:, :, :co].set(p["enc_in_w"])
    q["enc_in_b"] = pad_b(p["enc_in_b"])
    for i in range(n_res):
        q[f"enc_r{i}_w1"] = pad_w3(p[f"enc_r{i}_w1"])
        q[f"enc_r{i}_b1"] = pad_b(p[f"enc_r{i}_b1"])
        q[f"enc_r{i}_w2"] = pad_w1(p[f"enc_r{i}_w2"])
        q[f"enc_r{i}_b2"] = pad_b(p[f"enc_r{i}_b2"])

    m, ed = p["codebook"].shape
    mp = _round_up(m, LANE)
    cb = jnp.zeros((mp, cp), f32).at[:m, :ed].set(p["codebook"])
    q["codebook_f32"] = cb
    q["codebook_bf16"] = cb.astype(bf16)
    e2 = jnp.sum(cb * cb, axis=1)
    q["e2"] = jnp.where(jnp.arange(mp) < m, e2, 1e30).reshape(1, mp)

    q["pq_w"] = pad_w1(p["pq_w"])
    q["pq_b"] = pad_b(p["pq_b"])
    q["dec_in_w"] = pad_w3(p["dec_in_w"])
    q["dec_in_b"] = pad_b(p["dec_in_b"])
    for i in range(n_res):
        q[f"dec_r{i}_w1"] = pad_w3(p[f"dec_r{i}_w1"])
        q[f"dec_r{i}_b1"] = pad_b(p[f"dec_r{i}_b1"])
        q[f"dec_r{i}_w2"] = pad_w1(p[f"dec_r{i}_w2"])
        q[f"dec_r{i}_b2"] = pad_b(p[f"dec_r{i}_b2"])
    # output conv: Cout=2 stays narrow (inherent to the model)
    _, ci, co = p["dec_out_w"].shape
    q["dec_out_w"] = (jnp.zeros((3, cp, co), f32)
                      .at[:, :ci, :].set(p["dec_out_w"])).astype(bf16)
    q["dec_out_b"] = p["dec_out_b"].reshape(1, co)
    return q


# ----------------------------------------------------------------------------
# Full forward pass.
# ----------------------------------------------------------------------------
def vqvae_freq_forward(params, x_ncl, beta=0.5, n_res_blocks=N_RES_BLOCKS):
    """x_ncl: (B, 2, series_length // 2) in PyTorch NCL layout.
    Returns (dec, diff) with dec shaped like x_ncl and diff a scalar."""
    hidden_dim = params["enc_in_w"].shape[-1]
    embed_dim = params["codebook"].shape[-1]
    cp = _round_up(max(hidden_dim, embed_dim), LANE)
    prm = _prepare_params(params, cp, n_res_blocks)

    x = jnp.transpose(x_ncl, (0, 2, 1))               # NCL -> (B, L, 2), tiny
    B, L, _ = x.shape
    bt = _pick_batch_tile(B, L)

    dec, loss_part = _fused_forward(x, prm, n_res_blocks, bt)

    # forward value of mean((sg(zq)-z)^2) + beta*mean((zq-sg(z))^2); padded
    # channels contribute 0 -> divide by the REAL element count.
    diff = jnp.sum(loss_part) * ((1.0 + beta) / float(B * L * embed_dim))
    return jnp.transpose(dec, (0, 2, 1)), diff        # back to (B, 2, L)


if __name__ == "__main__":
    # Small shapes consistent with the module's constructor
    hidden_dim = 32
    series_length = 16          # encoder/decoder operate on series_length // 2 = 8
    n_embed = 64
    embed_dim = 32
    stride = 1                  # TODO(synk): stride>1 down/upsampling not implemented
    batch = 2

    key = jax.random.PRNGKey(0)
    k_x, k_p = jax.random.split(key)
    x = jax.random.normal(k_x, (batch, 2, series_length // 2), jnp.float32)
    params = init_params(k_p, hidden_dim, n_embed, embed_dim)

    fwd = jax.jit(functools.partial(vqvae_freq_forward, beta=0.5))
    dec, diff = fwd(params, x)
    jax.block_until_ready((dec, diff))

    assert dec.shape == x.shape, (dec.shape, x.shape)
    assert dec.dtype == jnp.float32 and diff.dtype == jnp.float32
    assert bool(jnp.isfinite(dec).all()) and bool(jnp.isfinite(diff))
    print("KERNEL_OK")
</pallas_src>

<mosaic_0001>
module attributes {stable_mosaic.version = 11 : i64} {
  func.func @_vqvae_kernel(%arg0: i32, %arg1: memref<2x8x2xf32, #tpu.memory_space<vmem>>, %arg2: memref<3x2x128xf32, #tpu.memory_space<vmem>>, %arg3: memref<1x128xf32, #tpu.memory_space<vmem>>, %arg4: memref<3x128x128xbf16, #tpu.memory_space<vmem>>, %arg5: memref<1x128xf32, #tpu.memory_space<vmem>>, %arg6: memref<128x128xbf16, #tpu.memory_space<vmem>>, %arg7: memref<1x128xf32, #tpu.memory_space<vmem>>, %arg8: memref<3x128x128xbf16, #tpu.memory_space<vmem>>, %arg9: memref<1x128xf32, #tpu.memory_space<vmem>>, %arg10: memref<128x128xbf16, #tpu.memory_space<vmem>>, %arg11: memref<1x128xf32, #tpu.memory_space<vmem>>, %arg12: memref<128x128xbf16, #tpu.memory_space<vmem>>, %arg13: memref<128x128xf32, #tpu.memory_space<vmem>>, %arg14: memref<1x128xf32, #tpu.memory_space<vmem>>, %arg15: memref<128x128xbf16, #tpu.memory_space<vmem>>, %arg16: memref<1x128xf32, #tpu.memory_space<vmem>>, %arg17: memref<3x128x128xbf16, #tpu.memory_space<vmem>>, %arg18: memref<1x128xf32, #tpu.memory_space<vmem>>, %arg19: memref<3x128x128xbf16, #tpu.memory_space<vmem>>, %arg20: memref<1x128xf32, #tpu.memory_space<vmem>>, %arg21: memref<128x128xbf16, #tpu.memory_space<vmem>>, %arg22: memref<1x128xf32, #tpu.memory_space<vmem>>, %arg23: memref<3x128x128xbf16, #tpu.memory_space<vmem>>, %arg24: memref<1x128xf32, #tpu.memory_space<vmem>>, %arg25: memref<128x128xbf16, #tpu.memory_space<vmem>>, %arg26: memref<1x128xf32, #tpu.memory_space<vmem>>, %arg27: memref<3x128x2xbf16, #tpu.memory_space<vmem>>, %arg28: memref<1x2xf32, #tpu.memory_space<vmem>>, %arg29: memref<2x8x2xf32, #tpu.memory_space<vmem>>, %arg30: memref<8x128xf32, #tpu.memory_space<vmem>>) attributes {dimension_semantics = [#tpu.dimension_semantics<parallel>], iteration_bounds = array<i64: 1>, scalar_prefetch = 0 : i64, scratch_operands = 0 : i64, tpu.core_type = #tpu.core_type<tc>, window_params = [{transform_indices = @transform_0, window_bounds = array<i64: 2, 8, 2>}, {pipeline_mode = #tpu.pipeline_mode<synchronous>, transform_indices = @transform_1, window_bounds = array<i64: 3, 2, 128>}, {pipeline_mode = #tpu.pipeline_mode<synchronous>, transform_indices = @transform_2, window_bounds = array<i64: 1, 128>}, {pipeline_mode = #tpu.pipeline_mode<synchronous>, transform_indices = @transform_3, window_bounds = array<i64: 3, 128, 128>}, {pipeline_mode = #tpu.pipeline_mode<synchronous>, transform_indices = @transform_4, window_bounds = array<i64: 1, 128>}, {pipeline_mode = #tpu.pipeline_mode<synchronous>, transform_indices = @transform_5, window_bounds = array<i64: 128, 128>}, {pipeline_mode = #tpu.pipeline_mode<synchronous>, transform_indices = @transform_6, window_bounds = array<i64: 1, 128>}, {pipeline_mode = #tpu.pipeline_mode<synchronous>, transform_indices = @transform_7, window_bounds = array<i64: 3, 128, 128>}, {pipeline_mode = #tpu.pipeline_mode<synchronous>, transform_indices = @transform_8, window_bounds = array<i64: 1, 128>}, {pipeline_mode = #tpu.pipeline_mode<synchronous>, transform_indices = @transform_9, window_bounds = array<i64: 128, 128>}, {pipeline_mode = #tpu.pipeline_mode<synchronous>, transform_indices = @transform_10, window_bounds = array<i64: 1, 128>}, {pipeline_mode = #tpu.pipeline_mode<synchronous>, transform_indices = @transform_11, window_bounds = array<i64: 128, 128>}, {pipeline_mode = #tpu.pipeline_mode<synchronous>, transform_indices = @transform_12, window_bounds = array<i64: 128, 128>}, {pipeline_mode = #tpu.pipeline_mode<synchronous>, transform_indices = @transform_13, window_bounds = array<i64: 1, 128>}, {pipeline_mode = #tpu.pipeline_mode<synchronous>, transform_indices = @transform_14, window_bounds = array<i64: 128, 128>}, {pipeline_mode = #tpu.pipeline_mode<synchronous>, transform_indices = @transform_15, window_bounds = array<i64: 1, 128>}, {pipeline_mode = #tpu.pipeline_mode<synchronous>, transform_indices = @transform_16, window_bounds = array<i64: 3, 128, 128>}, {pipeline_mode = #tpu.pipeline_mode<synchronous>, transform_indices = @transform_17, window_bounds = array<i64: 1, 128>}, {pipeline_mode = #tpu.pipeline_mode<synchronous>, transform_indices = @transform_18, window_bounds = array<i64: 3, 128, 128>}, {pipeline_mode = #tpu.pipeline_mode<synchronous>, transform_indices = @transform_19, window_bounds = array<i64: 1, 128>}, {pipeline_mode = #tpu.pipeline_mode<synchronous>, transform_indices = @transform_20, window_bounds = array<i64: 128, 128>}, {pipeline_mode = #tpu.pipeline_mode<synchronous>, transform_indices = @transform_21, window_bounds = array<i64: 1, 128>}, {pipeline_mode = #tpu.pipeline_mode<synchronous>, transform_indices = @transform_22, window_bounds = array<i64: 3, 128, 128>}, {pipeline_mode = #tpu.pipeline_mode<synchronous>, transform_indices = @transform_23, window_bounds = array<i64: 1, 128>}, {pipeline_mode = #tpu.pipeline_mode<synchronous>, transform_indices = @transform_24, window_bounds = array<i64: 128, 128>}, {pipeline_mode = #tpu.pipeline_mode<synchronous>, transform_indices = @transform_25, window_bounds = array<i64: 1, 128>}, {pipeline_mode = #tpu.pipeline_mode<synchronous>, transform_indices = @transform_26, window_bounds = array<i64: 3, 128, 2>}, {pipeline_mode = #tpu.pipeline_mode<synchronous>, transform_indices = @transform_27, window_bounds = array<i64: 1, 2>}, {transform_indices = @transform_28, window_bounds = array<i64: 2, 8, 2>}, {transform_indices = @transform_29, window_bounds = array<i64: 8, 128>}]} {
    %0 = tpu.iota {dimensions = array<i32: 0>} : vector<16x128xi32>
    %c8_i32 = arith.constant 8 : i32
    %c0_i32 = arith.constant 0 : i32
    %1 = arith.cmpi eq, %c8_i32, %c0_i32 : i32
    %c1_i32 = arith.constant 1 : i32
    %2 = arith.select %1, %c1_i32, %c8_i32 : i32
    %3 = vector.broadcast %2 : i32 to vector<16x128xi32>
    %4 = arith.remsi %0, %3 : vector<16x128xi32>
    %c0_i32_0 = arith.constant 0 : i32
    %5 = vector.broadcast %c0_i32_0 : i32 to vector<16x128xi32>
    %6 = arith.cmpi ne, %4, %5 : vector<16x128xi32>
    %c0_i32_1 = arith.constant 0 : i32
    %7 = vector.broadcast %c0_i32_1 : i32 to vector<16x128xi32>
    %8 = arith.cmpi slt, %4, %7 : vector<16x128xi32>
    %c0_i32_2 = arith.constant 0 : i32
    %9 = arith.cmpi slt, %2, %c0_i32_2 : i32
    %10 = vector.broadcast %9 : i1 to vector<16x128xi1>
    %11 = vector.broadcast %10 : vector<16x128xi1> to vector<16x128xi1>
    %12 = arith.xori %8, %11 : vector<16x128xi1>
    %13 = arith.andi %12, %6 : vector<16x128xi1>
    %14 = vector.broadcast %2 : i32 to vector<16x128xi32>
    %15 = arith.addi %4, %14 : vector<16x128xi32>
    %16 = arith.select %13, %15, %4 : vector<16x128xi1>, vector<16x128xi32>
    %c0_i32_3 = arith.constant 0 : i32
    %17 = vector.broadcast %c0_i32_3 : i32 to vector<16x128xi32>
    %18 = arith.cmpi eq, %16, %17 : vector<16x128xi32>
    %c7_i32 = arith.constant 7 : i32
    %19 = vector.broadcast %c7_i32 : i32 to vector<16x128xi32>
    %20 = arith.cmpi eq, %16, %19 : vector<16x128xi32>
    %c0 = arith.constant 0 : index
    %c0_4 = arith.constant 0 : index
    %c0_5 = arith.constant 0 : index
    %21 = vector.load %arg1[%c0, %c0_4, %c0_5] : memref<2x8x2xf32, #tpu.memory_space<vmem>>, vector<2x8x2xf32>
    %22 = vector.shape_cast %21 : vector<2x8x2xf32> to vector<16x2xf32>
    %c0_6 = arith.constant 0 : index
    %c0_7 = arith.constant 0 : index
    %c0_8 = arith.constant 0 : index
    %23 = vector.load %arg2[%c0_6, %c0_7, %c0_8] : memref<3x2x128xf32, #tpu.memory_space<vmem>>, vector<1x2x128xf32>
    %24 = vector.shape_cast %23 : vector<1x2x128xf32> to vector<2x128xf32>
    %cst = arith.constant dense<0.000000e+00> : vector<16x128xf32>
    %25 = tpu.matmul %22, %24, %cst {dimension_numbers = #tpu.dot_dimension_numbers<[1], [0], [0], [1], [0, 0, 1, 1], [], []>} : vector<16x2xf32>, vector<2x128xf32>, vector<16x128xf32> -> vector<16x128xf32>
    %c1 = arith.constant 1 : index
    %c0_9 = arith.constant 0 : index
    %c0_10 = arith.constant 0 : index
    %26 = vector.load %arg2[%c1, %c0_9, %c0_10] : memref<3x2x128xf32, #tpu.memory_space<vmem>>, vector<1x2x128xf32>
    %27 = vector.shape_cast %26 : vector<1x2x128xf32> to vector<2x128xf32>
    %cst_11 = arith.constant dense<0.000000e+00> : vector<16x128xf32>
    %28 = tpu.matmul %22, %27, %cst_11 {dimension_numbers = #tpu.dot_dimension_numbers<[1], [0], [0], [1], [0, 0, 1, 1], [], []>} : vector<16x2xf32>, vector<2x128xf32>, vector<16x128xf32> -> vector<16x128xf32>
    %c2 = arith.constant 2 : index
    %c0_12 = arith.constant 0 : index
    %c0_13 = arith.constant 0 : index
    %29 = vector.load %arg2[%c2, %c0_12, %c0_13] : memref<3x2x128xf32, #tpu.memory_space<vmem>>, vector<1x2x128xf32>
    %30 = vector.shape_cast %29 : vector<1x2x128xf32> to vector<2x128xf32>
    %cst_14 = arith.constant dense<0.000000e+00> : vector<16x128xf32>
    %31 = tpu.matmul %22, %30, %cst_14 {dimension_numbers = #tpu.dot_dimension_numbers<[1], [0], [0], [1], [0, 0, 1, 1], [], []>} : vector<16x2xf32>, vector<2x128xf32>, vector<16x128xf32> -> vector<16x128xf32>
    %c1_i32_15 = arith.constant 1 : i32
    %32 = tpu.dynamic_rotate %25 by %c1_i32_15 dim 0 : vector<16x128xf32>, i32 -> vector<16x128xf32>
    %cst_16 = arith.constant 0.000000e+00 : f32
    %33 = vector.broadcast %cst_16 : f32 to vector<16x128xf32>
    %34 = arith.select %18, %33, %32 : vector<16x128xi1>, vector<16x128xf32>
    %35 = arith.addf %34, %28 : vector<16x128xf32>
    %c15_i32 = arith.constant 15 : i32
    %36 = tpu.dynamic_rotate %31 by %c15_i32 dim 0 : vector<16x128xf32>, i32 -> vector<16x128xf32>
    %cst_17 = arith.constant 0.000000e+00 : f32
    %37 = vector.broadcast %cst_17 : f32 to vector<16x128xf32>
    %38 = arith.select %20, %37, %36 : vector<16x128xi1>, vector<16x128xf32>
    %39 = arith.addf %35, %38 : vector<16x128xf32>
    %c0_18 = arith.constant 0 : index
    %c0_19 = arith.constant 0 : index
    %40 = vector.load %arg3[%c0_18, %c0_19] : memref<1x128xf32, #tpu.memory_space<vmem>>, vector<1x128xf32>
    %41 = vector.broadcast %40 : vector<1x128xf32> to vector<16x128xf32>
    %42 = arith.addf %39, %41 : vector<16x128xf32>
    %cst_20 = arith.constant 0.000000e+00 : f32
    %43 = vector.broadcast %cst_20 : f32 to vector<16x128xf32>
    %44 = arith.maximumf %42, %43 : vector<16x128xf32>
    %cst_21 = arith.constant 0.000000e+00 : f32
    %45 = vector.broadcast %cst_21 : f32 to vector<16x128xf32>
    %46 = arith.maximumf %44, %45 : vector<16x128xf32>
    %c1_i32_22 = arith.constant 1 : i32
    %47 = tpu.dynamic_rotate %46 by %c1_i32_22 dim 0 : vector<16x128xf32>, i32 -> vector<16x128xf32>
    %cst_23 = arith.constant 0.000000e+00 : f32
    %48 = vector.broadcast %cst_23 : f32 to vector<16x128xf32>
    %49 = arith.select %18, %48, %47 : vector<16x128xi1>, vector<16x128xf32>
    %50 = arith.truncf %49 : vector<16x128xf32> to vector<16x128xbf16>
    %c0_24 = arith.constant 0 : index
    %c0_25 = arith.constant 0 : index
    %c0_26 = arith.constant 0 : index
    %51 = vector.load %arg4[%c0_24, %c0_25, %c0_26] : memref<3x128x128xbf16, #tpu.memory_space<vmem>>, vector<1x128x128xbf16>
    %52 = vector.shape_cast %51 : vector<1x128x128xbf16> to vector<128x128xbf16>
    %cst_27 = arith.constant dense<0.000000e+00> : vector<16x128xf32>
    %53 = tpu.matmul %50, %52, %cst_27 {dimension_numbers = #tpu.dot_dimension_numbers<[1], [0], [0], [1], [0, 0, 1, 1], [], []>} : vector<16x128xbf16>, vector<128x128xbf16>, vector<16x128xf32> -> vector<16x128xf32>
    %54 = arith.truncf %46 : vector<16x128xf32> to vector<16x128xbf16>
    %c1_28 = arith.constant 1 : index
    %c0_29 = arith.constant 0 : index
    %c0_30 = arith.constant 0 : index
    %55 = vector.load %arg4[%c1_28, %c0_29, %c0_30] : memref<3x128x128xbf16, #tpu.memory_space<vmem>>, vector<1x128x128xbf16>
    %56 = vector.shape_cast %55 : vector<1x128x128xbf16> to vector<128x128xbf16>
    %cst_31 = arith.constant dense<0.000000e+00> : vector<16x128xf32>
    %57 = tpu.matmul %54, %56, %cst_31 {dimension_numbers = #tpu.dot_dimension_numbers<[1], [0], [0], [1], [0, 0, 1, 1], [], []>} : vector<16x128xbf16>, vector<128x128xbf16>, vector<16x128xf32> -> vector<16x128xf32>
    %58 = arith.addf %53, %57 : vector<16x128xf32>
    %c15_i32_32 = arith.constant 15 : i32
    %59 = tpu.dynamic_rotate %46 by %c15_i32_32 dim 0 : vector<16x128xf32>, i32 -> vector<16x128xf32>
    %cst_33 = arith.constant 0.000000e+00 : f32
    %60 = vector.broadcast %cst_33 : f32 to vector<16x128xf32>
    %61 = arith.select %20, %60, %59 : vector<16x128xi1>, vector<16x128xf32>
    %62 = arith.truncf %61 : vector<16x128xf32> to vector<16x128xbf16>
    %c2_34 = arith.constant 2 : index
    %c0_35 = arith.constant 0 : index
    %c0_36 = arith.constant 0 : index
    %63 = vector.load %arg4[%c2_34, %c0_35, %c0_36] : memref<3x128x128xbf16, #tpu.memory_space<vmem>>, vector<1x128x128xbf16>
    %64 = vector.shape_cast %63 : vector<1x128x128xbf16> to vector<128x128xbf16>
    %cst_37 = arith.constant dense<0.000000e+00> : vector<16x128xf32>
    %65 = tpu.matmul %62, %64, %cst_37 {dimension_numbers = #tpu.dot_dimension_numbers<[1], [0], [0], [1], [0, 0, 1, 1], [], []>} : vector<16x128xbf16>, vector<128x128xbf16>, vector<16x128xf32> -> vector<16x128xf32>
    %66 = arith.addf %58, %65 : vector<16x128xf32>
    %c0_38 = arith.constant 0 : index
    %c0_39 = arith.constant 0 : index
    %67 = vector.load %arg5[%c0_38, %c0_39] : memref<1x128xf32, #tpu.memory_space<vmem>>, vector<1x128xf32>
    %68 = vector.broadcast %67 : vector<1x128xf32> to vector<16x128xf32>
    %69 = arith.addf %66, %68 : vector<16x128xf32>
    %cst_40 = arith.constant 0.000000e+00 : f32
    %70 = vector.broadcast %cst_40 : f32 to vector<16x128xf32>
    %71 = arith.maximumf %69, %70 : vector<16x128xf32>
    %72 = arith.truncf %71 : vector<16x128xf32> to vector<16x128xbf16>
    %c0_41 = arith.constant 0 : index
    %c0_42 = arith.constant 0 : index
    %73 = vector.load %arg6[%c0_41, %c0_42] : memref<128x128xbf16, #tpu.memory_space<vmem>>, vector<128x128xbf16>
    %cst_43 = arith.constant dense<0.000000e+00> : vector<16x128xf32>
    %74 = tpu.matmul %72, %73, %cst_43 {dimension_numbers = #tpu.dot_dimension_numbers<[1], [0], [0], [1], [0, 0, 1, 1], [], []>} : vector<16x128xbf16>, vector<128x128xbf16>, vector<16x128xf32> -> vector<16x128xf32>
    %75 = arith.addf %44, %74 : vector<16x128xf32>
    %c0_44 = arith.constant 0 : index
    %c0_45 = arith.constant 0 : index
    %76 = vector.load %arg7[%c0_44, %c0_45] : memref<1x128xf32, #tpu.memory_space<vmem>>, vector<1x128xf32>
    %77 = vector.broadcast %76 : vector<1x128xf32> to vector<16x128xf32>
    %78 = arith.addf %75, %77 : vector<16x128xf32>
    %cst_46 = arith.constant 0.000000e+00 : f32
    %79 = vector.broadcast %cst_46 : f32 to vector<16x128xf32>
    %80 = arith.maximumf %78, %79 : vector<16x128xf32>
    %c1_i32_47 = arith.constant 1 : i32
    %81 = tpu.dynamic_rotate %80 by %c1_i32_47 dim 0 : vector<16x128xf32>, i32 -> vector<16x128xf32>
    %cst_48 = arith.constant 0.000000e+00 : f32
    %82 = vector.broadcast %cst_48 : f32 to vector<16x128xf32>
    %83 = arith.select %18, %82, %81 : vector<16x128xi1>, vector<16x128xf32>
    %84 = arith.truncf %83 : vector<16x128xf32> to vector<16x128xbf16>
    %c0_49 = arith.constant 0 : index
    %c0_50 = arith.constant 0 : index
    %c0_51 = arith.constant 0 : index
    %85 = vector.load %arg8[%c0_49, %c0_50, %c0_51] : memref<3x128x128xbf16, #tpu.memory_space<vmem>>, vector<1x128x128xbf16>
    %86 = vector.shape_cast %85 : vector<1x128x128xbf16> to vector<128x128xbf16>
    %cst_52 = arith.constant dense<0.000000e+00> : vector<16x128xf32>
    %87 = tpu.matmul %84, %86, %cst_52 {dimension_numbers = #tpu.dot_dimension_numbers<[1], [0], [0], [1], [0, 0, 1, 1], [], []>} : vector<16x128xbf16>, vector<128x128xbf16>, vector<16x128xf32> -> vector<16x128xf32>
    %88 = arith.truncf %80 : vector<16x128xf32> to vector<16x128xbf16>
    %c1_53 = arith.constant 1 : index
    %c0_54 = arith.constant 0 : index
    %c0_55 = arith.constant 0 : index
    %89 = vector.load %arg8[%c1_53, %c0_54, %c0_55] : memref<3x128x128xbf16, #tpu.memory_space<vmem>>, vector<1x128x128xbf16>
    %90 = vector.shape_cast %89 : vector<1x128x128xbf16> to vector<128x128xbf16>
    %cst_56 = arith.constant dense<0.000000e+00> : vector<16x128xf32>
    %91 = tpu.matmul %88, %90, %cst_56 {dimension_numbers = #tpu.dot_dimension_numbers<[1], [0], [0], [1], [0, 0, 1, 1], [], []>} : vector<16x128xbf16>, vector<128x128xbf16>, vector<16x128xf32> -> vector<16x128xf32>
    %92 = arith.addf %87, %91 : vector<16x128xf32>
    %c15_i32_57 = arith.constant 15 : i32
    %93 = tpu.dynamic_rotate %80 by %c15_i32_57 dim 0 : vector<16x128xf32>, i32 -> vector<16x128xf32>
    %cst_58 = arith.constant 0.000000e+00 : f32
    %94 = vector.broadcast %cst_58 : f32 to vector<16x128xf32>
    %95 = arith.select %20, %94, %93 : vector<16x128xi1>, vector<16x128xf32>
    %96 = arith.truncf %95 : vector<16x128xf32> to vector<16x128xbf16>
    %c2_59 = arith.constant 2 : index
    %c0_60 = arith.constant 0 : index
    %c0_61 = arith.constant 0 : index
    %97 = vector.load %arg8[%c2_59, %c0_60, %c0_61] : memref<3x128x128xbf16, #tpu.memory_space<vmem>>, vector<1x128x128xbf16>
    %98 = vector.shape_cast %97 : vector<1x128x128xbf16> to vector<128x128xbf16>
    %cst_62 = arith.constant dense<0.000000e+00> : vector<16x128xf32>
    %99 = tpu.matmul %96, %98, %cst_62 {dimension_numbers = #tpu.dot_dimension_numbers<[1], [0], [0], [1], [0, 0, 1, 1], [], []>} : vector<16x128xbf16>, vector<128x128xbf16>, vector<16x128xf32> -> vector<16x128xf32>
    %100 = arith.addf %92, %99 : vector<16x128xf32>
    %c0_63 = arith.constant 0 : index
    %c0_64 = arith.constant 0 : index
    %101 = vector.load %arg9[%c0_63, %c0_64] : memref<1x128xf32, #tpu.memory_space<vmem>>, vector<1x128xf32>
    %102 = vector.broadcast %101 : vector<1x128xf32> to vector<16x128xf32>
    %103 = arith.addf %100, %102 : vector<16x128xf32>
    %cst_65 = arith.constant 0.000000e+00 : f32
    %104 = vector.broadcast %cst_65 : f32 to vector<16x128xf32>
    %105 = arith.maximumf %103, %104 : vector<16x128xf32>
    %106 = arith.truncf %105 : vector<16x128xf32> to vector<16x128xbf16>
    %c0_66 = arith.constant 0 : index
    %c0_67 = arith.constant 0 : index
    %107 = vector.load %arg10[%c0_66, %c0_67] : memref<128x128xbf16, #tpu.memory_space<vmem>>, vector<128x128xbf16>
    %cst_68 = arith.constant dense<0.000000e+00> : vector<16x128xf32>
    %108 = tpu.matmul %106, %107, %cst_68 {dimension_numbers = #tpu.dot_dimension_numbers<[1], [0], [0], [1], [0, 0, 1, 1], [], []>} : vector<16x128xbf16>, vector<128x128xbf16>, vector<16x128xf32> -> vector<16x128xf32>
    %109 = arith.addf %78, %108 : vector<16x128xf32>
    %c0_69 = arith.constant 0 : index
    %c0_70 = arith.constant 0 : index
    %110 = vector.load %arg11[%c0_69, %c0_70] : memref<1x128xf32, #tpu.memory_space<vmem>>, vector<1x128xf32>
    %111 = vector.broadcast %110 : vector<1x128xf32> to vector<16x128xf32>
    %112 = arith.addf %109, %111 : vector<16x128xf32>
    %113 = arith.truncf %112 : vector<16x128xf32> to vector<16x128xbf16>
    %c0_71 = arith.constant 0 : index
    %c0_72 = arith.constant 0 : index
    %114 = vector.load %arg12[%c0_71, %c0_72] : memref<128x128xbf16, #tpu.memory_space<vmem>>, vector<128x128xbf16>
    %cst_73 = arith.constant dense<0.000000e+00> : vector<16x128xf32>
    %115 = tpu.matmul %113, %114, %cst_73 {dimension_numbers = #tpu.dot_dimension_numbers<[1], [1], [0], [0], [0, 0, 1, 0], [], []>} : vector<16x128xbf16>, vector<128x128xbf16>, vector<16x128xf32> -> vector<16x128xf32>
    %c0_74 = arith.constant 0 : index
    %c0_75 = arith.constant 0 : index
    %116 = vector.load %arg14[%c0_74, %c0_75] : memref<1x128xf32, #tpu.memory_space<vmem>>, vector<1x128xf32>
    %cst_76 = arith.constant 2.000000e+00 : f32
    %117 = vector.broadcast %cst_76 : f32 to vector<16x128xf32>
    %118 = arith.mulf %117, %115 : vector<16x128xf32>
    %119 = vector.broadcast %116 : vector<1x128xf32> to vector<16x128xf32>
    %120 = arith.subf %119, %118 : vector<16x128xf32>
    %cst_77 = arith.constant dense<0x7F800000> : vector<16xf32>
    %121 = vector.multi_reduction <minimumf>, %120, %cst_77 [1] : vector<16x128xf32> to vector<16xf32>
    %122 = vector.shape_cast %121 : vector<16xf32> to vector<16x1xf32>
    %123 = tpu.iota {dimensions = array<i32: 1>} : vector<16x128xi32>
    %124 = vector.broadcast %122 : vector<16x1xf32> to vector<16x128xf32>
    %125 = arith.cmpf ole, %120, %124 : vector<16x128xf32>
    %c128_i32 = arith.constant 128 : i32
    %126 = vector.broadcast %c128_i32 : i32 to vector<16x128xi32>
    %127 = arith.select %125, %123, %126 : vector<16x128xi1>, vector<16x128xi32>
    %cst_78 = arith.constant dense<2147483647> : vector<16xi32>
    %128 = vector.multi_reduction <minsi>, %127, %cst_78 [1] : vector<16x128xi32> to vector<16xi32>
    %129 = vector.shape_cast %128 : vector<16xi32> to vector<16x1xi32>
    %130 = vector.broadcast %129 : vector<16x1xi32> to vector<16x128xi32>
    %131 = arith.cmpi eq, %123, %130 : vector<16x128xi32>
    %132 = arith.extui %131 : vector<16x128xi1> to vector<16x128xi32>
    %133 = arith.sitofp %132 : vector<16x128xi32> to vector<16x128xf32>
    %c0_79 = arith.constant 0 : index
    %c0_80 = arith.constant 0 : index
    %134 = vector.load %arg13[%c0_79, %c0_80] : memref<128x128xf32, #tpu.memory_space<vmem>>, vector<128x128xf32>
    %cst_81 = arith.constant dense<0.000000e+00> : vector<16x128xf32>
    %135 = tpu.matmul %133, %134, %cst_81 {dimension_numbers = #tpu.dot_dimension_numbers<[1], [0], [0], [1], [0, 0, 1, 1], [], []>} : vector<16x128xf32>, vector<128x128xf32>, vector<16x128xf32> -> vector<16x128xf32>
    %136 = arith.subf %135, %112 : vector<16x128xf32>
    %137 = arith.mulf %136, %136 : vector<16x128xf32>
    %cst_82 = arith.constant dense<0.000000e+00> : vector<128xf32>
    %138 = vector.multi_reduction <add>, %137, %cst_82 [0] : vector<16x128xf32> to vector<128xf32>
    %139 = vector.shape_cast %138 : vector<128xf32> to vector<1x128xf32>
    %140 = tpu.iota {dimensions = array<i32: 0>} : vector<8x128xi32>
    %c0_i32_83 = arith.constant 0 : i32
    %141 = vector.broadcast %c0_i32_83 : i32 to vector<8x128xi32>
    %142 = arith.cmpi eq, %140, %141 : vector<8x128xi32>
    %cst_84 = arith.constant 0.000000e+00 : f32
    %143 = vector.shape_cast %139 : vector<1x128xf32> to vector<1x128xf32>
    %144 = vector.broadcast %143 : vector<1x128xf32> to vector<8x128xf32>
    %145 = vector.broadcast %cst_84 : f32 to vector<8x128xf32>
    %146 = arith.select %142, %144, %145 : vector<8x128xi1>, vector<8x128xf32>
    %c0_85 = arith.constant 0 : index
    %c0_86 = arith.constant 0 : index
    %147 = vector.load %arg30[%c0_85, %c0_86] : memref<8x128xf32, #tpu.memory_space<vmem>>, vector<8x128xf32>
    tpu.vector_store %arg30[%c0_85, %c0_86], %146 {strides = array<i32>} : memref<8x128xf32, #tpu.memory_space<vmem>>, vector<8x128xf32>,
    %148 = arith.truncf %135 : vector<16x128xf32> to vector<16x128xbf16>
    %c0_87 = arith.constant 0 : index
    %c0_88 = arith.constant 0 : index
    %149 = vector.load %arg15[%c0_87, %c0_88] : memref<128x128xbf16, #tpu.memory_space<vmem>>, vector<128x128xbf16>
    %cst_89 = arith.constant dense<0.000000e+00> : vector<16x128xf32>
    %150 = tpu.matmul %148, %149, %cst_89 {dimension_numbers = #tpu.dot_dimension_numbers<[1], [0], [0], [1], [0, 0, 1, 1], [], []>} : vector<16x128xbf16>, vector<128x128xbf16>, vector<16x128xf32> -> vector<16x128xf32>
    %c0_90 = arith.constant 0 : index
    %c0_91 = arith.constant 0 : index
    %151 = vector.load %arg16[%c0_90, %c0_91] : memref<1x128xf32, #tpu.memory_space<vmem>>, vector<1x128xf32>
    %152 = vector.broadcast %151 : vector<1x128xf32> to vector<16x128xf32>
    %153 = arith.addf %150, %152 : vector<16x128xf32>
    %c1_i32_92 = arith.constant 1 : i32
    %154 = tpu.dynamic_rotate %153 by %c1_i32_92 dim 0 : vector<16x128xf32>, i32 -> vector<16x128xf32>
    %cst_93 = arith.constant 0.000000e+00 : f32
    %155 = vector.broadcast %cst_93 : f32 to vector<16x128xf32>
    %156 = arith.select %18, %155, %154 : vector<16x128xi1>, vector<16x128xf32>
    %157 = arith.truncf %156 : vector<16x128xf32> to vector<16x128xbf16>
    %c0_94 = arith.constant 0 : index
    %c0_95 = arith.constant 0 : index
    %c0_96 = arith.constant 0 : index
    %158 = vector.load %arg17[%c0_94, %c0_95, %c0_96] : memref<3x128x128xbf16, #tpu.memory_space<vmem>>, vector<1x128x128xbf16>
    %159 = vector.shape_cast %158 : vector<1x128x128xbf16> to vector<128x128xbf16>
    %cst_97 = arith.constant dense<0.000000e+00> : vector<16x128xf32>
    %160 = tpu.matmul %157, %159, %cst_97 {dimension_numbers = #tpu.dot_dimension_numbers<[1], [0], [0], [1], [0, 0, 1, 1], [], []>} : vector<16x128xbf16>, vector<128x128xbf16>, vector<16x128xf32> -> vector<16x128xf32>
    %161 = arith.truncf %153 : vector<16x128xf32> to vector<16x128xbf16>
    %c1_98 = arith.constant 1 : index
    %c0_99 = arith.constant 0 : index
    %c0_100 = arith.constant 0 : index
    %162 = vector.load %arg17[%c1_98, %c0_99, %c0_100] : memref<3x128x128xbf16, #tpu.memory_space<vmem>>, vector<1x128x128xbf16>
    %163 = vector.shape_cast %162 : vector<1x128x128xbf16> to vector<128x128xbf16>
    %cst_101 = arith.constant dense<0.000000e+00> : vector<16x128xf32>
    %164 = tpu.matmul %161, %163, %cst_101 {dimension_numbers = #tpu.dot_dimension_numbers<[1], [0], [0], [1], [0, 0, 1, 1], [], []>} : vector<16x128xbf16>, vector<128x128xbf16>, vector<16x128xf32> -> vector<16x128xf32>
    %165 = arith.addf %160, %164 : vector<16x128xf32>
    %c15_i32_102 = arith.constant 15 : i32
    %166 = tpu.dynamic_rotate %153 by %c15_i32_102 dim 0 : vector<16x128xf32>, i32 -> vector<16x128xf32>
    %cst_103 = arith.constant 0.000000e+00 : f32
    %167 = vector.broadcast %cst_103 : f32 to vector<16x128xf32>
    %168 = arith.select %20, %167, %166 : vector<16x128xi1>, vector<16x128xf32>
    %169 = arith.truncf %168 : vector<16x128xf32> to vector<16x128xbf16>
    %c2_104 = arith.constant 2 : index
    %c0_105 = arith.constant 0 : index
    %c0_106 = arith.constant 0 : index
    %170 = vector.load %arg17[%c2_104, %c0_105, %c0_106] : memref<3x128x128xbf16, #tpu.memory_space<vmem>>, vector<1x128x128xbf16>
    %171 = vector.shape_cast %170 : vector<1x128x128xbf16> to vector<128x128xbf16>
    %cst_107 = arith.constant dense<0.000000e+00> : vector<16x128xf32>
    %172 = tpu.matmul %169, %171, %cst_107 {dimension_numbers = #tpu.dot_dimension_numbers<[1], [0], [0], [1], [0, 0, 1, 1], [], []>} : vector<16x128xbf16>, vector<128x128xbf16>, vector<16x128xf32> -> vector<16x128xf32>
    %173 = arith.addf %165, %172 : vector<16x128xf32>
    %c0_108 = arith.constant 0 : index
    %c0_109 = arith.constant 0 : index
    %174 = vector.load %arg18[%c0_108, %c0_109] : memref<1x128xf32, #tpu.memory_space<vmem>>, vector<1x128xf32>
    %175 = vector.broadcast %174 : vector<1x128xf32> to vector<16x128xf32>
    %176 = arith.addf %173, %175 : vector<16x128xf32>
    %cst_110 = arith.constant 0.000000e+00 : f32
    %177 = vector.broadcast %cst_110 : f32 to vector<16x128xf32>
    %178 = arith.maximumf %176, %177 : vector<16x128xf32>
    %c1_i32_111 = arith.constant 1 : i32
    %179 = tpu.dynamic_rotate %178 by %c1_i32_111 dim 0 : vector<16x128xf32>, i32 -> vector<16x128xf32>
    %cst_112 = arith.constant 0.000000e+00 : f32
    %180 = vector.broadcast %cst_112 : f32 to vector<16x128xf32>
    %181 = arith.select %18, %180, %179 : vector<16x128xi1>, vector<16x128xf32>
    %182 = arith.truncf %181 : vector<16x128xf32> to vector<16x128xbf16>
    %c0_113 = arith.constant 0 : index
    %c0_114 = arith.constant 0 : index
    %c0_115 = arith.constant 0 : index
    %183 = vector.load %arg19[%c0_113, %c0_114, %c0_115] : memref<3x128x128xbf16, #tpu.memory_space<vmem>>, vector<1x128x128xbf16>
    %184 = vector.shape_cast %183 : vector<1x128x128xbf16> to vector<128x128xbf16>
    %cst_116 = arith.constant dense<0.000000e+00> : vector<16x128xf32>
    %185 = tpu.matmul %182, %184, %cst_116 {dimension_numbers = #tpu.dot_dimension_numbers<[1], [0], [0], [1], [0, 0, 1, 1], [], []>} : vector<16x128xbf16>, vector<128x128xbf16>, vector<16x128xf32> -> vector<16x128xf32>
    %186 = arith.truncf %178 : vector<16x128xf32> to vector<16x128xbf16>
    %c1_117 = arith.constant 1 : index
    %c0_118 = arith.constant 0 : index
    %c0_119 = arith.constant 0 : index
    %187 = vector.load %arg19[%c1_117, %c0_118, %c0_119] : memref<3x128x128xbf16, #tpu.memory_space<vmem>>, vector<1x128x128xbf16>
    %188 = vector.shape_cast %187 : vector<1x128x128xbf16> to vector<128x128xbf16>
    %cst_120 = arith.constant dense<0.000000e+00> : vector<16x128xf32>
    %189 = tpu.matmul %186, %188, %cst_120 {dimension_numbers = #tpu.dot_dimension_numbers<[1], [0], [0], [1], [0, 0, 1, 1], [], []>} : vector<16x128xbf16>, vector<128x128xbf16>, vector<16x128xf32> -> vector<16x128xf32>
    %190 = arith.addf %185, %189 : vector<16x128xf32>
    %c15_i32_121 = arith.constant 15 : i32
    %191 = tpu.dynamic_rotate %178 by %c15_i32_121 dim 0 : vector<16x128xf32>, i32 -> vector<16x128xf32>
    %cst_122 = arith.constant 0.000000e+00 : f32
    %192 = vector.broadcast %cst_122 : f32 to vector<16x128xf32>
    %193 = arith.select %20, %192, %191 : vector<16x128xi1>, vector<16x128xf32>
    %194 = arith.truncf %193 : vector<16x128xf32> to vector<16x128xbf16>
    %c2_123 = arith.constant 2 : index
    %c0_124 = arith.constant 0 : index
    %c0_125 = arith.constant 0 : index
    %195 = vector.load %arg19[%c2_123, %c0_124, %c0_125] : memref<3x128x128xbf16, #tpu.memory_space<vmem>>, vector<1x128x128xbf16>
    %196 = vector.shape_cast %195 : vector<1x128x128xbf16> to vector<128x128xbf16>
    %cst_126 = arith.constant dense<0.000000e+00> : vector<16x128xf32>
    %197 = tpu.matmul %194, %196, %cst_126 {dimension_numbers = #tpu.dot_dimension_numbers<[1], [0], [0], [1], [0, 0, 1, 1], [], []>} : vector<16x128xbf16>, vector<128x128xbf16>, vector<16x128xf32> -> vector<16x128xf32>
    %198 = arith.addf %190, %197 : vector<16x128xf32>
    %c0_127 = arith.constant 0 : index
    %c0_128 = arith.constant 0 : index
    %199 = vector.load %arg20[%c0_127, %c0_128] : memref<1x128xf32, #tpu.memory_space<vmem>>, vector<1x128xf32>
    %200 = vector.broadcast %199 : vector<1x128xf32> to vector<16x128xf32>
    %201 = arith.addf %198, %200 : vector<16x128xf32>
    %cst_129 = arith.constant 0.000000e+00 : f32
    %202 = vector.broadcast %cst_129 : f32 to vector<16x128xf32>
    %203 = arith.maximumf %201, %202 : vector<16x128xf32>
    %204 = arith.truncf %203 : vector<16x128xf32> to vector<16x128xbf16>
    %c0_130 = arith.constant 0 : index
    %c0_131 = arith.constant 0 : index
    %205 = vector.load %arg21[%c0_130, %c0_131] : memref<128x128xbf16, #tpu.memory_space<vmem>>, vector<128x128xbf16>
    %cst_132 = arith.constant dense<0.000000e+00> : vector<16x128xf32>
    %206 = tpu.matmul %204, %205, %cst_132 {dimension_numbers = #tpu.dot_dimension_numbers<[1], [0], [0], [1], [0, 0, 1, 1], [], []>} : vector<16x128xbf16>, vector<128x128xbf16>, vector<16x128xf32> -> vector<16x128xf32>
    %207 = arith.addf %176, %206 : vector<16x128xf32>
    %c0_133 = arith.constant 0 : index
    %c0_134 = arith.constant 0 : index
    %208 = vector.load %arg22[%c0_133, %c0_134] : memref<1x128xf32, #tpu.memory_space<vmem>>, vector<1x128xf32>
    %209 = vector.broadcast %208 : vector<1x128xf32> to vector<16x128xf32>
    %210 = arith.addf %207, %209 : vector<16x128xf32>
    %cst_135 = arith.constant 0.000000e+00 : f32
    %211 = vector.broadcast %cst_135 : f32 to vector<16x128xf32>
    %212 = arith.maximumf %210, %211 : vector<16x128xf32>
    %c1_i32_136 = arith.constant 1 : i32
    %213 = tpu.dynamic_rotate %212 by %c1_i32_136 dim 0 : vector<16x128xf32>, i32 -> vector<16x128xf32>
    %cst_137 = arith.constant 0.000000e+00 : f32
    %214 = vector.broadcast %cst_137 : f32 to vector<16x128xf32>
    %215 = arith.select %18, %214, %213 : vector<16x128xi1>, vector<16x128xf32>
    %216 = arith.truncf %215 : vector<16x128xf32> to vector<16x128xbf16>
    %c0_138 = arith.constant 0 : index
    %c0_139 = arith.constant 0 : index
    %c0_140 = arith.constant 0 : index
    %217 = vector.load %arg23[%c0_138, %c0_139, %c0_140] : memref<3x128x128xbf16, #tpu.memory_space<vmem>>, vector<1x128x128xbf16>
    %218 = vector.shape_cast %217 : vector<1x128x128xbf16> to vector<128x128xbf16>
    %cst_141 = arith.constant dense<0.000000e+00> : vector<16x128xf32>
    %219 = tpu.matmul %216, %218, %cst_141 {dimension_numbers = #tpu.dot_dimension_numbers<[1], [0], [0], [1], [0, 0, 1, 1], [], []>} : vector<16x128xbf16>, vector<128x128xbf16>, vector<16x128xf32> -> vector<16x128xf32>
    %220 = arith.truncf %212 : vector<16x128xf32> to vector<16x128xbf16>
    %c1_142 = arith.constant 1 : index
    %c0_143 = arith.constant 0 : index
    %c0_144 = arith.constant 0 : index
    %221 = vector.load %arg23[%c1_142, %c0_143, %c0_144] : memref<3x128x128xbf16, #tpu.memory_space<vmem>>, vector<1x128x128xbf16>
    %222 = vector.shape_cast %221 : vector<1x128x128xbf16> to vector<128x128xbf16>
    %cst_145 = arith.constant dense<0.000000e+00> : vector<16x128xf32>
    %223 = tpu.matmul %220, %222, %cst_145 {dimension_numbers = #tpu.dot_dimension_numbers<[1], [0], [0], [1], [0, 0, 1, 1], [], []>} : vector<16x128xbf16>, vector<128x128xbf16>, vector<16x128xf32> -> vector<16x128xf32>
    %224 = arith.addf %219, %223 : vector<16x128xf32>
    %c15_i32_146 = arith.constant 15 : i32
    %225 = tpu.dynamic_rotate %212 by %c15_i32_146 dim 0 : vector<16x128xf32>, i32 -> vector<16x128xf32>
    %cst_147 = arith.constant 0.000000e+00 : f32
    %226 = vector.broadcast %cst_147 : f32 to vector<16x128xf32>
    %227 = arith.select %20, %226, %225 : vector<16x128xi1>, vector<16x128xf32>
    %228 = arith.truncf %227 : vector<16x128xf32> to vector<16x128xbf16>
    %c2_148 = arith.constant 2 : index
    %c0_149 = arith.constant 0 : index
    %c0_150 = arith.constant 0 : index
    %229 = vector.load %arg23[%c2_148, %c0_149, %c0_150] : memref<3x128x128xbf16, #tpu.memory_space<vmem>>, vector<1x128x128xbf16>
    %230 = vector.shape_cast %229 : vector<1x128x128xbf16> to vector<128x128xbf16>
    %cst_151 = arith.constant dense<0.000000e+00> : vector<16x128xf32>
    %231 = tpu.matmul %228, %230, %cst_151 {dimension_numbers = #tpu.dot_dimension_numbers<[1], [0], [0], [1], [0, 0, 1, 1], [], []>} : vector<16x128xbf16>, vector<128x128xbf16>, vector<16x128xf32> -> vector<16x128xf32>
    %232 = arith.addf %224, %231 : vector<16x128xf32>
    %c0_152 = arith.constant 0 : index
    %c0_153 = arith.constant 0 : index
    %233 = vector.load %arg24[%c0_152, %c0_153] : memref<1x128xf32, #tpu.memory_space<vmem>>, vector<1x128xf32>
    %234 = vector.broadcast %233 : vector<1x128xf32> to vector<16x128xf32>
    %235 = arith.addf %232, %234 : vector<16x128xf32>
    %cst_154 = arith.constant 0.000000e+00 : f32
    %236 = vector.broadcast %cst_154 : f32 to vector<16x128xf32>
    %237 = arith.maximumf %235, %236 : vector<16x128xf32>
    %238 = arith.truncf %237 : vector<16x128xf32> to vector<16x128xbf16>
    %c0_155 = arith.constant 0 : index
    %c0_156 = arith.constant 0 : index
    %239 = vector.load %arg25[%c0_155, %c0_156] : memref<128x128xbf16, #tpu.memory_space<vmem>>, vector<128x128xbf16>
    %cst_157 = arith.constant dense<0.000000e+00> : vector<16x128xf32>
    %240 = tpu.matmul %238, %239, %cst_157 {dimension_numbers = #tpu.dot_dimension_numbers<[1], [0], [0], [1], [0, 0, 1, 1], [], []>} : vector<16x128xbf16>, vector<128x128xbf16>, vector<16x128xf32> -> vector<16x128xf32>
    %241 = arith.addf %210, %240 : vector<16x128xf32>
    %c0_158 = arith.constant 0 : index
    %c0_159 = arith.constant 0 : index
    %242 = vector.load %arg26[%c0_158, %c0_159] : memref<1x128xf32, #tpu.memory_space<vmem>>, vector<1x128xf32>
    %243 = vector.broadcast %242 : vector<1x128xf32> to vector<16x128xf32>
    %244 = arith.addf %241, %243 : vector<16x128xf32>
    %cst_160 = arith.constant 0.000000e+00 : f32
    %245 = vector.broadcast %cst_160 : f32 to vector<16x128xf32>
    %246 = arith.maximumf %244, %245 : vector<16x128xf32>
    %c1_i32_161 = arith.constant 1 : i32
    %247 = tpu.dynamic_rotate %246 by %c1_i32_161 dim 0 : vector<16x128xf32>, i32 -> vector<16x128xf32>
    %cst_162 = arith.constant 0.000000e+00 : f32
    %248 = vector.broadcast %cst_162 : f32 to vector<16x128xf32>
    %249 = arith.select %18, %248, %247 : vector<16x128xi1>, vector<16x128xf32>
    %250 = arith.truncf %249 : vector<16x128xf32> to vector<16x128xbf16>
    %c0_163 = arith.constant 0 : index
    %c0_164 = arith.constant 0 : index
    %c0_165 = arith.constant 0 : index
    %251 = vector.load %arg27[%c0_163, %c0_164, %c0_165] : memref<3x128x2xbf16, #tpu.memory_space<vmem>>, vector<1x128x2xbf16>
    %252 = vector.shape_cast %251 : vector<1x128x2xbf16> to vector<128x2xbf16>
    %cst_166 = arith.constant dense<0.000000e+00> : vector<16x2xf32>
    %253 = tpu.matmul %250, %252, %cst_166 {dimension_numbers = #tpu.dot_dimension_numbers<[1], [0], [0], [1], [0, 0, 1, 1], [], []>} : vector<16x128xbf16>, vector<128x2xbf16>, vector<16x2xf32> -> vector<16x2xf32>
    %254 = arith.truncf %246 : vector<16x128xf32> to vector<16x128xbf16>
    %c1_167 = arith.constant 1 : index
    %c0_168 = arith.constant 0 : index
    %c0_169 = arith.constant 0 : index
    %255 = vector.load %arg27[%c1_167, %c0_168, %c0_169] : memref<3x128x2xbf16, #tpu.memory_space<vmem>>, vector<1x128x2xbf16>
    %256 = vector.shape_cast %255 : vector<1x128x2xbf16> to vector<128x2xbf16>
    %cst_170 = arith.constant dense<0.000000e+00> : vector<16x2xf32>
    %257 = tpu.matmul %254, %256, %cst_170 {dimension_numbers = #tpu.dot_dimension_numbers<[1], [0], [0], [1], [0, 0, 1, 1], [], []>} : vector<16x128xbf16>, vector<128x2xbf16>, vector<16x2xf32> -> vector<16x2xf32>
    %258 = arith.addf %253, %257 : vector<16x2xf32>
    %c15_i32_171 = arith.constant 15 : i32
    %259 = tpu.dynamic_rotate %246 by %c15_i32_171 dim 0 : vector<16x128xf32>, i32 -> vector<16x128xf32>
    %cst_172 = arith.constant 0.000000e+00 : f32
    %260 = vector.broadcast %cst_172 : f32 to vector<16x128xf32>
    %261 = arith.select %20, %260, %259 : vector<16x128xi1>, vector<16x128xf32>
    %262 = arith.truncf %261 : vector<16x128xf32> to vector<16x128xbf16>
    %c2_173 = arith.constant 2 : index
    %c0_174 = arith.constant 0 : index
    %c0_175 = arith.constant 0 : index
    %263 = vector.load %arg27[%c2_173, %c0_174, %c0_175] : memref<3x128x2xbf16, #tpu.memory_space<vmem>>, vector<1x128x2xbf16>
    %264 = vector.shape_cast %263 : vector<1x128x2xbf16> to vector<128x2xbf16>
    %cst_176 = arith.constant dense<0.000000e+00> : vector<16x2xf32>
    %265 = tpu.matmul %262, %264, %cst_176 {dimension_numbers = #tpu.dot_dimension_numbers<[1], [0], [0], [1], [0, 0, 1, 1], [], []>} : vector<16x128xbf16>, vector<128x2xbf16>, vector<16x2xf32> -> vector<16x2xf32>
    %266 = arith.addf %258, %265 : vector<16x2xf32>
    %c0_177 = arith.constant 0 : index
    %c0_178 = arith.constant 0 : index
    %267 = vector.load %arg28[%c0_177, %c0_178] : memref<1x2xf32, #tpu.memory_space<vmem>>, vector<1x2xf32>
    %268 = vector.broadcast %267 : vector<1x2xf32> to vector<16x2xf32>
    %269 = arith.addf %266, %268 : vector<16x2xf32>
    %270 = vector.shape_cast %269 : vector<16x2xf32> to vector<2x8x2xf32>
    %c0_179 = arith.constant 0 : index
    %c0_180 = arith.constant 0 : index
    %c0_181 = arith.constant 0 : index
    %271 = vector.load %arg29[%c0_179, %c0_180, %c0_181] : memref<2x8x2xf32, #tpu.memory_space<vmem>>, vector<2x8x2xf32>
    tpu.vector_store %arg29[%c0_179, %c0_180, %c0_181], %270 {strides = array<i32>} : memref<2x8x2xf32, #tpu.memory_space<vmem>>, vector<2x8x2xf32>,
    return
  }
  func.func @transform_0(%arg0: i32) -> (i32, i32, i32) {
    %c0_i32 = arith.constant 0 : i32
    %c0_i32_0 = arith.constant 0 : i32
    %c0_i32_1 = arith.constant 0 : i32
    return %arg0, %c0_i32, %c0_i32_0 : i32, i32, i32
  }
  func.func @transform_1(%arg0: i32) -> (i32, i32, i32) {
    %c0_i32 = arith.constant 0 : i32
    %c0_i32_0 = arith.constant 0 : i32
    %c0_i32_1 = arith.constant 0 : i32
    %c0_i32_2 = arith.constant 0 : i32
    return %c0_i32, %c0_i32_0, %c0_i32_1 : i32, i32, i32
  }
  func.func @transform_2(%arg0: i32) -> (i32, i32) {
    %c0_i32 = arith.constant 0 : i32
    %c0_i32_0 = arith.constant 0 : i32
    %c0_i32_1 = arith.constant 0 : i32
    return %c0_i32, %c0_i32_0 : i32, i32
  }
  func.func @transform_3(%arg0: i32) -> (i32, i32, i32) {
    %c0_i32 = arith.constant 0 : i32
    %c0_i32_0 = arith.constant 0 : i32
    %c0_i32_1 = arith.constant 0 : i32
    %c0_i32_2 = arith.constant 0 : i32
    return %c0_i32, %c0_i32_0, %c0_i32_1 : i32, i32, i32
  }
  func.func @transform_4(%arg0: i32) -> (i32, i32) {
    %c0_i32 = arith.constant 0 : i32
    %c0_i32_0 = arith.constant 0 : i32
    %c0_i32_1 = arith.constant 0 : i32
    return %c0_i32, %c0_i32_0 : i32, i32
  }
  func.func @transform_5(%arg0: i32) -> (i32, i32) {
    %c0_i32 = arith.constant 0 : i32
    %c0_i32_0 = arith.constant 0 : i32
    %c0_i32_1 = arith.constant 0 : i32
    return %c0_i32, %c0_i32_0 : i32, i32
  }
  func.func @transform_6(%arg0: i32) -> (i32, i32) {
    %c0_i32 = arith.constant 0 : i32
    %c0_i32_0 = arith.constant 0 : i32
    %c0_i32_1 = arith.constant 0 : i32
    return %c0_i32, %c0_i32_0 : i32, i32
  }
  func.func @transform_7(%arg0: i32) -> (i32, i32, i32) {
    %c0_i32 = arith.constant 0 : i32
    %c0_i32_0 = arith.constant 0 : i32
    %c0_i32_1 = arith.constant 0 : i32
    %c0_i32_2 = arith.constant 0 : i32
    return %c0_i32, %c0_i32_0, %c0_i32_1 : i32, i32, i32
  }
  func.func @transform_8(%arg0: i32) -> (i32, i32) {
    %c0_i32 = arith.constant 0 : i32
    %c0_i32_0 = arith.constant 0 : i32
    %c0_i32_1 = arith.constant 0 : i32
    return %c0_i32, %c0_i32_0 : i32, i32
  }
  func.func @transform_9(%arg0: i32) -> (i32, i32) {
    %c0_i32 = arith.constant 0 : i32
    %c0_i32_0 = arith.constant 0 : i32
    %c0_i32_1 = arith.constant 0 : i32
    return %c0_i32, %c0_i32_0 : i32, i32
  }
  func.func @transform_10(%arg0: i32) -> (i32, i32) {
    %c0_i32 = arith.constant 0 : i32
    %c0_i32_0 = arith.constant 0 : i32
    %c0_i32_1 = arith.constant 0 : i32
    return %c0_i32, %c0_i32_0 : i32, i32
  }
  func.func @transform_11(%arg0: i32) -> (i32, i32) {
    %c0_i32 = arith.constant 0 : i32
    %c0_i32_0 = arith.constant 0 : i32
    %c0_i32_1 = arith.constant 0 : i32
    return %c0_i32, %c0_i32_0 : i32, i32
  }
  func.func @transform_12(%arg0: i32) -> (i32, i32) {
    %c0_i32 = arith.constant 0 : i32
    %c0_i32_0 = arith.constant 0 : i32
    %c0_i32_1 = arith.constant 0 : i32
    return %c0_i32, %c0_i32_0 : i32, i32
  }
  func.func @transform_13(%arg0: i32) -> (i32, i32) {
    %c0_i32 = arith.constant 0 : i32
    %c0_i32_0 = arith.constant 0 : i32
    %c0_i32_1 = arith.constant 0 : i32
    return %c0_i32, %c0_i32_0 : i32, i32
  }
  func.func @transform_14(%arg0: i32) -> (i32, i32) {
    %c0_i32 = arith.constant 0 : i32
    %c0_i32_0 = arith.constant 0 : i32
    %c0_i32_1 = arith.constant 0 : i32
    return %c0_i32, %c0_i32_0 : i32, i32
  }
  func.func @transform_15(%arg0: i32) -> (i32, i32) {
    %c0_i32 = arith.constant 0 : i32
    %c0_i32_0 = arith.constant 0 : i32
    %c0_i32_1 = arith.constant 0 : i32
    return %c0_i32, %c0_i32_0 : i32, i32
  }
  func.func @transform_16(%arg0: i32) -> (i32, i32, i32) {
    %c0_i32 = arith.constant 0 : i32
    %c0_i32_0 = arith.constant 0 : i32
    %c0_i32_1 = arith.constant 0 : i32
    %c0_i32_2 = arith.constant 0 : i32
    return %c0_i32, %c0_i32_0, %c0_i32_1 : i32, i32, i32
  }
  func.func @transform_17(%arg0: i32) -> (i32, i32) {
    %c0_i32 = arith.constant 0 : i32
    %c0_i32_0 = arith.constant 0 : i32
    %c0_i32_1 = arith.constant 0 : i32
    return %c0_i32, %c0_i32_0 : i32, i32
  }
  func.func @transform_18(%arg0: i32) -> (i32, i32, i32) {
    %c0_i32 = arith.constant 0 : i32
    %c0_i32_0 = arith.constant 0 : i32
    %c0_i32_1 = arith.constant 0 : i32
    %c0_i32_2 = arith.constant 0 : i32
    return %c0_i32, %c0_i32_0, %c0_i32_1 : i32, i32, i32
  }
  func.func @transform_19(%arg0: i32) -> (i32, i32) {
    %c0_i32 = arith.constant 0 : i32
    %c0_i32_0 = arith.constant 0 : i32
    %c0_i32_1 = arith.constant 0 : i32
    return %c0_i32, %c0_i32_0 : i32, i32
  }
  func.func @transform_20(%arg0: i32) -> (i32, i32) {
    %c0_i32 = arith.constant 0 : i32
    %c0_i32_0 = arith.constant 0 : i32
    %c0_i32_1 = arith.constant 0 : i32
    return %c0_i32, %c0_i32_0 : i32, i32
  }
  func.func @transform_21(%arg0: i32) -> (i32, i32) {
    %c0_i32 = arith.constant 0 : i32
    %c0_i32_0 = arith.constant 0 : i32
    %c0_i32_1 = arith.constant 0 : i32
    return %c0_i32, %c0_i32_0 : i32, i32
  }
  func.func @transform_22(%arg0: i32) -> (i32, i32, i32) {
    %c0_i32 = arith.constant 0 : i32
    %c0_i32_0 = arith.constant 0 : i32
    %c0_i32_1 = arith.constant 0 : i32
    %c0_i32_2 = arith.constant 0 : i32
    return %c0_i32, %c0_i32_0, %c0_i32_1 : i32, i32, i32
  }
  func.func @transform_23(%arg0: i32) -> (i32, i32) {
    %c0_i32 = arith.constant 0 : i32
    %c0_i32_0 = arith.constant 0 : i32
    %c0_i32_1 = arith.constant 0 : i32
    return %c0_i32, %c0_i32_0 : i32, i32
  }
  func.func @transform_24(%arg0: i32) -> (i32, i32) {
    %c0_i32 = arith.constant 0 : i32
    %c0_i32_0 = arith.constant 0 : i32
    %c0_i32_1 = arith.constant 0 : i32
    return %c0_i32, %c0_i32_0 : i32, i32
  }
  func.func @transform_25(%arg0: i32) -> (i32, i32) {
    %c0_i32 = arith.constant 0 : i32
    %c0_i32_0 = arith.constant 0 : i32
    %c0_i32_1 = arith.constant 0 : i32
    return %c0_i32, %c0_i32_0 : i32, i32
  }
  func.func @transform_26(%arg0: i32) -> (i32, i32, i32) {
    %c0_i32 = arith.constant 0 : i32
    %c0_i32_0 = arith.constant 0 : i32
    %c0_i32_1 = arith.constant 0 : i32
    %c0_i32_2 = arith.constant 0 : i32
    return %c0_i32, %c0_i32_0, %c0_i32_1 : i32, i32, i32
  }
  func.func @transform_27(%arg0: i32) -> (i32, i32) {
    %c0_i32 = arith.constant 0 : i32
    %c0_i32_0 = arith.constant 0 : i32
    %c0_i32_1 = arith.constant 0 : i32
    return %c0_i32, %c0_i32_0 : i32, i32
  }
  func.func @transform_28(%arg0: i32) -> (i32, i32, i32) {
    %c0_i32 = arith.constant 0 : i32
    %c0_i32_0 = arith.constant 0 : i32
    %c0_i32_1 = arith.constant 0 : i32
    return %arg0, %c0_i32, %c0_i32_0 : i32, i32, i32
  }
  func.func @transform_29(%arg0: i32) -> (i32, i32) {
    %c0_i32 = arith.constant 0 : i32
    %c0_i32_0 = arith.constant 0 : i32
    return %arg0, %c0_i32 : i32, i32
  }
}

</mosaic_0001>

<llo_original>
// kernel: vqvae_freq_forward.1
$region0: #{vqvae_freq_forward.1}
  #allocation0 [shape = 'u32[]', space=smem, size = 0x4, offset = 0x4, fixed_abs, tag = 'smem constant byte address 0x4 - core index']
  #allocation1 [shape = 'u32[144,128]{1,0:T(1,128)}', space=vmem, size = 0x12000, scoped, tag = 'internal scratch']
  %s0 = inlined_call_operand.smem [shape: u32[30], index: -1, kind: input, shape index: {}]
  %s1 = sld [smem:[%s0]]
  %s2 = scalar_lea.smem %s0, 1
  %s3 = sld [smem:[%s2]]
  %s4 = scalar_lea.smem %s0, 2
  %s5 = sld [smem:[%s4]]
  %s6 = scalar_lea.smem %s0, 3
  %s7 = sld [smem:[%s6]]
  %s8 = scalar_lea.smem %s0, 4
  %s9 = sld [smem:[%s8]]
  %s10 = scalar_lea.smem %s0, 5
  %s11 = sld [smem:[%s10]]
  %s12 = scalar_lea.smem %s0, 6
  %s13 = sld [smem:[%s12]]
  %s14 = scalar_lea.smem %s0, 7
  %s15 = sld [smem:[%s14]]
  %s16 = scalar_lea.smem %s0, 8
  %s17 = sld [smem:[%s16]]
  %s18 = scalar_lea.smem %s0, 9
  %s19 = sld [smem:[%s18]]
  %s20 = scalar_lea.smem %s0, 10
  %s21 = sld [smem:[%s20]]
  %s22 = scalar_lea.smem %s0, 11
  %s23 = sld [smem:[%s22]]
  %s24 = scalar_lea.smem %s0, 12
  %s25 = sld [smem:[%s24]]
  %s26 = scalar_lea.smem %s0, 13
  %s27 = sld [smem:[%s26]]
  %s28 = scalar_lea.smem %s0, 14
  %s29 = sld [smem:[%s28]]
  %s30 = scalar_lea.smem %s0, 15
  %s31 = sld [smem:[%s30]]
  %s32 = scalar_lea.smem %s0, 16
  %s33 = sld [smem:[%s32]]
  %s34 = scalar_lea.smem %s0, 17
  %s35 = sld [smem:[%s34]]
  %s36 = scalar_lea.smem %s0, 18
  %s37 = sld [smem:[%s36]]
  %s38 = scalar_lea.smem %s0, 19
  %s39 = sld [smem:[%s38]]
  %s40 = scalar_lea.smem %s0, 20
  %s41 = sld [smem:[%s40]]
  %s42 = scalar_lea.smem %s0, 21
  %s43 = sld [smem:[%s42]]
  %s44 = scalar_lea.smem %s0, 22
  %s45 = sld [smem:[%s44]]
  %s46 = scalar_lea.smem %s0, 23
  %s47 = sld [smem:[%s46]]
  %s48 = scalar_lea.smem %s0, 24
  %s49 = sld [smem:[%s48]]
  %s50 = scalar_lea.smem %s0, 25
  %s51 = sld [smem:[%s50]]
  %s52 = scalar_lea.smem %s0, 26
  %s53 = sld [smem:[%s52]]
  %s54 = scalar_lea.smem %s0, 27
  %s55 = sld [smem:[%s54]]
  %s56 = scalar_lea.smem %s0, 28
  %s57 = sld [smem:[%s56]]
  %s58 = scalar_lea.smem %s0, 29
  %s59 = sld [smem:[%s58]]
  %60 = xla_tuple %s57, %s59
  %s61 = sld [smem:[#allocation0]]
  $region130: #{vqvae_freq_forward.1} parent=0
    _
  %s63 = ssub.s32 1, %s61
  %s64 = scalar_select 0, %s63, %s61
  // Predicated region
  $region2: #{vqvae_freq_forward.1} parent=0 // pred_check
    _
  $region3: #{vqvae_freq_forward.1} parent=0 // pred_check_branch
    %66 = sbr.rel (0) target = $region5
  $region4: #{vqvae_freq_forward.1} parent=0 // pred_region
    _
  $region5: #{vqvae_freq_forward.1} parent=0 // pred_fallthru
    _
  // Predicated region
  $region6: #{vqvae_freq_forward.1} parent=0 // pred_check
    _
  $region7: #{vqvae_freq_forward.1} parent=0 // pred_check_branch
    %68 = sbr.rel (0) target = $region9
  $region8: #{vqvae_freq_forward.1} parent=0 // pred_region
    _
  $region9: #{vqvae_freq_forward.1} parent=0 // pred_fallthru
    _
  // Predicated region
  $region10: #{vqvae_freq_forward.1} parent=0 // pred_check
    _
  $region11: #{vqvae_freq_forward.1} parent=0 // pred_check_branch
    %70 = sbr.rel (0) target = $region13
  $region12: #{vqvae_freq_forward.1} parent=0 // pred_region
    _
  $region13: #{vqvae_freq_forward.1} parent=0 // pred_fallthru
    _
  // Predicated region
  $region14: #{vqvae_freq_forward.1} parent=0 // pred_check
    _
  $region15: #{vqvae_freq_forward.1} parent=0 // pred_check_branch
    %72 = sbr.rel (0) target = $region17
  $region16: #{vqvae_freq_forward.1} parent=0 // pred_region
    _
  $region17: #{vqvae_freq_forward.1} parent=0 // pred_fallthru
    _
  // Predicated region
  $region18: #{vqvae_freq_forward.1} parent=0 // pred_check
    _
  $region19: #{vqvae_freq_forward.1} parent=0 // pred_check_branch
    %74 = sbr.rel (0) target = $region21
  $region20: #{vqvae_freq_forward.1} parent=0 // pred_region
    _
  $region21: #{vqvae_freq_forward.1} parent=0 // pred_fallthru
    _
  // Predicated region
  $region22: #{vqvae_freq_forward.1} parent=0 // pred_check
    _
  $region23: #{vqvae_freq_forward.1} parent=0 // pred_check_branch
    %76 = sbr.rel (0) target = $region25
  $region24: #{vqvae_freq_forward.1} parent=0 // pred_region
    _
  $region25: #{vqvae_freq_forward.1} parent=0 // pred_fallthru
    _
  // Predicated region
  $region26: #{vqvae_freq_forward.1} parent=0 // pred_check
    _
  $region27: #{vqvae_freq_forward.1} parent=0 // pred_check_branch
    %78 = sbr.rel (0) target = $region29
  $region28: #{vqvae_freq_forward.1} parent=0 // pred_region
    _
  $region29: #{vqvae_freq_forward.1} parent=0 // pred_fallthru
    _
  // Predicated region
  $region30: #{vqvae_freq_forward.1} parent=0 // pred_check
    _
  $region31: #{vqvae_freq_forward.1} parent=0 // pred_check_branch
    %80 = sbr.rel (0) target = $region33
  $region32: #{vqvae_freq_forward.1} parent=0 // pred_region
    _
  $region33: #{vqvae_freq_forward.1} parent=0 // pred_fallthru
    _
  // Predicated region
  $region34: #{vqvae_freq_forward.1} parent=0 // pred_check
    _
  $region35: #{vqvae_freq_forward.1} parent=0 // pred_check_branch
    %82 = sbr.rel (0) target = $region37
  $region36: #{vqvae_freq_forward.1} parent=0 // pred_region
    _
  $region37: #{vqvae_freq_forward.1} parent=0 // pred_fallthru
    _
  // Predicated region
  $region38: #{vqvae_freq_forward.1} parent=0 // pred_check
    _
  $region39: #{vqvae_freq_forward.1} parent=0 // pred_check_branch
    %84 = sbr.rel (0) target = $region41
  $region40: #{vqvae_freq_forward.1} parent=0 // pred_region
    _
  $region41: #{vqvae_freq_forward.1} parent=0 // pred_fallthru
    _
  // Predicated region
  $region42: #{vqvae_freq_forward.1} parent=0 // pred_check
    _
  $region43: #{vqvae_freq_forward.1} parent=0 // pred_check_branch
    %86 = sbr.rel (0) target = $region45
  $region44: #{vqvae_freq_forward.1} parent=0 // pred_region
    _
  $region45: #{vqvae_freq_forward.1} parent=0 // pred_fallthru
    _
  // Predicated region
  $region46: #{vqvae_freq_forward.1} parent=0 // pred_check
    _
  $region47: #{vqvae_freq_forward.1} parent=0 // pred_check_branch
    %88 = sbr.rel (0) target = $region49
  $region48: #{vqvae_freq_forward.1} parent=0 // pred_region
    _
  $region49: #{vqvae_freq_forward.1} parent=0 // pred_fallthru
    _
  // Predicated region
  $region50: #{vqvae_freq_forward.1} parent=0 // pred_check
    _
  $region51: #{vqvae_freq_forward.1} parent=0 // pred_check_branch
    %90 = sbr.rel (0) target = $region53
  $region52: #{vqvae_freq_forward.1} parent=0 // pred_region
    _
  $region53: #{vqvae_freq_forward.1} parent=0 // pred_fallthru
    _
  // Predicated region
  $region54: #{vqvae_freq_forward.1} parent=0 // pred_check
    _
  $region55: #{vqvae_freq_forward.1} parent=0 // pred_check_branch
    %92 = sbr.rel (0) target = $region57
  $region56: #{vqvae_freq_forward.1} parent=0 // pred_region
    _
  $region57: #{vqvae_freq_forward.1} parent=0 // pred_fallthru
    _
  // Predicated region
  $region58: #{vqvae_freq_forward.1} parent=0 // pred_check
    _
  $region59: #{vqvae_freq_forward.1} parent=0 // pred_check_branch
    %94 = sbr.rel (0) target = $region61
  $region60: #{vqvae_freq_forward.1} parent=0 // pred_region
    _
  $region61: #{vqvae_freq_forward.1} parent=0 // pred_fallthru
    _
  // Predicated region
  $region62: #{vqvae_freq_forward.1} parent=0 // pred_check
    _
  $region63: #{vqvae_freq_forward.1} parent=0 // pred_check_branch
    %96 = sbr.rel (0) target = $region65
  $region64: #{vqvae_freq_forward.1} parent=0 // pred_region
    _
  $region65: #{vqvae_freq_forward.1} parent=0 // pred_fallthru
    _
  // Predicated region
  $region66: #{vqvae_freq_forward.1} parent=0 // pred_check
    _
  $region67: #{vqvae_freq_forward.1} parent=0 // pred_check_branch
    %98 = sbr.rel (0) target = $region69
  $region68: #{vqvae_freq_forward.1} parent=0 // pred_region
    _
  $region69: #{vqvae_freq_forward.1} parent=0 // pred_fallthru
    _
  // Predicated region
  $region70: #{vqvae_freq_forward.1} parent=0 // pred_check
    _
  $region71: #{vqvae_freq_forward.1} parent=0 // pred_check_branch
    %100 = sbr.rel (0) target = $region73
  $region72: #{vqvae_freq_forward.1} parent=0 // pred_region
    _
  $region73: #{vqvae_freq_forward.1} parent=0 // pred_fallthru
    _
  // Predicated region
  $region74: #{vqvae_freq_forward.1} parent=0 // pred_check
    _
  $region75: #{vqvae_freq_forward.1} parent=0 // pred_check_branch
    %102 = sbr.rel (0) target = $region77
  $region76: #{vqvae_freq_forward.1} parent=0 // pred_region
    _
  $region77: #{vqvae_freq_forward.1} parent=0 // pred_fallthru
    _
  // Predicated region
  $region78: #{vqvae_freq_forward.1} parent=0 // pred_check
    _
  $region79: #{vqvae_freq_forward.1} parent=0 // pred_check_branch
    %104 = sbr.rel (0) target = $region81
  $region80: #{vqvae_freq_forward.1} parent=0 // pred_region
    _
  $region81: #{vqvae_freq_forward.1} parent=0 // pred_fallthru
    _
  // Predicated region
  $region82: #{vqvae_freq_forward.1} parent=0 // pred_check
    _
  $region83: #{vqvae_freq_forward.1} parent=0 // pred_check_branch
    %106 = sbr.rel (0) target = $region85
  $region84: #{vqvae_freq_forward.1} parent=0 // pred_region
    _
  $region85: #{vqvae_freq_forward.1} parent=0 // pred_fallthru
    _
  // Predicated region
  $region86: #{vqvae_freq_forward.1} parent=0 // pred_check
    _
  $region87: #{vqvae_freq_forward.1} parent=0 // pred_check_branch
    %108 = sbr.rel (0) target = $region89
  $region88: #{vqvae_freq_forward.1} parent=0 // pred_region
    _
  $region89: #{vqvae_freq_forward.1} parent=0 // pred_fallthru
    _
  // Predicated region
  $region90: #{vqvae_freq_forward.1} parent=0 // pred_check
    _
  $region91: #{vqvae_freq_forward.1} parent=0 // pred_check_branch
    %110 = sbr.rel (0) target = $region93
  $region92: #{vqvae_freq_forward.1} parent=0 // pred_region
    _
  $region93: #{vqvae_freq_forward.1} parent=0 // pred_fallthru
    _
  // Predicated region
  $region94: #{vqvae_freq_forward.1} parent=0 // pred_check
    _
  $region95: #{vqvae_freq_forward.1} parent=0 // pred_check_branch
    %112 = sbr.rel (0) target = $region97
  $region96: #{vqvae_freq_forward.1} parent=0 // pred_region
    _
  $region97: #{vqvae_freq_forward.1} parent=0 // pred_fallthru
    _
  // Predicated region
  $region98: #{vqvae_freq_forward.1} parent=0 // pred_check
    _
  $region99: #{vqvae_freq_forward.1} parent=0 // pred_check_branch
    %114 = sbr.rel (0) target = $region101
  $region100: #{vqvae_freq_forward.1} parent=0 // pred_region
    _
  $region101: #{vqvae_freq_forward.1} parent=0 // pred_fallthru
    _
  // Predicated region
  $region102: #{vqvae_freq_forward.1} parent=0 // pred_check
    _
  $region103: #{vqvae_freq_forward.1} parent=0 // pred_check_branch
    %116 = sbr.rel (0) target = $region105
  $region104: #{vqvae_freq_forward.1} parent=0 // pred_region
    _
  $region105: #{vqvae_freq_forward.1} parent=0 // pred_fallthru
    _
  // Predicated region
  $region106: #{vqvae_freq_forward.1} parent=0 // pred_check
    _
  $region107: #{vqvae_freq_forward.1} parent=0 // pred_check_branch
    %118 = sbr.rel (0) target = $region109
  $region108: #{vqvae_freq_forward.1} parent=0 // pred_region
    _
  $region109: #{vqvae_freq_forward.1} parent=0 // pred_fallthru
    _
  // Predicated region
  $region110: #{vqvae_freq_forward.1} parent=0 // pred_check
    _
  $region111: #{vqvae_freq_forward.1} parent=0 // pred_check_branch
    %120 = sbr.rel (0) target = $region113
  $region112: #{vqvae_freq_forward.1} parent=0 // pred_region
    _
  $region113: #{vqvae_freq_forward.1} parent=0 // pred_fallthru
    _
  %v122 = vlaneseq
  %v123 = vshrl.u32 %v122, 7
  %v124 = vadd.s32 %v123, 8
  %vm125 = vcmp.lt.s32.totalorder %v123, 0
  %v126 = vsub.s32 0, %v123
  %v127 = vsel %vm125, %v126, %v123
  %v128 = vshrl.u32 %v127, 3
  %v129 = vand.u32 %v127, 7
  %v130 = vsub.s32 0, %v129
  %v131 = vsel %vm125, %v130, %v129
  %vm132 = vcmp.lt.s32.totalorder %v124, 0
  %v133 = vsub.s32 0, %v124
  %v134 = vsel %vm132, %v133, %v124
  %v135 = vshrl.u32 %v134, 3
  %v136 = vand.u32 %v134, 7
  %v137 = vsub.s32 0, %v136
  %v138 = vsel %vm132, %v137, %v136
  %vm139 = vcmp.ne.s32.totalorder %v131, 0
  %vm140 = vcmp.ne.s32.totalorder %v138, 0
  %vm141 = vcmp.lt.s32.totalorder %v131, 0
  %vm142 = vcmp.lt.s32.totalorder %v138, 0
  %vm143 = vmand %vm141, %vm139
  %vm144 = vmand %vm142, %vm140
  %v145 = vadd.s32 %v131, 8
  %v146 = vadd.s32 %v138, 8
  %v147 = vsel %vm143, %v145, %v131
  %v148 = vsel %vm144, %v146, %v138
  %vm149 = vcmp.eq.s32.totalorder %v147, 0
  %vm150 = vcmp.eq.s32.totalorder %v148, 0
  %vm151 = vcmp.eq.s32.totalorder %v147, 7
  %vm152 = vcmp.eq.s32.totalorder %v148, 7
  %v153 = vld [vmem:[%s1] sm:$0xff]
  %v154 = vld [vmem:[%s1 + $0x8] sm:$0xff]
  %v155 = vld [vmem:[%s3] sm:$0x3]
  %vm156 = vcmask 15360
  %v158 = vsel %vm156, %v153, 0
  %v161 = vsel %vm156, %v154, 0
  %vm163 = vcmask 1041408
  %v165 = vsel %vm163, %v155, 0
  %167 = vmatprep.subr.mxu0 0.0
  %168 = vmatpush1.msra.mxu0 %v165
  %169 = vmatprep.subr.mxu0 0.0
  %170 = vmatpush1.msra.mxu0 0.0
  %171 = vmatprep.subr.mxu0 0.0
  %172 = vmatpush1.msra.mxu0 0.0
  %173 = vmatprep.subr.mxu0 0.0
  %174 = vmatpush1.msra.mxu0 0.0
  %175 = vmatprep.subr.mxu0 0.0
  %176 = vmatpush1.msra.mxu0 0.0
  %177 = vmatprep.subr.mxu0 0.0
  %178 = vmatpush1.msra.mxu0 0.0
  %179 = vmatprep.subr.mxu0 0.0
  %180 = vmatpush1.msra.mxu0 0.0
  %181 = vmatprep.subr.mxu0 0.0
  %182 = vmatpush1.msra.mxu0 0.0
  %183 = vmatprep.subr.mxu0 0.0
  %184 = vmatpush1.msra.mxu0 0.0
  %185 = vmatprep.subr.mxu0 0.0
  %186 = vmatpush1.msra.mxu0 0.0
  %187 = vmatprep.subr.mxu0 0.0
  %188 = vmatpush1.msra.mxu0 0.0
  %189 = vmatprep.subr.mxu0 0.0
  %190 = vmatpush1.msra.mxu0 0.0
  %191 = vmatprep.subr.mxu0 0.0
  %192 = vmatpush1.msra.mxu0 0.0
  %193 = vmatprep.subr.mxu0 0.0
  %194 = vmatpush1.msra.mxu0 0.0
  %195 = vmatprep.subr.mxu0 0.0
  %196 = vmatpush1.msra.mxu0 0.0
  %197 = vmatprep.subr.mxu0 0.0
  %198 = vmatpush1.msra.mxu0 0.0
  %199 = vmatprep.subr.mxu0 0.0
  %200 = vmatpush1.msra.mxu0 0.0
  %201 = vmatprep.subr.mxu0 0.0
  %202 = vmatpush1.msra.mxu0 0.0
  %203 = vmatprep.subr.mxu0 0.0
  %204 = vmatpush1.msra.mxu0 0.0
  %205 = vmatprep.subr.mxu0 0.0
  %206 = vmatpush1.msra.mxu0 0.0
  %207 = vmatprep.subr.mxu0 0.0
  %208 = vmatpush1.msra.mxu0 0.0
  %209 = vmatprep.subr.mxu0 0.0
  %210 = vmatpush1.msra.mxu0 0.0
  %211 = vmatprep.subr.mxu0 0.0
  %212 = vmatpush1.msra.mxu0 0.0
  %213 = vmatprep.subr.mxu0 0.0
  %214 = vmatpush1.msra.mxu0 0.0
  %215 = vmatprep.subr.mxu0 0.0
  %216 = vmatpush1.msra.mxu0 0.0
  %217 = vmatprep.subr.mxu0 0.0
  %218 = vmatpush1.msra.mxu0 0.0
  %219 = vmatprep.subr.mxu0 0.0
  %220 = vmatpush1.msra.mxu0 0.0
  %221 = vmatprep.subr.mxu0 0.0
  %222 = vmatpush1.msra.mxu0 0.0
  %223 = vmatprep.subr.mxu0 0.0
  %224 = vmatpush1.msra.mxu0 0.0
  %225 = vmatprep.subr.mxu0 0.0
  %226 = vmatpush1.msra.mxu0 0.0
  %227 = vmatprep.subr.mxu0 0.0
  %228 = vmatpush1.msra.mxu0 0.0
  %229 = vmatprep.subr.mxu0 0.0
  %230 = vmatpush1.msra.mxu0 0.0
  %231 = vmatprep.mubr.f32.mxu0 0.0
  %232 = vmatmul.mubr.f32.gmra.mrb[0].mxu0 %v158
  %v233 = vpop.f32.mrb[0].mxu0
  %v234 = vadd.f32 0.0, %v233
  %v235 = vpop.f32.mrb[0].mxu0
  %236 = vmatprep.mubr.f32.mxu0 0.0
  %237 = vmatmul.mubr.f32.gmra.mrb[0].mxu0 %v161
  %v238 = vpop.f32.mrb[0].mxu0
  %v239 = vadd.f32 0.0, %v238
  %v240 = vpop.f32.mrb[0].mxu0
  %241 = vdwg.mxu0
  %s242 = scalar_lea.vmem %s3, 2
  %v243 = vld [vmem:[%s242] sm:$0x3]
  %v245 = vsel %vm163, %v243, 0
  %247 = vmatprep.subr.mxu0 0.0
  %248 = vmatpush1.msra.mxu0 %v245
  %249 = vmatprep.subr.mxu0 0.0
  %250 = vmatpush1.msra.mxu0 0.0
  %251 = vmatprep.subr.mxu0 0.0
  %252 = vmatpush1.msra.mxu0 0.0
  %253 = vmatprep.subr.mxu0 0.0
  %254 = vmatpush1.msra.mxu0 0.0
  %255 = vmatprep.subr.mxu0 0.0
  %256 = vmatpush1.msra.mxu0 0.0
  %257 = vmatprep.subr.mxu0 0.0
  %258 = vmatpush1.msra.mxu0 0.0
  %259 = vmatprep.subr.mxu0 0.0
  %260 = vmatpush1.msra.mxu0 0.0
  %261 = vmatprep.subr.mxu0 0.0
  %262 = vmatpush1.msra.mxu0 0.0
  %263 = vmatprep.subr.mxu0 0.0
  %264 = vmatpush1.msra.mxu0 0.0
  %265 = vmatprep.subr.mxu0 0.0
  %266 = vmatpush1.msra.mxu0 0.0
  %267 = vmatprep.subr.mxu0 0.0
  %268 = vmatpush1.msra.mxu0 0.0
  %269 = vmatprep.subr.mxu0 0.0
  %270 = vmatpush1.msra.mxu0 0.0
  %271 = vmatprep.subr.mxu0 0.0
  %272 = vmatpush1.msra.mxu0 0.0
  %273 = vmatprep.subr.mxu0 0.0
  %274 = vmatpush1.msra.mxu0 0.0
  %275 = vmatprep.subr.mxu0 0.0
  %276 = vmatpush1.msra.mxu0 0.0
  %277 = vmatprep.subr.mxu0 0.0
  %278 = vmatpush1.msra.mxu0 0.0
  %279 = vmatprep.subr.mxu0 0.0
  %280 = vmatpush1.msra.mxu0 0.0
  %281 = vmatprep.subr.mxu0 0.0
  %282 = vmatpush1.msra.mxu0 0.0
  %283 = vmatprep.subr.mxu0 0.0
  %284 = vmatpush1.msra.mxu0 0.0
  %285 = vmatprep.subr.mxu0 0.0
  %286 = vmatpush1.msra.mxu0 0.0
  %287 = vmatprep.subr.mxu0 0.0
  %288 = vmatpush1.msra.mxu0 0.0
  %289 = vmatprep.subr.mxu0 0.0
  %290 = vmatpush1.msra.mxu0 0.0
  %291 = vmatprep.subr.mxu0 0.0
  %292 = vmatpush1.msra.mxu0 0.0
  %293 = vmatprep.subr.mxu0 0.0
  %294 = vmatpush1.msra.mxu0 0.0
  %295 = vmatprep.subr.mxu0 0.0
  %296 = vmatpush1.msra.mxu0 0.0
  %297 = vmatprep.subr.mxu0 0.0
  %298 = vmatpush1.msra.mxu0 0.0
  %299 = vmatprep.subr.mxu0 0.0
  %300 = vmatpush1.msra.mxu0 0.0
  %301 = vmatprep.subr.mxu0 0.0
  %302 = vmatpush1.msra.mxu0 0.0
  %303 = vmatprep.subr.mxu0 0.0
  %304 = vmatpush1.msra.mxu0 0.0
  %305 = vmatprep.subr.mxu0 0.0
  %306 = vmatpush1.msra.mxu0 0.0
  %307 = vmatprep.subr.mxu0 0.0
  %308 = vmatpush1.msra.mxu0 0.0
  %309 = vmatprep.subr.mxu0 0.0
  %310 = vmatpush1.msra.mxu0 0.0
  %311 = vmatprep.mubr.f32.mxu0 0.0
  %312 = vmatmul.mubr.f32.gmra.mrb[0].mxu0 %v158
  %v313 = vpop.f32.mrb[0].mxu0
  %v314 = vadd.f32 0.0, %v313
  %v315 = vpop.f32.mrb[0].mxu0
  %316 = vmatprep.mubr.f32.mxu0 0.0
  %317 = vmatmul.mubr.f32.gmra.mrb[0].mxu0 %v161
  %v318 = vpop.f32.mrb[0].mxu0
  %v319 = vadd.f32 0.0, %v318
  %v320 = vpop.f32.mrb[0].mxu0
  %321 = vdwg.mxu0
  %s322 = scalar_lea.vmem %s3, 4
  %v323 = vld [vmem:[%s322] sm:$0x3]
  %v325 = vsel %vm163, %v323, 0
  %327 = vmatprep.subr.mxu0 0.0
  %328 = vmatpush1.msra.mxu0 %v325
  %329 = vmatprep.subr.mxu0 0.0
  %330 = vmatpush1.msra.mxu0 0.0
  %331 = vmatprep.subr.mxu0 0.0
  %332 = vmatpush1.msra.mxu0 0.0
  %333 = vmatprep.subr.mxu0 0.0
  %334 = vmatpush1.msra.mxu0 0.0
  %335 = vmatprep.subr.mxu0 0.0
  %336 = vmatpush1.msra.mxu0 0.0
  %337 = vmatprep.subr.mxu0 0.0
  %338 = vmatpush1.msra.mxu0 0.0
  %339 = vmatprep.subr.mxu0 0.0
  %340 = vmatpush1.msra.mxu0 0.0
  %341 = vmatprep.subr.mxu0 0.0
  %342 = vmatpush1.msra.mxu0 0.0
  %343 = vmatprep.subr.mxu0 0.0
  %344 = vmatpush1.msra.mxu0 0.0
  %345 = vmatprep.subr.mxu0 0.0
  %346 = vmatpush1.msra.mxu0 0.0
  %347 = vmatprep.subr.mxu0 0.0
  %348 = vmatpush1.msra.mxu0 0.0
  %349 = vmatprep.subr.mxu0 0.0
  %350 = vmatpush1.msra.mxu0 0.0
  %351 = vmatprep.subr.mxu0 0.0
  %352 = vmatpush1.msra.mxu0 0.0
  %353 = vmatprep.subr.mxu0 0.0
  %354 = vmatpush1.msra.mxu0 0.0
  %355 = vmatprep.subr.mxu0 0.0
  %356 = vmatpush1.msra.mxu0 0.0
  %357 = vmatprep.subr.mxu0 0.0
  %358 = vmatpush1.msra.mxu0 0.0
  %359 = vmatprep.subr.mxu0 0.0
  %360 = vmatpush1.msra.mxu0 0.0
  %361 = vmatprep.subr.mxu0 0.0
  %362 = vmatpush1.msra.mxu0 0.0
  %363 = vmatprep.subr.mxu0 0.0
  %364 = vmatpush1.msra.mxu0 0.0
  %365 = vmatprep.subr.mxu0 0.0
  %366 = vmatpush1.msra.mxu0 0.0
  %367 = vmatprep.subr.mxu0 0.0
  %368 = vmatpush1.msra.mxu0 0.0
  %369 = vmatprep.subr.mxu0 0.0
  %370 = vmatpush1.msra.mxu0 0.0
  %371 = vmatprep.subr.mxu0 0.0
  %372 = vmatpush1.msra.mxu0 0.0
  %373 = vmatprep.subr.mxu0 0.0
  %374 = vmatpush1.msra.mxu0 0.0
  %375 = vmatprep.subr.mxu0 0.0
  %376 = vmatpush1.msra.mxu0 0.0
  %377 = vmatprep.subr.mxu0 0.0
  %378 = vmatpush1.msra.mxu0 0.0
  %379 = vmatprep.subr.mxu0 0.0
  %380 = vmatpush1.msra.mxu0 0.0
  %381 = vmatprep.subr.mxu0 0.0
  %382 = vmatpush1.msra.mxu0 0.0
  %383 = vmatprep.subr.mxu0 0.0
  %384 = vmatpush1.msra.mxu0 0.0
  %385 = vmatprep.subr.mxu0 0.0
  %386 = vmatpush1.msra.mxu0 0.0
  %387 = vmatprep.subr.mxu0 0.0
  %388 = vmatpush1.msra.mxu0 0.0
  %389 = vmatprep.subr.mxu0 0.0
  %390 = vmatpush1.msra.mxu0 0.0
  %391 = vmatprep.mubr.f32.mxu0 0.0
  %392 = vmatmul.mubr.f32.gmra.mrb[0].mxu0 %v158
  %v393 = vpop.f32.mrb[0].mxu0
  %v394 = vadd.f32 0.0, %v393
  %v395 = vpop.f32.mrb[0].mxu0
  %396 = vmatprep.mubr.f32.mxu0 0.0
  %397 = vmatmul.mubr.f32.gmra.mrb[0].mxu0 %v161
  %v398 = vpop.f32.mrb[0].mxu0
  %v399 = vadd.f32 0.0, %v398
  %v400 = vpop.f32.mrb[0].mxu0
  %401 = vdwg.mxu0
  %v402 = vrot.slane %v234, 7
  %v403 = vrot.slane %v239, 7
  %vm404 = vcmp.lt.s32.totalorder %v123, 1
  %v405 = vsel %vm404, %v402, %v403
  %v406 = vsel %vm404, %v403, %v402
  %v407 = vsel %vm149, 0.0, %v406
  %v408 = vsel %vm150, 0.0, %v405
  %v409 = vadd.f32 %v407, %v314
  %v410 = vadd.f32 %v408, %v319
  %v411 = vrot.slane %v394, 1
  %v412 = vrot.slane %v399, 1
  %vm413 = vcmp.lt.s32.totalorder %v123, 7
  %v414 = vsel %vm413, %v411, %v412
  %v415 = vsel %vm413, %v412, %v411
  %v416 = vsel %vm151, 0.0, %v414
  %v417 = vsel %vm152, 0.0, %v415
  %v418 = vadd.f32 %v409, %v416
  %v419 = vadd.f32 %v410, %v417
  %v420 = vld [vmem:[%s5] sm:$0x1]
  %v422 = vlaneseq
  %v423 = vshrl.u32 %v422, 7
  %v424 = vsub.s32 0, %v423
  %v425 = vrot.slane %v420, %v424
  %v427 = vadd.f32 %v418, %v425
  %v428 = vadd.f32 %v419, %v425
  %v429 = vmax.f32 %v427, 0.0
  %v430 = vmax.f32 %v428, 0.0
  %v431 = vmax.f32 %v429, 0.0
  %v432 = vmax.f32 %v430, 0.0
  %v433 = vrot.slane %v431, 7
  %v434 = vrot.slane %v432, 7
  %v435 = vsel %vm404, %v433, %v434
  %v436 = vsel %vm404, %v434, %v433
  %v437 = vsel %vm149, 0.0, %v436
  %v438 = vsel %vm150, 0.0, %v435
  %v439 = vpack.c.bf16 %v438, %v437
  %v440 = vld [vmem:[%s7] sm:$0xf]
  %v441 = vld [vmem:[%s7 + $0x4] sm:$0xf]
  %v442 = vld [vmem:[%s7 + $0x8] sm:$0xf]
  %v443 = vld [vmem:[%s7 + $0xc] sm:$0xf]
  %v444 = vld [vmem:[%s7 + $0x10] sm:$0xf]
  %v445 = vld [vmem:[%s7 + $0x14] sm:$0xf]
  %v446 = vld [vmem:[%s7 + $0x18] sm:$0xf]
  %v447 = vld [vmem:[%s7 + $0x1c] sm:$0xf]
  %v448 = vld [vmem:[%s7 + $0x20] sm:$0xf]
  %v449 = vld [vmem:[%s7 + $0x24] sm:$0xf]
  %v450 = vld [vmem:[%s7 + $0x28] sm:$0xf]
  %v451 = vld [vmem:[%s7 + $0x2c] sm:$0xf]
  %v452 = vld [vmem:[%s7 + $0x30] sm:$0xf]
  %v453 = vld [vmem:[%s7 + $0x34] sm:$0xf]
  %v454 = vld [vmem:[%s7 + $0x38] sm:$0xf]
  %v455 = vld [vmem:[%s7 + $0x3c] sm:$0xf]
  %v456 = vpack.c.bf16 %v432, %v431
  %s457 = scalar_lea.vmem %s7, 64
  %v458 = vld [vmem:[%s457] sm:$0xf]
  %v459 = vld [vmem:[%s457 + $0x4] sm:$0xf]
  %v460 = vld [vmem:[%s457 + $0x8] sm:$0xf]
  %v461 = vld [vmem:[%s457 + $0xc] sm:$0xf]
  %v462 = vld [vmem:[%s457 + $0x10] sm:$0xf]
  %v463 = vld [vmem:[%s457 + $0x14] sm:$0xf]
  %v464 = vld [vmem:[%s457 + $0x18] sm:$0xf]
  %v465 = vld [vmem:[%s457 + $0x1c] sm:$0xf]
  %v466 = vld [vmem:[%s457 + $0x20] sm:$0xf]
  %v467 = vld [vmem:[%s457 + $0x24] sm:$0xf]
  %v468 = vld [vmem:[%s457 + $0x28] sm:$0xf]
  %v469 = vld [vmem:[%s457 + $0x2c] sm:$0xf]
  %v470 = vld [vmem:[%s457 + $0x30] sm:$0xf]
  %v471 = vld [vmem:[%s457 + $0x34] sm:$0xf]
  %v472 = vld [vmem:[%s457 + $0x38] sm:$0xf]
  %v473 = vld [vmem:[%s457 + $0x3c] sm:$0xf]
  %v490 = vunpack.c.l.b16 %v458
  %v491 = vunpack.c.l.b16 %v459
  %v492 = vunpack.c.l.b16 %v460
  %v493 = vunpack.c.l.b16 %v461
  %v494 = vunpack.c.l.b16 %v462
  %v495 = vunpack.c.l.b16 %v463
  %v496 = vunpack.c.l.b16 %v464
  %v497 = vunpack.c.l.b16 %v465
  %v498 = vunpack.c.l.b16 %v466
  %v499 = vunpack.c.l.b16 %v467
  %v500 = vunpack.c.l.b16 %v468
  %v501 = vunpack.c.l.b16 %v469
  %v502 = vunpack.c.l.b16 %v470
  %v503 = vunpack.c.l.b16 %v471
  %v504 = vunpack.c.l.b16 %v472
  %v505 = vunpack.c.l.b16 %v473
  %v506 = vpack.c.b16 %v491, %v490
  %v507 = vpack.c.b16 %v493, %v492
  %v508 = vpack.c.b16 %v495, %v494
  %v509 = vpack.c.b16 %v497, %v496
  %v510 = vpack.c.b16 %v499, %v498
  %v511 = vpack.c.b16 %v501, %v500
  %v512 = vpack.c.b16 %v503, %v502
  %v513 = vpack.c.b16 %v505, %v504
  %522 = vmatprep.subr.bf16.mxu0 0
  %523 = vmatpush1.bf16.msra.mxu0 %v506
  %524 = vmatprep.subr.bf16.mxu0 0
  %525 = vmatpush1.bf16.msra.mxu0 %v507
  %526 = vmatprep.subr.bf16.mxu0 0
  %527 = vmatpush1.bf16.msra.mxu0 %v508
  %528 = vmatprep.subr.bf16.mxu0 0
  %529 = vmatpush1.bf16.msra.mxu0 %v509
  %530 = vmatprep.subr.bf16.mxu0 0
  %531 = vmatpush1.bf16.msra.mxu0 %v510
  %532 = vmatprep.subr.bf16.mxu0 0
  %533 = vmatpush1.bf16.msra.mxu0 %v511
  %534 = vmatprep.subr.bf16.mxu0 0
  %535 = vmatpush1.bf16.msra.mxu0 %v512
  %536 = vmatprep.subr.bf16.mxu0 0
  %537 = vmatpush1.bf16.msra.mxu0 %v513
  %538 = vmatprep.subr.bf16.mxu0 0
  %539 = vmatpush1.bf16.msra.mxu0 0
  %540 = vmatprep.subr.bf16.mxu0 0
  %541 = vmatpush1.bf16.msra.mxu0 0
  %542 = vmatprep.subr.bf16.mxu0 0
  %543 = vmatpush1.bf16.msra.mxu0 0
  %544 = vmatprep.subr.bf16.mxu0 0
  %545 = vmatpush1.bf16.msra.mxu0 0
  %546 = vmatprep.subr.bf16.mxu0 0
  %547 = vmatpush1.bf16.msra.mxu0 0
  %548 = vmatprep.subr.bf16.mxu0 0
  %549 = vmatpush1.bf16.msra.mxu0 0
  %550 = vmatprep.subr.bf16.mxu0 0
  %551 = vmatpush1.bf16.msra.mxu0 0
  %552 = vmatprep.subr.bf16.mxu0 0
  %553 = vmatpush1.bf16.msra.mxu0 0
  %554 = vmatprep.mubr.bf16.mxu0 0
  %555 = vmatmul.mubr.bf16.gmra.mrb[0].mxu0 %v456
  %v556 = vpop.f32.mrb[0].mxu0
  %v557 = vadd.f32 0.0, %v556
  %v558 = vpop.f32.mrb[0].mxu0
  %v559 = vpop.f32.mrb[0].mxu0
  %v560 = vadd.f32 0.0, %v559
  %v561 = vpop.f32.mrb[0].mxu0
  %562 = vdwg.mxu0
  %v579 = vunpack.c.l.b16 %v440
  %v580 = vunpack.c.l.b16 %v441
  %v581 = vunpack.c.l.b16 %v442
  %v582 = vunpack.c.l.b16 %v443
  %v583 = vunpack.c.l.b16 %v444
  %v584 = vunpack.c.l.b16 %v445
  %v585 = vunpack.c.l.b16 %v446
  %v586 = vunpack.c.l.b16 %v447
  %v587 = vunpack.c.l.b16 %v448
  %v588 = vunpack.c.l.b16 %v449
  %v589 = vunpack.c.l.b16 %v450
  %v590 = vunpack.c.l.b16 %v451
  %v591 = vunpack.c.l.b16 %v452
  %v592 = vunpack.c.l.b16 %v453
  %v593 = vunpack.c.l.b16 %v454
  %v594 = vunpack.c.l.b16 %v455
  %v595 = vpack.c.b16 %v580, %v579
  %v596 = vpack.c.b16 %v582, %v581
  %v597 = vpack.c.b16 %v584, %v583
  %v598 = vpack.c.b16 %v586, %v585
  %v599 = vpack.c.b16 %v588, %v587
  %v600 = vpack.c.b16 %v590, %v589
  %v601 = vpack.c.b16 %v592, %v591
  %v602 = vpack.c.b16 %v594, %v593
  %611 = vmatprep.subr.bf16.mxu0 0
  %612 = vmatpush1.bf16.msra.mxu0 %v595
  %613 = vmatprep.subr.bf16.mxu0 0
  %614 = vmatpush1.bf16.msra.mxu0 %v596
  %615 = vmatprep.subr.bf16.mxu0 0
  %616 = vmatpush1.bf16.msra.mxu0 %v597
  %617 = vmatprep.subr.bf16.mxu0 0
  %618 = vmatpush1.bf16.msra.mxu0 %v598
  %619 = vmatprep.subr.bf16.mxu0 0
  %620 = vmatpush1.bf16.msra.mxu0 %v599
  %621 = vmatprep.subr.bf16.mxu0 0
  %622 = vmatpush1.bf16.msra.mxu0 %v600
  %623 = vmatprep.subr.bf16.mxu0 0
  %624 = vmatpush1.bf16.msra.mxu0 %v601
  %625 = vmatprep.subr.bf16.mxu0 0
  %626 = vmatpush1.bf16.msra.mxu0 %v602
  %627 = vmatprep.subr.bf16.mxu0 0
  %628 = vmatpush1.bf16.msra.mxu0 0
  %629 = vmatprep.subr.bf16.mxu0 0
  %630 = vmatpush1.bf16.msra.mxu0 0
  %631 = vmatprep.subr.bf16.mxu0 0
  %632 = vmatpush1.bf16.msra.mxu0 0
  %633 = vmatprep.subr.bf16.mxu0 0
  %634 = vmatpush1.bf16.msra.mxu0 0
  %635 = vmatprep.subr.bf16.mxu0 0
  %636 = vmatpush1.bf16.msra.mxu0 0
  %637 = vmatprep.subr.bf16.mxu0 0
  %638 = vmatpush1.bf16.msra.mxu0 0
  %639 = vmatprep.subr.bf16.mxu0 0
  %640 = vmatpush1.bf16.msra.mxu0 0
  %641 = vmatprep.subr.bf16.mxu0 0
  %642 = vmatpush1.bf16.msra.mxu0 0
  %643 = vmatprep.mubr.bf16.mxu0 0
  %644 = vmatmul.mubr.bf16.gmra.mrb[0].mxu0 %v439
  %v645 = vpop.f32.mrb[0].mxu0
  %v646 = vadd.f32 %v557, %v645
  %v647 = vpop.f32.mrb[0].mxu0
  %v648 = vpop.f32.mrb[0].mxu0
  %v649 = vadd.f32 %v560, %v648
  %v650 = vpop.f32.mrb[0].mxu0
  %651 = vdwg.mxu0
  %v652 = vrot.slane %v431, 1
  %v653 = vrot.slane %v432, 1
  %v654 = vsel %vm413, %v652, %v653
  %v655 = vsel %vm413, %v653, %v652
  %v656 = vsel %vm151, 0.0, %v654
  %v657 = vsel %vm152, 0.0, %v655
  %v658 = vpack.c.bf16 %v657, %v656
  %s659 = scalar_lea.vmem %s7, 128
  %v660 = vld [vmem:[%s659] sm:$0xf]
  %v661 = vld [vmem:[%s659 + $0x4] sm:$0xf]
  %v662 = vld [vmem:[%s659 + $0x8] sm:$0xf]
  %v663 = vld [vmem:[%s659 + $0xc] sm:$0xf]
  %v664 = vld [vmem:[%s659 + $0x10] sm:$0xf]
  %v665 = vld [vmem:[%s659 + $0x14] sm:$0xf]
  %v666 = vld [vmem:[%s659 + $0x18] sm:$0xf]
  %v667 = vld [vmem:[%s659 + $0x1c] sm:$0xf]
  %v668 = vld [vmem:[%s659 + $0x20] sm:$0xf]
  %v669 = vld [vmem:[%s659 + $0x24] sm:$0xf]
  %v670 = vld [vmem:[%s659 + $0x28] sm:$0xf]
  %v671 = vld [vmem:[%s659 + $0x2c] sm:$0xf]
  %v672 = vld [vmem:[%s659 + $0x30] sm:$0xf]
  %v673 = vld [vmem:[%s659 + $0x34] sm:$0xf]
  %v674 = vld [vmem:[%s659 + $0x38] sm:$0xf]
  %v675 = vld [vmem:[%s659 + $0x3c] sm:$0xf]
  %v692 = vunpack.c.l.b16 %v660
  %v693 = vunpack.c.l.b16 %v661
  %v694 = vunpack.c.l.b16 %v662
  %v695 = vunpack.c.l.b16 %v663
  %v696 = vunpack.c.l.b16 %v664
  %v697 = vunpack.c.l.b16 %v665
  %v698 = vunpack.c.l.b16 %v666
  %v699 = vunpack.c.l.b16 %v667
  %v700 = vunpack.c.l.b16 %v668
  %v701 = vunpack.c.l.b16 %v669
  %v702 = vunpack.c.l.b16 %v670
  %v703 = vunpack.c.l.b16 %v671
  %v704 = vunpack.c.l.b16 %v672
  %v705 = vunpack.c.l.b16 %v673
  %v706 = vunpack.c.l.b16 %v674
  %v707 = vunpack.c.l.b16 %v675
  %v708 = vpack.c.b16 %v693, %v692
  %v709 = vpack.c.b16 %v695, %v694
  %v710 = vpack.c.b16 %v697, %v696
  %v711 = vpack.c.b16 %v699, %v698
  %v712 = vpack.c.b16 %v701, %v700
  %v713 = vpack.c.b16 %v703, %v702
  %v714 = vpack.c.b16 %v705, %v704
  %v715 = vpack.c.b16 %v707, %v706
  %724 = vmatprep.subr.bf16.mxu0 0
  %725 = vmatpush1.bf16.msra.mxu0 %v708
  %726 = vmatprep.subr.bf16.mxu0 0
  %727 = vmatpush1.bf16.msra.mxu0 %v709
  %728 = vmatprep.subr.bf16.mxu0 0
  %729 = vmatpush1.bf16.msra.mxu0 %v710
  %730 = vmatprep.subr.bf16.mxu0 0
  %731 = vmatpush1.bf16.msra.mxu0 %v711
  %732 = vmatprep.subr.bf16.mxu0 0
  %733 = vmatpush1.bf16.msra.mxu0 %v712
  %734 = vmatprep.subr.bf16.mxu0 0
  %735 = vmatpush1.bf16.msra.mxu0 %v713
  %736 = vmatprep.subr.bf16.mxu0 0
  %737 = vmatpush1.bf16.msra.mxu0 %v714
  %738 = vmatprep.subr.bf16.mxu0 0
  %739 = vmatpush1.bf16.msra.mxu0 %v715
  %740 = vmatprep.subr.bf16.mxu0 0
  %741 = vmatpush1.bf16.msra.mxu0 0
  %742 = vmatprep.subr.bf16.mxu0 0
  %743 = vmatpush1.bf16.msra.mxu0 0
  %744 = vmatprep.subr.bf16.mxu0 0
  %745 = vmatpush1.bf16.msra.mxu0 0
  %746 = vmatprep.subr.bf16.mxu0 0
  %747 = vmatpush1.bf16.msra.mxu0 0
  %748 = vmatprep.subr.bf16.mxu0 0
  %749 = vmatpush1.bf16.msra.mxu0 0
  %750 = vmatprep.subr.bf16.mxu0 0
  %751 = vmatpush1.bf16.msra.mxu0 0
  %752 = vmatprep.subr.bf16.mxu0 0
  %753 = vmatpush1.bf16.msra.mxu0 0
  %754 = vmatprep.subr.bf16.mxu0 0
  %755 = vmatpush1.bf16.msra.mxu0 0
  %756 = vmatprep.mubr.bf16.mxu0 0
  %757 = vmatmul.mubr.bf16.gmra.mrb[0].mxu0 %v658
  %v758 = vpop.f32.mrb[0].mxu0
  %v759 = vadd.f32 0.0, %v758
  %v760 = vpop.f32.mrb[0].mxu0
  %v761 = vpop.f32.mrb[0].mxu0
  %v762 = vadd.f32 0.0, %v761
  %v763 = vpop.f32.mrb[0].mxu0
  %764 = vdwg.mxu0
  %v765 = vadd.f32 %v646, %v759
  %v766 = vadd.f32 %v649, %v762
  %v767 = vld [vmem:[%s9] sm:$0x1]
  %v769 = vlaneseq
  %v770 = vshrl.u32 %v769, 7
  %v771 = vsub.s32 0, %v770
  %v772 = vrot.slane %v767, %v771
  %v774 = vadd.f32 %v765, %v772
  %v775 = vadd.f32 %v766, %v772
  %v776 = vmax.f32 %v774, 0.0
  %v777 = vmax.f32 %v775, 0.0
  %v778 = vpack.c.bf16 %v777, %v776
  %v779 = vld [vmem:[%s11] sm:$0xf]
  %v780 = vld [vmem:[%s11 + $0x4] sm:$0xf]
  %v781 = vld [vmem:[%s11 + $0x8] sm:$0xf]
  %v782 = vld [vmem:[%s11 + $0xc] sm:$0xf]
  %v783 = vld [vmem:[%s11 + $0x10] sm:$0xf]
  %v784 = vld [vmem:[%s11 + $0x14] sm:$0xf]
  %v785 = vld [vmem:[%s11 + $0x18] sm:$0xf]
  %v786 = vld [vmem:[%s11 + $0x1c] sm:$0xf]
  %v787 = vld [vmem:[%s11 + $0x20] sm:$0xf]
  %v788 = vld [vmem:[%s11 + $0x24] sm:$0xf]
  %v789 = vld [vmem:[%s11 + $0x28] sm:$0xf]
  %v790 = vld [vmem:[%s11 + $0x2c] sm:$0xf]
  %v791 = vld [vmem:[%s11 + $0x30] sm:$0xf]
  %v792 = vld [vmem:[%s11 + $0x34] sm:$0xf]
  %v793 = vld [vmem:[%s11 + $0x38] sm:$0xf]
  %v794 = vld [vmem:[%s11 + $0x3c] sm:$0xf]
  %v811 = vunpack.c.l.b16 %v779
  %v812 = vunpack.c.l.b16 %v780
  %v813 = vunpack.c.l.b16 %v781
  %v814 = vunpack.c.l.b16 %v782
  %v815 = vunpack.c.l.b16 %v783
  %v816 = vunpack.c.l.b16 %v784
  %v817 = vunpack.c.l.b16 %v785
  %v818 = vunpack.c.l.b16 %v786
  %v819 = vunpack.c.l.b16 %v787
  %v820 = vunpack.c.l.b16 %v788
  %v821 = vunpack.c.l.b16 %v789
  %v822 = vunpack.c.l.b16 %v790
  %v823 = vunpack.c.l.b16 %v791
  %v824 = vunpack.c.l.b16 %v792
  %v825 = vunpack.c.l.b16 %v793
  %v826 = vunpack.c.l.b16 %v794
  %v827 = vpack.c.b16 %v812, %v811
  %v828 = vpack.c.b16 %v814, %v813
  %v829 = vpack.c.b16 %v816, %v815
  %v830 = vpack.c.b16 %v818, %v817
  %v831 = vpack.c.b16 %v820, %v819
  %v832 = vpack.c.b16 %v822, %v821
  %v833 = vpack.c.b16 %v824, %v823
  %v834 = vpack.c.b16 %v826, %v825
  %843 = vmatprep.subr.bf16.mxu0 0
  %844 = vmatpush1.bf16.msra.mxu0 %v827
  %845 = vmatprep.subr.bf16.mxu0 0
  %846 = vmatpush1.bf16.msra.mxu0 %v828
  %847 = vmatprep.subr.bf16.mxu0 0
  %848 = vmatpush1.bf16.msra.mxu0 %v829
  %849 = vmatprep.subr.bf16.mxu0 0
  %850 = vmatpush1.bf16.msra.mxu0 %v830
  %851 = vmatprep.subr.bf16.mxu0 0
  %852 = vmatpush1.bf16.msra.mxu0 %v831
  %853 = vmatprep.subr.bf16.mxu0 0
  %854 = vmatpush1.bf16.msra.mxu0 %v832
  %855 = vmatprep.subr.bf16.mxu0 0
  %856 = vmatpush1.bf16.msra.mxu0 %v833
  %857 = vmatprep.subr.bf16.mxu0 0
  %858 = vmatpush1.bf16.msra.mxu0 %v834
  %859 = vmatprep.subr.bf16.mxu0 0
  %860 = vmatpush1.bf16.msra.mxu0 0
  %861 = vmatprep.subr.bf16.mxu0 0
  %862 = vmatpush1.bf16.msra.mxu0 0
  %863 = vmatprep.subr.bf16.mxu0 0
  %864 = vmatpush1.bf16.msra.mxu0 0
  %865 = vmatprep.subr.bf16.mxu0 0
  %866 = vmatpush1.bf16.msra.mxu0 0
  %867 = vmatprep.subr.bf16.mxu0 0
  %868 = vmatpush1.bf16.msra.mxu0 0
  %869 = vmatprep.subr.bf16.mxu0 0
  %870 = vmatpush1.bf16.msra.mxu0 0
  %871 = vmatprep.subr.bf16.mxu0 0
  %872 = vmatpush1.bf16.msra.mxu0 0
  %873 = vmatprep.subr.bf16.mxu0 0
  %874 = vmatpush1.bf16.msra.mxu0 0
  %875 = vmatprep.mubr.bf16.mxu0 0
  %876 = vmatmul.mubr.bf16.gmra.mrb[0].mxu0 %v778
  %v877 = vpop.f32.mrb[0].mxu0
  %v878 = vadd.f32 0.0, %v877
  %v879 = vpop.f32.mrb[0].mxu0
  %v880 = vpop.f32.mrb[0].mxu0
  %v881 = vadd.f32 0.0, %v880
  %v882 = vpop.f32.mrb[0].mxu0
  %883 = vdwg.mxu0
  %v884 = vadd.f32 %v429, %v878
  %v885 = vadd.f32 %v430, %v881
  %v886 = vld [vmem:[%s13] sm:$0x1]
  %v888 = vlaneseq
  %v889 = vshrl.u32 %v888, 7
  %v890 = vsub.s32 0, %v889
  %v891 = vrot.slane %v886, %v890
  %v893 = vadd.f32 %v884, %v891
  %v894 = vadd.f32 %v885, %v891
  %v895 = vmax.f32 %v893, 0.0
  %v896 = vmax.f32 %v894, 0.0
  %v897 = vrot.slane %v895, 7
  %v898 = vrot.slane %v896, 7
  %v899 = vsel %vm404, %v897, %v898
  %v900 = vsel %vm404, %v898, %v897
  %v901 = vsel %vm149, 0.0, %v900
  %v902 = vsel %vm150, 0.0, %v899
  %v903 = vpack.c.bf16 %v902, %v901
  %v904 = vld [vmem:[%s15] sm:$0xf]
  %v905 = vld [vmem:[%s15 + $0x4] sm:$0xf]
  %v906 = vld [vmem:[%s15 + $0x8] sm:$0xf]
  %v907 = vld [vmem:[%s15 + $0xc] sm:$0xf]
  %v908 = vld [vmem:[%s15 + $0x10] sm:$0xf]
  %v909 = vld [vmem:[%s15 + $0x14] sm:$0xf]
  %v910 = vld [vmem:[%s15 + $0x18] sm:$0xf]
  %v911 = vld [vmem:[%s15 + $0x1c] sm:$0xf]
  %v912 = vld [vmem:[%s15 + $0x20] sm:$0xf]
  %v913 = vld [vmem:[%s15 + $0x24] sm:$0xf]
  %v914 = vld [vmem:[%s15 + $0x28] sm:$0xf]
  %v915 = vld [vmem:[%s15 + $0x2c] sm:$0xf]
  %v916 = vld [vmem:[%s15 + $0x30] sm:$0xf]
  %v917 = vld [vmem:[%s15 + $0x34] sm:$0xf]
  %v918 = vld [vmem:[%s15 + $0x38] sm:$0xf]
  %v919 = vld [vmem:[%s15 + $0x3c] sm:$0xf]
  %v920 = vpack.c.bf16 %v896, %v895
  %s921 = scalar_lea.vmem %s15, 64
  %v922 = vld [vmem:[%s921] sm:$0xf]
  %v923 = vld [vmem:[%s921 + $0x4] sm:$0xf]
  %v924 = vld [vmem:[%s921 + $0x8] sm:$0xf]
  %v925 = vld [vmem:[%s921 + $0xc] sm:$0xf]
  %v926 = vld [vmem:[%s921 + $0x10] sm:$0xf]
  %v927 = vld [vmem:[%s921 + $0x14] sm:$0xf]
  %v928 = vld [vmem:[%s921 + $0x18] sm:$0xf]
  %v929 = vld [vmem:[%s921 + $0x1c] sm:$0xf]
  %v930 = vld [vmem:[%s921 + $0x20] sm:$0xf]
  %v931 = vld [vmem:[%s921 + $0x24] sm:$0xf]
  %v932 = vld [vmem:[%s921 + $0x28] sm:$0xf]
  %v933 = vld [vmem:[%s921 + $0x2c] sm:$0xf]
  %v934 = vld [vmem:[%s921 + $0x30] sm:$0xf]
  %v935 = vld [vmem:[%s921 + $0x34] sm:$0xf]
  %v936 = vld [vmem:[%s921 + $0x38] sm:$0xf]
  %v937 = vld [vmem:[%s921 + $0x3c] sm:$0xf]
  %v954 = vunpack.c.l.b16 %v922
  %v955 = vunpack.c.l.b16 %v923
  %v956 = vunpack.c.l.b16 %v924
  %v957 = vunpack.c.l.b16 %v925
  %v958 = vunpack.c.l.b16 %v926
  %v959 = vunpack.c.l.b16 %v927
  %v960 = vunpack.c.l.b16 %v928
  %v961 = vunpack.c.l.b16 %v929
  %v962 = vunpack.c.l.b16 %v930
  %v963 = vunpack.c.l.b16 %v931
  %v964 = vunpack.c.l.b16 %v932
  %v965 = vunpack.c.l.b16 %v933
  %v966 = vunpack.c.l.b16 %v934
  %v967 = vunpack.c.l.b16 %v935
  %v968 = vunpack.c.l.b16 %v936
  %v969 = vunpack.c.l.b16 %v937
  %v970 = vpack.c.b16 %v955, %v954
  %v971 = vpack.c.b16 %v957, %v956
  %v972 = vpack.c.b16 %v959, %v958
  %v973 = vpack.c.b16 %v961, %v960
  %v974 = vpack.c.b16 %v963, %v962
  %v975 = vpack.c.b16 %v965, %v964
  %v976 = vpack.c.b16 %v967, %v966
  %v977 = vpack.c.b16 %v969, %v968
  %986 = vmatprep.subr.bf16.mxu0 0
  %987 = vmatpush1.bf16.msra.mxu0 %v970
  %988 = vmatprep.subr.bf16.mxu0 0
  %989 = vmatpush1.bf16.msra.mxu0 %v971
  %990 = vmatprep.subr.bf16.mxu0 0
  %991 = vmatpush1.bf16.msra.mxu0 %v972
  %992 = vmatprep.subr.bf16.mxu0 0
  %993 = vmatpush1.bf16.msra.mxu0 %v973
  %994 = vmatprep.subr.bf16.mxu0 0
  %995 = vmatpush1.bf16.msra.mxu0 %v974
  %996 = vmatprep.subr.bf16.mxu0 0
  %997 = vmatpush1.bf16.msra.mxu0 %v975
  %998 = vmatprep.subr.bf16.mxu0 0
  %999 = vmatpush1.bf16.msra.mxu0 %v976
  %1000 = vmatprep.subr.bf16.mxu0 0
  %1001 = vmatpush1.bf16.msra.mxu0 %v977
  %1002 = vmatprep.subr.bf16.mxu0 0
  %1003 = vmatpush1.bf16.msra.mxu0 0
  %1004 = vmatprep.subr.bf16.mxu0 0
  %1005 = vmatpush1.bf16.msra.mxu0 0
  %1006 = vmatprep.subr.bf16.mxu0 0
  %1007 = vmatpush1.bf16.msra.mxu0 0
  %1008 = vmatprep.subr.bf16.mxu0 0
  %1009 = vmatpush1.bf16.msra.mxu0 0
  %1010 = vmatprep.subr.bf16.mxu0 0
  %1011 = vmatpush1.bf16.msra.mxu0 0
  %1012 = vmatprep.subr.bf16.mxu0 0
  %1013 = vmatpush1.bf16.msra.mxu0 0
  %1014 = vmatprep.subr.bf16.mxu0 0
  %1015 = vmatpush1.bf16.msra.mxu0 0
  %1016 = vmatprep.subr.bf16.mxu0 0
  %1017 = vmatpush1.bf16.msra.mxu0 0
  %1018 = vmatprep.mubr.bf16.mxu0 0
  %1019 = vmatmul.mubr.bf16.gmra.mrb[0].mxu0 %v920
  %v1020 = vpop.f32.mrb[0].mxu0
  %v1021 = vadd.f32 0.0, %v1020
  %v1022 = vpop.f32.mrb[0].mxu0
  %v1023 = vpop.f32.mrb[0].mxu0
  %v1024 = vadd.f32 0.0, %v1023
  %v1025 = vpop.f32.mrb[0].mxu0
  %1026 = vdwg.mxu0
  %v1043 = vunpack.c.l.b16 %v904
  %v1044 = vunpack.c.l.b16 %v905
  %v1045 = vunpack.c.l.b16 %v906
  %v1046 = vunpack.c.l.b16 %v907
  %v1047 = vunpack.c.l.b16 %v908
  %v1048 = vunpack.c.l.b16 %v909
  %v1049 = vunpack.c.l.b16 %v910
  %v1050 = vunpack.c.l.b16 %v911
  %v1051 = vunpack.c.l.b16 %v912
  %v1052 = vunpack.c.l.b16 %v913
  %v1053 = vunpack.c.l.b16 %v914
  %v1054 = vunpack.c.l.b16 %v915
  %v1055 = vunpack.c.l.b16 %v916
  %v1056 = vunpack.c.l.b16 %v917
  %v1057 = vunpack.c.l.b16 %v918
  %v1058 = vunpack.c.l.b16 %v919
  %v1059 = vpack.c.b16 %v1044, %v1043
  %v1060 = vpack.c.b16 %v1046, %v1045
  %v1061 = vpack.c.b16 %v1048, %v1047
  %v1062 = vpack.c.b16 %v1050, %v1049
  %v1063 = vpack.c.b16 %v1052, %v1051
  %v1064 = vpack.c.b16 %v1054, %v1053
  %v1065 = vpack.c.b16 %v1056, %v1055
  %v1066 = vpack.c.b16 %v1058, %v1057
  %1075 = vmatprep.subr.bf16.mxu0 0
  %1076 = vmatpush1.bf16.msra.mxu0 %v1059
  %1077 = vmatprep.subr.bf16.mxu0 0
  %1078 = vmatpush1.bf16.msra.mxu0 %v1060
  %1079 = vmatprep.subr.bf16.mxu0 0
  %1080 = vmatpush1.bf16.msra.mxu0 %v1061
  %1081 = vmatprep.subr.bf16.mxu0 0
  %1082 = vmatpush1.bf16.msra.mxu0 %v1062
  %1083 = vmatprep.subr.bf16.mxu0 0
  %1084 = vmatpush1.bf16.msra.mxu0 %v1063
  %1085 = vmatprep.subr.bf16.mxu0 0
  %1086 = vmatpush1.bf16.msra.mxu0 %v1064
  %1087 = vmatprep.subr.bf16.mxu0 0
  %1088 = vmatpush1.bf16.msra.mxu0 %v1065
  %1089 = vmatprep.subr.bf16.mxu0 0
  %1090 = vmatpush1.bf16.msra.mxu0 %v1066
  %1091 = vmatprep.subr.bf16.mxu0 0
  %1092 = vmatpush1.bf16.msra.mxu0 0
  %1093 = vmatprep.subr.bf16.mxu0 0
  %1094 = vmatpush1.bf16.msra.mxu0 0
  %1095 = vmatprep.subr.bf16.mxu0 0
  %1096 = vmatpush1.bf16.msra.mxu0 0
  %1097 = vmatprep.subr.bf16.mxu0 0
  %1098 = vmatpush1.bf16.msra.mxu0 0
  %1099 = vmatprep.subr.bf16.mxu0 0
  %1100 = vmatpush1.bf16.msra.mxu0 0
  %1101 = vmatprep.subr.bf16.mxu0 0
  %1102 = vmatpush1.bf16.msra.mxu0 0
  %1103 = vmatprep.subr.bf16.mxu0 0
  %1104 = vmatpush1.bf16.msra.mxu0 0
  %1105 = vmatprep.subr.bf16.mxu0 0
  %1106 = vmatpush1.bf16.msra.mxu0 0
  %1107 = vmatprep.mubr.bf16.mxu0 0
  %1108 = vmatmul.mubr.bf16.gmra.mrb[0].mxu0 %v903
  %v1109 = vpop.f32.mrb[0].mxu0
  %v1110 = vadd.f32 %v1021, %v1109
  %v1111 = vpop.f32.mrb[0].mxu0
  %v1112 = vpop.f32.mrb[0].mxu0
  %v1113 = vadd.f32 %v1024, %v1112
  %v1114 = vpop.f32.mrb[0].mxu0
  %1115 = vdwg.mxu0
  %v1116 = vrot.slane %v895, 1
  %v1117 = vrot.slane %v896, 1
  %v1118 = vsel %vm413, %v1116, %v1117
  %v1119 = vsel %vm413, %v1117, %v1116
  %v1120 = vsel %vm151, 0.0, %v1118
  %v1121 = vsel %vm152, 0.0, %v1119
  %v1122 = vpack.c.bf16 %v1121, %v1120
  %s1123 = scalar_lea.vmem %s15, 128
  %v1124 = vld [vmem:[%s1123] sm:$0xf]
  %v1125 = vld [vmem:[%s1123 + $0x4] sm:$0xf]
  %v1126 = vld [vmem:[%s1123 + $0x8] sm:$0xf]
  %v1127 = vld [vmem:[%s1123 + $0xc] sm:$0xf]
  %v1128 = vld [vmem:[%s1123 + $0x10] sm:$0xf]
  %v1129 = vld [vmem:[%s1123 + $0x14] sm:$0xf]
  %v1130 = vld [vmem:[%s1123 + $0x18] sm:$0xf]
  %v1131 = vld [vmem:[%s1123 + $0x1c] sm:$0xf]
  %v1132 = vld [vmem:[%s1123 + $0x20] sm:$0xf]
  %v1133 = vld [vmem:[%s1123 + $0x24] sm:$0xf]
  %v1134 = vld [vmem:[%s1123 + $0x28] sm:$0xf]
  %v1135 = vld [vmem:[%s1123 + $0x2c] sm:$0xf]
  %v1136 = vld [vmem:[%s1123 + $0x30] sm:$0xf]
  %v1137 = vld [vmem:[%s1123 + $0x34] sm:$0xf]
  %v1138 = vld [vmem:[%s1123 + $0x38] sm:$0xf]
  %v1139 = vld [vmem:[%s1123 + $0x3c] sm:$0xf]
  %v1156 = vunpack.c.l.b16 %v1124
  %v1157 = vunpack.c.l.b16 %v1125
  %v1158 = vunpack.c.l.b16 %v1126
  %v1159 = vunpack.c.l.b16 %v1127
  %v1160 = vunpack.c.l.b16 %v1128
  %v1161 = vunpack.c.l.b16 %v1129
  %v1162 = vunpack.c.l.b16 %v1130
  %v1163 = vunpack.c.l.b16 %v1131
  %v1164 = vunpack.c.l.b16 %v1132
  %v1165 = vunpack.c.l.b16 %v1133
  %v1166 = vunpack.c.l.b16 %v1134
  %v1167 = vunpack.c.l.b16 %v1135
  %v1168 = vunpack.c.l.b16 %v1136
  %v1169 = vunpack.c.l.b16 %v1137
  %v1170 = vunpack.c.l.b16 %v1138
  %v1171 = vunpack.c.l.b16 %v1139
  %v1172 = vpack.c.b16 %v1157, %v1156
  %v1173 = vpack.c.b16 %v1159, %v1158
  %v1174 = vpack.c.b16 %v1161, %v1160
  %v1175 = vpack.c.b16 %v1163, %v1162
  %v1176 = vpack.c.b16 %v1165, %v1164
  %v1177 = vpack.c.b16 %v1167, %v1166
  %v1178 = vpack.c.b16 %v1169, %v1168
  %v1179 = vpack.c.b16 %v1171, %v1170
  %1188 = vmatprep.subr.bf16.mxu0 0
  %1189 = vmatpush1.bf16.msra.mxu0 %v1172
  %1190 = vmatprep.subr.bf16.mxu0 0
  %1191 = vmatpush1.bf16.msra.mxu0 %v1173
  %1192 = vmatprep.subr.bf16.mxu0 0
  %1193 = vmatpush1.bf16.msra.mxu0 %v1174
  %1194 = vmatprep.subr.bf16.mxu0 0
  %1195 = vmatpush1.bf16.msra.mxu0 %v1175
  %1196 = vmatprep.subr.bf16.mxu0 0
  %1197 = vmatpush1.bf16.msra.mxu0 %v1176
  %1198 = vmatprep.subr.bf16.mxu0 0
  %1199 = vmatpush1.bf16.msra.mxu0 %v1177
  %1200 = vmatprep.subr.bf16.mxu0 0
  %1201 = vmatpush1.bf16.msra.mxu0 %v1178
  %1202 = vmatprep.subr.bf16.mxu0 0
  %1203 = vmatpush1.bf16.msra.mxu0 %v1179
  %1204 = vmatprep.subr.bf16.mxu0 0
  %1205 = vmatpush1.bf16.msra.mxu0 0
  %1206 = vmatprep.subr.bf16.mxu0 0
  %1207 = vmatpush1.bf16.msra.mxu0 0
  %1208 = vmatprep.subr.bf16.mxu0 0
  %1209 = vmatpush1.bf16.msra.mxu0 0
  %1210 = vmatprep.subr.bf16.mxu0 0
  %1211 = vmatpush1.bf16.msra.mxu0 0
  %1212 = vmatprep.subr.bf16.mxu0 0
  %1213 = vmatpush1.bf16.msra.mxu0 0
  %1214 = vmatprep.subr.bf16.mxu0 0
  %1215 = vmatpush1.bf16.msra.mxu0 0
  %1216 = vmatprep.subr.bf16.mxu0 0
  %1217 = vmatpush1.bf16.msra.mxu0 0
  %1218 = vmatprep.subr.bf16.mxu0 0
  %1219 = vmatpush1.bf16.msra.mxu0 0
  %1220 = vmatprep.mubr.bf16.mxu0 0
  %1221 = vmatmul.mubr.bf16.gmra.mrb[0].mxu0 %v1122
  %v1222 = vpop.f32.mrb[0].mxu0
  %v1223 = vadd.f32 0.0, %v1222
  %v1224 = vpop.f32.mrb[0].mxu0
  %v1225 = vpop.f32.mrb[0].mxu0
  %v1226 = vadd.f32 0.0, %v1225
  %v1227 = vpop.f32.mrb[0].mxu0
  %1228 = vdwg.mxu0
  %v1229 = vadd.f32 %v1110, %v1223
  %v1230 = vadd.f32 %v1113, %v1226
  %v1231 = vld [vmem:[%s17] sm:$0x1]
  %v1233 = vlaneseq
  %v1234 = vshrl.u32 %v1233, 7
  %v1235 = vsub.s32 0, %v1234
  %v1236 = vrot.slane %v1231, %v1235
  %v1238 = vadd.f32 %v1229, %v1236
  %v1239 = vadd.f32 %v1230, %v1236
  %v1240 = vmax.f32 %v1238, 0.0
  %v1241 = vmax.f32 %v1239, 0.0
  %v1242 = vpack.c.bf16 %v1241, %v1240
  %v1243 = vld [vmem:[%s19] sm:$0xf]
  %v1244 = vld [vmem:[%s19 + $0x4] sm:$0xf]
  %v1245 = vld [vmem:[%s19 + $0x8] sm:$0xf]
  %v1246 = vld [vmem:[%s19 + $0xc] sm:$0xf]
  %v1247 = vld [vmem:[%s19 + $0x10] sm:$0xf]
  %v1248 = vld [vmem:[%s19 + $0x14] sm:$0xf]
  %v1249 = vld [vmem:[%s19 + $0x18] sm:$0xf]
  %v1250 = vld [vmem:[%s19 + $0x1c] sm:$0xf]
  %v1251 = vld [vmem:[%s19 + $0x20] sm:$0xf]
  %v1252 = vld [vmem:[%s19 + $0x24] sm:$0xf]
  %v1253 = vld [vmem:[%s19 + $0x28] sm:$0xf]
  %v1254 = vld [vmem:[%s19 + $0x2c] sm:$0xf]
  %v1255 = vld [vmem:[%s19 + $0x30] sm:$0xf]
  %v1256 = vld [vmem:[%s19 + $0x34] sm:$0xf]
  %v1257 = vld [vmem:[%s19 + $0x38] sm:$0xf]
  %v1258 = vld [vmem:[%s19 + $0x3c] sm:$0xf]
  %v1275 = vunpack.c.l.b16 %v1243
  %v1276 = vunpack.c.l.b16 %v1244
  %v1277 = vunpack.c.l.b16 %v1245
  %v1278 = vunpack.c.l.b16 %v1246
  %v1279 = vunpack.c.l.b16 %v1247
  %v1280 = vunpack.c.l.b16 %v1248
  %v1281 = vunpack.c.l.b16 %v1249
  %v1282 = vunpack.c.l.b16 %v1250
  %v1283 = vunpack.c.l.b16 %v1251
  %v1284 = vunpack.c.l.b16 %v1252
  %v1285 = vunpack.c.l.b16 %v1253
  %v1286 = vunpack.c.l.b16 %v1254
  %v1287 = vunpack.c.l.b16 %v1255
  %v1288 = vunpack.c.l.b16 %v1256
  %v1289 = vunpack.c.l.b16 %v1257
  %v1290 = vunpack.c.l.b16 %v1258
  %v1291 = vpack.c.b16 %v1276, %v1275
  %v1292 = vpack.c.b16 %v1278, %v1277
  %v1293 = vpack.c.b16 %v1280, %v1279
  %v1294 = vpack.c.b16 %v1282, %v1281
  %v1295 = vpack.c.b16 %v1284, %v1283
  %v1296 = vpack.c.b16 %v1286, %v1285
  %v1297 = vpack.c.b16 %v1288, %v1287
  %v1298 = vpack.c.b16 %v1290, %v1289
  %1307 = vmatprep.subr.bf16.mxu0 0
  %1308 = vmatpush1.bf16.msra.mxu0 %v1291
  %1309 = vmatprep.subr.bf16.mxu0 0
  %1310 = vmatpush1.bf16.msra.mxu0 %v1292
  %1311 = vmatprep.subr.bf16.mxu0 0
  %1312 = vmatpush1.bf16.msra.mxu0 %v1293
  %1313 = vmatprep.subr.bf16.mxu0 0
  %1314 = vmatpush1.bf16.msra.mxu0 %v1294
  %1315 = vmatprep.subr.bf16.mxu0 0
  %1316 = vmatpush1.bf16.msra.mxu0 %v1295
  %1317 = vmatprep.subr.bf16.mxu0 0
  %1318 = vmatpush1.bf16.msra.mxu0 %v1296
  %1319 = vmatprep.subr.bf16.mxu0 0
  %1320 = vmatpush1.bf16.msra.mxu0 %v1297
  %1321 = vmatprep.subr.bf16.mxu0 0
  %1322 = vmatpush1.bf16.msra.mxu0 %v1298
  %1323 = vmatprep.subr.bf16.mxu0 0
  %1324 = vmatpush1.bf16.msra.mxu0 0
  %1325 = vmatprep.subr.bf16.mxu0 0
  %1326 = vmatpush1.bf16.msra.mxu0 0
  %1327 = vmatprep.subr.bf16.mxu0 0
  %1328 = vmatpush1.bf16.msra.mxu0 0
  %1329 = vmatprep.subr.bf16.mxu0 0
  %1330 = vmatpush1.bf16.msra.mxu0 0
  %1331 = vmatprep.subr.bf16.mxu0 0
  %1332 = vmatpush1.bf16.msra.mxu0 0
  %1333 = vmatprep.subr.bf16.mxu0 0
  %1334 = vmatpush1.bf16.msra.mxu0 0
  %1335 = vmatprep.subr.bf16.mxu0 0
  %1336 = vmatpush1.bf16.msra.mxu0 0
  %1337 = vmatprep.subr.bf16.mxu0 0
  %1338 = vmatpush1.bf16.msra.mxu0 0
  %1339 = vmatprep.mubr.bf16.mxu0 0
  %1340 = vmatmul.mubr.bf16.gmra.mrb[0].mxu0 %v1242
  %v1341 = vpop.f32.mrb[0].mxu0
  %v1342 = vadd.f32 0.0, %v1341
  %v1343 = vpop.f32.mrb[0].mxu0
  %v1344 = vpop.f32.mrb[0].mxu0
  %v1345 = vadd.f32 0.0, %v1344
  %v1346 = vpop.f32.mrb[0].mxu0
  %1347 = vdwg.mxu0
  %v1348 = vadd.f32 %v893, %v1342
  %v1349 = vadd.f32 %v894, %v1345
  %v1350 = vld [vmem:[%s21] sm:$0x1]
  %v1352 = vlaneseq
  %v1353 = vshrl.u32 %v1352, 7
  %v1354 = vsub.s32 0, %v1353
  %v1355 = vrot.slane %v1350, %v1354
  %v1357 = vadd.f32 %v1348, %v1355
  %v1358 = vadd.f32 %v1349, %v1355
  %v1359 = vpack.c.bf16 %v1358, %v1357
  %v1360 = vld [vmem:[%s23] sm:$0xf]
  %v1361 = vld [vmem:[%s23 + $0x4] sm:$0xf]
  %v1362 = vld [vmem:[%s23 + $0x8] sm:$0xf]
  %v1363 = vld [vmem:[%s23 + $0xc] sm:$0xf]
  %v1364 = vld [vmem:[%s23 + $0x10] sm:$0xf]
  %v1365 = vld [vmem:[%s23 + $0x14] sm:$0xf]
  %v1366 = vld [vmem:[%s23 + $0x18] sm:$0xf]
  %v1367 = vld [vmem:[%s23 + $0x1c] sm:$0xf]
  %v1368 = vld [vmem:[%s23 + $0x20] sm:$0xf]
  %v1369 = vld [vmem:[%s23 + $0x24] sm:$0xf]
  %v1370 = vld [vmem:[%s23 + $0x28] sm:$0xf]
  %v1371 = vld [vmem:[%s23 + $0x2c] sm:$0xf]
  %v1372 = vld [vmem:[%s23 + $0x30] sm:$0xf]
  %v1373 = vld [vmem:[%s23 + $0x34] sm:$0xf]
  %v1374 = vld [vmem:[%s23 + $0x38] sm:$0xf]
  %v1375 = vld [vmem:[%s23 + $0x3c] sm:$0xf]
  %v1392 = vunpack.c.l.b16 %v1360
  %v1393 = vunpack.c.l.b16 %v1361
  %v1394 = vunpack.c.l.b16 %v1362
  %v1395 = vunpack.c.l.b16 %v1363
  %v1396 = vunpack.c.l.b16 %v1364
  %v1397 = vunpack.c.l.b16 %v1365
  %v1398 = vunpack.c.l.b16 %v1366
  %v1399 = vunpack.c.l.b16 %v1367
  %v1400 = vunpack.c.l.b16 %v1368
  %v1401 = vunpack.c.l.b16 %v1369
  %v1402 = vunpack.c.l.b16 %v1370
  %v1403 = vunpack.c.l.b16 %v1371
  %v1404 = vunpack.c.l.b16 %v1372
  %v1405 = vunpack.c.l.b16 %v1373
  %v1406 = vunpack.c.l.b16 %v1374
  %v1407 = vunpack.c.l.b16 %v1375
  %v1408 = vpack.c.b16 %v1393, %v1392
  %v1409 = vpack.c.b16 %v1395, %v1394
  %v1410 = vpack.c.b16 %v1397, %v1396
  %v1411 = vpack.c.b16 %v1399, %v1398
  %v1412 = vpack.c.b16 %v1401, %v1400
  %v1413 = vpack.c.b16 %v1403, %v1402
  %v1414 = vpack.c.b16 %v1405, %v1404
  %v1415 = vpack.c.b16 %v1407, %v1406
  %1424 = vmatprep.subr.bf16.mxu0 0
  %1425 = vmatpush1.bf16.xpose.msra.mxu0 %v1408
  %1426 = vmatprep.subr.bf16.mxu0 0
  %1427 = vmatpush1.bf16.xpose.msra.mxu0 %v1409
  %1428 = vmatprep.subr.bf16.mxu0 0
  %1429 = vmatpush1.bf16.xpose.msra.mxu0 %v1410
  %1430 = vmatprep.subr.bf16.mxu0 0
  %1431 = vmatpush1.bf16.xpose.msra.mxu0 %v1411
  %1432 = vmatprep.subr.bf16.mxu0 0
  %1433 = vmatpush1.bf16.xpose.msra.mxu0 %v1412
  %1434 = vmatprep.subr.bf16.mxu0 0
  %1435 = vmatpush1.bf16.xpose.msra.mxu0 %v1413
  %1436 = vmatprep.subr.bf16.mxu0 0
  %1437 = vmatpush1.bf16.xpose.msra.mxu0 %v1414
  %1438 = vmatprep.subr.bf16.mxu0 0
  %1439 = vmatpush1.bf16.xpose.msra.mxu0 %v1415
  %1440 = vmatprep.subr.bf16.mxu0 0
  %1441 = vmatpush1.bf16.xpose.msra.mxu0 0
  %1442 = vmatprep.subr.bf16.mxu0 0
  %1443 = vmatpush1.bf16.xpose.msra.mxu0 0
  %1444 = vmatprep.subr.bf16.mxu0 0
  %1445 = vmatpush1.bf16.xpose.msra.mxu0 0
  %1446 = vmatprep.subr.bf16.mxu0 0
  %1447 = vmatpush1.bf16.xpose.msra.mxu0 0
  %1448 = vmatprep.subr.bf16.mxu0 0
  %1449 = vmatpush1.bf16.xpose.msra.mxu0 0
  %1450 = vmatprep.subr.bf16.mxu0 0
  %1451 = vmatpush1.bf16.xpose.msra.mxu0 0
  %1452 = vmatprep.subr.bf16.mxu0 0
  %1453 = vmatpush1.bf16.xpose.msra.mxu0 0
  %1454 = vmatprep.subr.bf16.mxu0 0
  %1455 = vmatpush1.bf16.xpose.msra.mxu0 0
  %1456 = vmatprep.mubr.bf16.mxu0 0
  %1457 = vmatmul.mubr.bf16.gmra.mrb[0].mxu0 %v1359
  %v1458 = vpop.f32.mrb[0].mxu0
  %v1459 = vadd.f32 0.0, %v1458
  %v1460 = vpop.f32.mrb[0].mxu0
  %v1461 = vpop.f32.mrb[0].mxu0
  %v1462 = vadd.f32 0.0, %v1461
  %v1463 = vpop.f32.mrb[0].mxu0
  %1464 = vdwg.mxu0
  %v1465 = vld [vmem:[%s27] sm:$0x1]
  %v1466 = vmul.f32 %v1459, 2.0
  %v1467 = vmul.f32 %v1462, 2.0
  %v1469 = vlaneseq
  %v1470 = vshrl.u32 %v1469, 7
  %v1471 = vsub.s32 0, %v1470
  %v1472 = vrot.slane %v1465, %v1471
  %v1474 = vsub.f32 %v1472, %v1466
  %v1475 = vsub.f32 %v1472, %v1467
  %1476 = vmin.xlane.f32.xlu0 %v1474
  %v1477 = vpop.xlane.xlu0 %1476
  %1478 = vmin.xlane.f32.xlu0 %v1475
  %v1479 = vpop.xlane.xlu0 %1478
  %v1480 = vlaneseq
  %v1481 = vand.u32 %v1480, 127
  %vm1482 = vcmp.le.f32.partialorder %v1474, %v1477
  %vm1483 = vcmp.le.f32.partialorder %v1475, %v1479
  %v1484 = vsel %vm1482, %v1481, 128
  %v1485 = vsel %vm1483, %v1481, 128
  %v1486 = vand.u32 %v1484, 65535
  %v1487 = vshra.s32 %v1484, 16
  %v1488 = vcvt.s32.f32 %v1486
  %v1489 = vcvt.s32.f32 %v1487
  %1490 = vmin.xlane.f32.xlu0 %v1489
  %v1491 = vpop.xlane.xlu0 %1490
  %vm1492 = vcmp.eq.f32.partialorder %v1489, %v1491
  %v1493 = vsel %vm1492, %v1488, inf
  %1494 = vmin.xlane.f32.xlu0 %v1493
  %v1495 = vpop.xlane.xlu0 %1494
  %v1496 = vcvt.f32.s32 %v1495
  %v1497 = vcvt.f32.s32 %v1491
  %v1498 = vshll.u32 %v1497, 16
  %v1499 = vadd.s32 %v1498, %v1496
  %v1500 = vand.u32 %v1485, 65535
  %v1501 = vshra.s32 %v1485, 16
  %v1502 = vcvt.s32.f32 %v1500
  %v1503 = vcvt.s32.f32 %v1501
  %1504 = vmin.xlane.f32.xlu0 %v1503
  %v1505 = vpop.xlane.xlu0 %1504
  %vm1506 = vcmp.eq.f32.partialorder %v1503, %v1505
  %v1507 = vsel %vm1506, %v1502, inf
  %1508 = vmin.xlane.f32.xlu0 %v1507
  %v1509 = vpop.xlane.xlu0 %1508
  %v1510 = vcvt.f32.s32 %v1509
  %v1511 = vcvt.f32.s32 %v1505
  %v1512 = vshll.u32 %v1511, 16
  %v1513 = vadd.s32 %v1512, %v1510
  %vm1514 = vcmp.eq.s32.totalorder %v1481, %v1499
  %vm1515 = vcmp.eq.s32.totalorder %v1481, %v1513
  %v1516 = vsel %vm1514, 1, 0
  %v1517 = vsel %vm1515, 1, 0
  %v1518 = vcvt.s32.f32 %v1516
  %v1519 = vcvt.s32.f32 %v1517
  %v1520 = vld [vmem:[%s25] sm:$0xff]
  %v1521 = vld [vmem:[%s25 + $0x8] sm:$0xff]
  %v1522 = vld [vmem:[%s25 + $0x10] sm:$0xff]
  %v1523 = vld [vmem:[%s25 + $0x18] sm:$0xff]
  %v1524 = vld [vmem:[%s25 + $0x20] sm:$0xff]
  %v1525 = vld [vmem:[%s25 + $0x28] sm:$0xff]
  %v1526 = vld [vmem:[%s25 + $0x30] sm:$0xff]
  %v1527 = vld [vmem:[%s25 + $0x38] sm:$0xff]
  %v1528 = vld [vmem:[%s25 + $0x40] sm:$0xff]
  %v1529 = vld [vmem:[%s25 + $0x48] sm:$0xff]
  %v1530 = vld [vmem:[%s25 + $0x50] sm:$0xff]
  %v1531 = vld [vmem:[%s25 + $0x58] sm:$0xff]
  %v1532 = vld [vmem:[%s25 + $0x60] sm:$0xff]
  %v1533 = vld [vmem:[%s25 + $0x68] sm:$0xff]
  %v1534 = vld [vmem:[%s25 + $0x70] sm:$0xff]
  %v1535 = vld [vmem:[%s25 + $0x78] sm:$0xff]
  %1536 = vmatprep.subr.mxu0 0.0
  %1537 = vmatpush1.msra.mxu0 %v1520
  %1538 = vmatprep.subr.mxu0 0.0
  %1539 = vmatpush1.msra.mxu0 %v1521
  %1540 = vmatprep.subr.mxu0 0.0
  %1541 = vmatpush1.msra.mxu0 %v1522
  %1542 = vmatprep.subr.mxu0 0.0
  %1543 = vmatpush1.msra.mxu0 %v1523
  %1544 = vmatprep.subr.mxu0 0.0
  %1545 = vmatpush1.msra.mxu0 %v1524
  %1546 = vmatprep.subr.mxu0 0.0
  %1547 = vmatpush1.msra.mxu0 %v1525
  %1548 = vmatprep.subr.mxu0 0.0
  %1549 = vmatpush1.msra.mxu0 %v1526
  %1550 = vmatprep.subr.mxu0 0.0
  %1551 = vmatpush1.msra.mxu0 %v1527
  %1552 = vmatprep.subr.mxu0 0.0
  %1553 = vmatpush1.msra.mxu0 %v1528
  %1554 = vmatprep.subr.mxu0 0.0
  %1555 = vmatpush1.msra.mxu0 %v1529
  %1556 = vmatprep.subr.mxu0 0.0
  %1557 = vmatpush1.msra.mxu0 %v1530
  %1558 = vmatprep.subr.mxu0 0.0
  %1559 = vmatpush1.msra.mxu0 %v1531
  %1560 = vmatprep.subr.mxu0 0.0
  %1561 = vmatpush1.msra.mxu0 %v1532
  %1562 = vmatprep.subr.mxu0 0.0
  %1563 = vmatpush1.msra.mxu0 %v1533
  %1564 = vmatprep.subr.mxu0 0.0
  %1565 = vmatpush1.msra.mxu0 %v1534
  %1566 = vmatprep.subr.mxu0 0.0
  %1567 = vmatpush1.msra.mxu0 %v1535
  %1568 = vmatprep.subr.mxu0 0.0
  %1569 = vmatpush1.msra.mxu0 0.0
  %1570 = vmatprep.subr.mxu0 0.0
  %1571 = vmatpush1.msra.mxu0 0.0
  %1572 = vmatprep.subr.mxu0 0.0
  %1573 = vmatpush1.msra.mxu0 0.0
  %1574 = vmatprep.subr.mxu0 0.0
  %1575 = vmatpush1.msra.mxu0 0.0
  %1576 = vmatprep.subr.mxu0 0.0
  %1577 = vmatpush1.msra.mxu0 0.0
  %1578 = vmatprep.subr.mxu0 0.0
  %1579 = vmatpush1.msra.mxu0 0.0
  %1580 = vmatprep.subr.mxu0 0.0
  %1581 = vmatpush1.msra.mxu0 0.0
  %1582 = vmatprep.subr.mxu0 0.0
  %1583 = vmatpush1.msra.mxu0 0.0
  %1584 = vmatprep.subr.mxu0 0.0
  %1585 = vmatpush1.msra.mxu0 0.0
  %1586 = vmatprep.subr.mxu0 0.0
  %1587 = vmatpush1.msra.mxu0 0.0
  %1588 = vmatprep.subr.mxu0 0.0
  %1589 = vmatpush1.msra.mxu0 0.0
  %1590 = vmatprep.subr.mxu0 0.0
  %1591 = vmatpush1.msra.mxu0 0.0
  %1592 = vmatprep.subr.mxu0 0.0
  %1593 = vmatpush1.msra.mxu0 0.0
  %1594 = vmatprep.subr.mxu0 0.0
  %1595 = vmatpush1.msra.mxu0 0.0
  %1596 = vmatprep.subr.mxu0 0.0
  %1597 = vmatpush1.msra.mxu0 0.0
  %1598 = vmatprep.subr.mxu0 0.0
  %1599 = vmatpush1.msra.mxu0 0.0
  %1600 = vmatprep.mubr.f32.mxu0 0.0
  %1601 = vmatmul.mubr.f32.gmra.mrb[0].mxu0 %v1518
  %v1602 = vpop.f32.mrb[0].mxu0
  %v1603 = vadd.f32 0.0, %v1602
  %v1604 = vpop.f32.mrb[0].mxu0
  %1605 = vmatprep.mubr.f32.mxu0 0.0
  %1606 = vmatmul.mubr.f32.gmra.mrb[0].mxu0 %v1519
  %v1607 = vpop.f32.mrb[0].mxu0
  %v1608 = vadd.f32 0.0, %v1607
  %v1609 = vpop.f32.mrb[0].mxu0
  %1610 = vdwg.mxu0
  %v1611 = vsub.f32 %v1603, %v1357
  %v1612 = vsub.f32 %v1608, %v1358
  %v1613 = vmul.f32 %v1611, %v1611
  %v1614 = vmul.f32 %v1612, %v1612
  %v1615 = vadd.f32 %v1613, %v1614
  %v1616 = vrot.slane %v1615, 4
  %v1617 = vadd.f32 %v1615, %v1616
  %v1618 = vrot.slane %v1617, 2
  %v1619 = vadd.f32 %v1617, %v1618
  %v1620 = vrot.slane %v1619, 1
  %v1621 = vadd.f32 %v1619, %v1620
  %vm1622 = vcmp.eq.s32.totalorder %v123, 0
  %v1623 = vsel %vm1622, %v1621, 0.0
  %1624 = vst [vmem:[%s59] sm:$0xff] %v1623
  %v1625 = vpack.c.bf16 %v1608, %v1603
  %v1626 = vld [vmem:[%s29] sm:$0xf]
  %v1627 = vld [vmem:[%s29 + $0x4] sm:$0xf]
  %v1628 = vld [vmem:[%s29 + $0x8] sm:$0xf]
  %v1629 = vld [vmem:[%s29 + $0xc] sm:$0xf]
  %v1630 = vld [vmem:[%s29 + $0x10] sm:$0xf]
  %v1631 = vld [vmem:[%s29 + $0x14] sm:$0xf]
  %v1632 = vld [vmem:[%s29 + $0x18] sm:$0xf]
  %v1633 = vld [vmem:[%s29 + $0x1c] sm:$0xf]
  %v1634 = vld [vmem:[%s29 + $0x20] sm:$0xf]
  %v1635 = vld [vmem:[%s29 + $0x24] sm:$0xf]
  %v1636 = vld [vmem:[%s29 + $0x28] sm:$0xf]
  %v1637 = vld [vmem:[%s29 + $0x2c] sm:$0xf]
  %v1638 = vld [vmem:[%s29 + $0x30] sm:$0xf]
  %v1639 = vld [vmem:[%s29 + $0x34] sm:$0xf]
  %v1640 = vld [vmem:[%s29 + $0x38] sm:$0xf]
  %v1641 = vld [vmem:[%s29 + $0x3c] sm:$0xf]
  %v1642 = vld [vmem:[%s31] sm:$0x1]
  %v1644 = vlaneseq
  %v1645 = vshrl.u32 %v1644, 7
  %v1646 = vsub.s32 0, %v1645
  %v1647 = vrot.slane %v1642, %v1646
  %v1665 = vunpack.c.l.b16 %v1626
  %v1666 = vunpack.c.l.b16 %v1627
  %v1667 = vunpack.c.l.b16 %v1628
  %v1668 = vunpack.c.l.b16 %v1629
  %v1669 = vunpack.c.l.b16 %v1630
  %v1670 = vunpack.c.l.b16 %v1631
  %v1671 = vunpack.c.l.b16 %v1632
  %v1672 = vunpack.c.l.b16 %v1633
  %v1673 = vunpack.c.l.b16 %v1634
  %v1674 = vunpack.c.l.b16 %v1635
  %v1675 = vunpack.c.l.b16 %v1636
  %v1676 = vunpack.c.l.b16 %v1637
  %v1677 = vunpack.c.l.b16 %v1638
  %v1678 = vunpack.c.l.b16 %v1639
  %v1679 = vunpack.c.l.b16 %v1640
  %v1680 = vunpack.c.l.b16 %v1641
  %v1681 = vpack.c.b16 %v1666, %v1665
  %v1682 = vpack.c.b16 %v1668, %v1667
  %v1683 = vpack.c.b16 %v1670, %v1669
  %v1684 = vpack.c.b16 %v1672, %v1671
  %v1685 = vpack.c.b16 %v1674, %v1673
  %v1686 = vpack.c.b16 %v1676, %v1675
  %v1687 = vpack.c.b16 %v1678, %v1677
  %v1688 = vpack.c.b16 %v1680, %v1679
  %1697 = vmatprep.subr.bf16.mxu0 0
  %1698 = vmatpush1.bf16.msra.mxu0 %v1681
  %1699 = vmatprep.subr.bf16.mxu0 0
  %1700 = vmatpush1.bf16.msra.mxu0 %v1682
  %1701 = vmatprep.subr.bf16.mxu0 0
  %1702 = vmatpush1.bf16.msra.mxu0 %v1683
  %1703 = vmatprep.subr.bf16.mxu0 0
  %1704 = vmatpush1.bf16.msra.mxu0 %v1684
  %1705 = vmatprep.subr.bf16.mxu0 0
  %1706 = vmatpush1.bf16.msra.mxu0 %v1685
  %1707 = vmatprep.subr.bf16.mxu0 0
  %1708 = vmatpush1.bf16.msra.mxu0 %v1686
  %1709 = vmatprep.subr.bf16.mxu0 0
  %1710 = vmatpush1.bf16.msra.mxu0 %v1687
  %1711 = vmatprep.subr.bf16.mxu0 0
  %1712 = vmatpush1.bf16.msra.mxu0 %v1688
  %1713 = vmatprep.subr.bf16.mxu0 0
  %1714 = vmatpush1.bf16.msra.mxu0 0
  %1715 = vmatprep.subr.bf16.mxu0 0
  %1716 = vmatpush1.bf16.msra.mxu0 0
  %1717 = vmatprep.subr.bf16.mxu0 0
  %1718 = vmatpush1.bf16.msra.mxu0 0
  %1719 = vmatprep.subr.bf16.mxu0 0
  %1720 = vmatpush1.bf16.msra.mxu0 0
  %1721 = vmatprep.subr.bf16.mxu0 0
  %1722 = vmatpush1.bf16.msra.mxu0 0
  %1723 = vmatprep.subr.bf16.mxu0 0
  %1724 = vmatpush1.bf16.msra.mxu0 0
  %1725 = vmatprep.subr.bf16.mxu0 0
  %1726 = vmatpush1.bf16.msra.mxu0 0
  %1727 = vmatprep.subr.bf16.mxu0 0
  %1728 = vmatpush1.bf16.msra.mxu0 0
  %1729 = vmatprep.mubr.bf16.mxu0 0
  %1730 = vmatmul.mubr.bf16.gmra.mrb[0].mxu0 %v1625
  %v1731 = vpop.f32.mrb[0].mxu0
  %v1732 = vadd.f32 %v1647, %v1731
  %v1733 = vpop.f32.mrb[0].mxu0
  %v1734 = vpop.f32.mrb[0].mxu0
  %v1735 = vadd.f32 %v1647, %v1734
  %v1736 = vpop.f32.mrb[0].mxu0
  %1737 = vdwg.mxu0
  %v1738 = vrot.slane %v1732, 7
  %v1739 = vrot.slane %v1735, 7
  %v1740 = vsel %vm404, %v1738, %v1739
  %v1741 = vsel %vm404, %v1739, %v1738
  %v1742 = vsel %vm149, 0.0, %v1741
  %v1743 = vsel %vm150, 0.0, %v1740
  %v1744 = vpack.c.bf16 %v1743, %v1742
  %v1745 = vld [vmem:[%s33] sm:$0xf]
  %v1746 = vld [vmem:[%s33 + $0x4] sm:$0xf]
  %v1747 = vld [vmem:[%s33 + $0x8] sm:$0xf]
  %v1748 = vld [vmem:[%s33 + $0xc] sm:$0xf]
  %v1749 = vld [vmem:[%s33 + $0x10] sm:$0xf]
  %v1750 = vld [vmem:[%s33 + $0x14] sm:$0xf]
  %v1751 = vld [vmem:[%s33 + $0x18] sm:$0xf]
  %v1752 = vld [vmem:[%s33 + $0x1c] sm:$0xf]
  %v1753 = vld [vmem:[%s33 + $0x20] sm:$0xf]
  %v1754 = vld [vmem:[%s33 + $0x24] sm:$0xf]
  %v1755 = vld [vmem:[%s33 + $0x28] sm:$0xf]
  %v1756 = vld [vmem:[%s33 + $0x2c] sm:$0xf]
  %v1757 = vld [vmem:[%s33 + $0x30] sm:$0xf]
  %v1758 = vld [vmem:[%s33 + $0x34] sm:$0xf]
  %v1759 = vld [vmem:[%s33 + $0x38] sm:$0xf]
  %v1760 = vld [vmem:[%s33 + $0x3c] sm:$0xf]
  %v1761 = vpack.c.bf16 %v1735, %v1732
  %s1762 = scalar_lea.vmem %s33, 64
  %v1763 = vld [vmem:[%s1762] sm:$0xf]
  %v1764 = vld [vmem:[%s1762 + $0x4] sm:$0xf]
  %v1765 = vld [vmem:[%s1762 + $0x8] sm:$0xf]
  %v1766 = vld [vmem:[%s1762 + $0xc] sm:$0xf]
  %v1767 = vld [vmem:[%s1762 + $0x10] sm:$0xf]
  %v1768 = vld [vmem:[%s1762 + $0x14] sm:$0xf]
  %v1769 = vld [vmem:[%s1762 + $0x18] sm:$0xf]
  %v1770 = vld [vmem:[%s1762 + $0x1c] sm:$0xf]
  %v1771 = vld [vmem:[%s1762 + $0x20] sm:$0xf]
  %v1772 = vld [vmem:[%s1762 + $0x24] sm:$0xf]
  %v1773 = vld [vmem:[%s1762 + $0x28] sm:$0xf]
  %v1774 = vld [vmem:[%s1762 + $0x2c] sm:$0xf]
  %v1775 = vld [vmem:[%s1762 + $0x30] sm:$0xf]
  %v1776 = vld [vmem:[%s1762 + $0x34] sm:$0xf]
  %v1777 = vld [vmem:[%s1762 + $0x38] sm:$0xf]
  %v1778 = vld [vmem:[%s1762 + $0x3c] sm:$0xf]
  %v1795 = vunpack.c.l.b16 %v1763
  %v1796 = vunpack.c.l.b16 %v1764
  %v1797 = vunpack.c.l.b16 %v1765
  %v1798 = vunpack.c.l.b16 %v1766
  %v1799 = vunpack.c.l.b16 %v1767
  %v1800 = vunpack.c.l.b16 %v1768
  %v1801 = vunpack.c.l.b16 %v1769
  %v1802 = vunpack.c.l.b16 %v1770
  %v1803 = vunpack.c.l.b16 %v1771
  %v1804 = vunpack.c.l.b16 %v1772
  %v1805 = vunpack.c.l.b16 %v1773
  %v1806 = vunpack.c.l.b16 %v1774
  %v1807 = vunpack.c.l.b16 %v1775
  %v1808 = vunpack.c.l.b16 %v1776
  %v1809 = vunpack.c.l.b16 %v1777
  %v1810 = vunpack.c.l.b16 %v1778
  %v1811 = vpack.c.b16 %v1796, %v1795
  %v1812 = vpack.c.b16 %v1798, %v1797
  %v1813 = vpack.c.b16 %v1800, %v1799
  %v1814 = vpack.c.b16 %v1802, %v1801
  %v1815 = vpack.c.b16 %v1804, %v1803
  %v1816 = vpack.c.b16 %v1806, %v1805
  %v1817 = vpack.c.b16 %v1808, %v1807
  %v1818 = vpack.c.b16 %v1810, %v1809
  %1827 = vmatprep.subr.bf16.mxu0 0
  %1828 = vmatpush1.bf16.msra.mxu0 %v1811
  %1829 = vmatprep.subr.bf16.mxu0 0
  %1830 = vmatpush1.bf16.msra.mxu0 %v1812
  %1831 = vmatprep.subr.bf16.mxu0 0
  %1832 = vmatpush1.bf16.msra.mxu0 %v1813
  %1833 = vmatprep.subr.bf16.mxu0 0
  %1834 = vmatpush1.bf16.msra.mxu0 %v1814
  %1835 = vmatprep.subr.bf16.mxu0 0
  %1836 = vmatpush1.bf16.msra.mxu0 %v1815
  %1837 = vmatprep.subr.bf16.mxu0 0
  %1838 = vmatpush1.bf16.msra.mxu0 %v1816
  %1839 = vmatprep.subr.bf16.mxu0 0
  %1840 = vmatpush1.bf16.msra.mxu0 %v1817
  %1841 = vmatprep.subr.bf16.mxu0 0
  %1842 = vmatpush1.bf16.msra.mxu0 %v1818
  %1843 = vmatprep.subr.bf16.mxu0 0
  %1844 = vmatpush1.bf16.msra.mxu0 0
  %1845 = vmatprep.subr.bf16.mxu0 0
  %1846 = vmatpush1.bf16.msra.mxu0 0
  %1847 = vmatprep.subr.bf16.mxu0 0
  %1848 = vmatpush1.bf16.msra.mxu0 0
  %1849 = vmatprep.subr.bf16.mxu0 0
  %1850 = vmatpush1.bf16.msra.mxu0 0
  %1851 = vmatprep.subr.bf16.mxu0 0
  %1852 = vmatpush1.bf16.msra.mxu0 0
  %1853 = vmatprep.subr.bf16.mxu0 0
  %1854 = vmatpush1.bf16.msra.mxu0 0
  %1855 = vmatprep.subr.bf16.mxu0 0
  %1856 = vmatpush1.bf16.msra.mxu0 0
  %1857 = vmatprep.subr.bf16.mxu0 0
  %1858 = vmatpush1.bf16.msra.mxu0 0
  %1859 = vmatprep.mubr.bf16.mxu0 0
  %1860 = vmatmul.mubr.bf16.gmra.mrb[0].mxu0 %v1761
  %v1861 = vpop.f32.mrb[0].mxu0
  %v1862 = vadd.f32 0.0, %v1861
  %v1863 = vpop.f32.mrb[0].mxu0
  %v1864 = vpop.f32.mrb[0].mxu0
  %v1865 = vadd.f32 0.0, %v1864
  %v1866 = vpop.f32.mrb[0].mxu0
  %1867 = vdwg.mxu0
  %v1884 = vunpack.c.l.b16 %v1745
  %v1885 = vunpack.c.l.b16 %v1746
  %v1886 = vunpack.c.l.b16 %v1747
  %v1887 = vunpack.c.l.b16 %v1748
  %v1888 = vunpack.c.l.b16 %v1749
  %v1889 = vunpack.c.l.b16 %v1750
  %v1890 = vunpack.c.l.b16 %v1751
  %v1891 = vunpack.c.l.b16 %v1752
  %v1892 = vunpack.c.l.b16 %v1753
  %v1893 = vunpack.c.l.b16 %v1754
  %v1894 = vunpack.c.l.b16 %v1755
  %v1895 = vunpack.c.l.b16 %v1756
  %v1896 = vunpack.c.l.b16 %v1757
  %v1897 = vunpack.c.l.b16 %v1758
  %v1898 = vunpack.c.l.b16 %v1759
  %v1899 = vunpack.c.l.b16 %v1760
  %v1900 = vpack.c.b16 %v1885, %v1884
  %v1901 = vpack.c.b16 %v1887, %v1886
  %v1902 = vpack.c.b16 %v1889, %v1888
  %v1903 = vpack.c.b16 %v1891, %v1890
  %v1904 = vpack.c.b16 %v1893, %v1892
  %v1905 = vpack.c.b16 %v1895, %v1894
  %v1906 = vpack.c.b16 %v1897, %v1896
  %v1907 = vpack.c.b16 %v1899, %v1898
  %1916 = vmatprep.subr.bf16.mxu0 0
  %1917 = vmatpush1.bf16.msra.mxu0 %v1900
  %1918 = vmatprep.subr.bf16.mxu0 0
  %1919 = vmatpush1.bf16.msra.mxu0 %v1901
  %1920 = vmatprep.subr.bf16.mxu0 0
  %1921 = vmatpush1.bf16.msra.mxu0 %v1902
  %1922 = vmatprep.subr.bf16.mxu0 0
  %1923 = vmatpush1.bf16.msra.mxu0 %v1903
  %1924 = vmatprep.subr.bf16.mxu0 0
  %1925 = vmatpush1.bf16.msra.mxu0 %v1904
  %1926 = vmatprep.subr.bf16.mxu0 0
  %1927 = vmatpush1.bf16.msra.mxu0 %v1905
  %1928 = vmatprep.subr.bf16.mxu0 0
  %1929 = vmatpush1.bf16.msra.mxu0 %v1906
  %1930 = vmatprep.subr.bf16.mxu0 0
  %1931 = vmatpush1.bf16.msra.mxu0 %v1907
  %1932 = vmatprep.subr.bf16.mxu0 0
  %1933 = vmatpush1.bf16.msra.mxu0 0
  %1934 = vmatprep.subr.bf16.mxu0 0
  %1935 = vmatpush1.bf16.msra.mxu0 0
  %1936 = vmatprep.subr.bf16.mxu0 0
  %1937 = vmatpush1.bf16.msra.mxu0 0
  %1938 = vmatprep.subr.bf16.mxu0 0
  %1939 = vmatpush1.bf16.msra.mxu0 0
  %1940 = vmatprep.subr.bf16.mxu0 0
  %1941 = vmatpush1.bf16.msra.mxu0 0
  %1942 = vmatprep.subr.bf16.mxu0 0
  %1943 = vmatpush1.bf16.msra.mxu0 0
  %1944 = vmatprep.subr.bf16.mxu0 0
  %1945 = vmatpush1.bf16.msra.mxu0 0
  %1946 = vmatprep.subr.bf16.mxu0 0
  %1947 = vmatpush1.bf16.msra.mxu0 0
  %1948 = vmatprep.mubr.bf16.mxu0 0
  %1949 = vmatmul.mubr.bf16.gmra.mrb[0].mxu0 %v1744
  %v1950 = vpop.f32.mrb[0].mxu0
  %v1951 = vadd.f32 %v1862, %v1950
  %v1952 = vpop.f32.mrb[0].mxu0
  %v1953 = vpop.f32.mrb[0].mxu0
  %v1954 = vadd.f32 %v1865, %v1953
  %v1955 = vpop.f32.mrb[0].mxu0
  %1956 = vdwg.mxu0
  %v1957 = vrot.slane %v1732, 1
  %v1958 = vrot.slane %v1735, 1
  %v1959 = vsel %vm413, %v1957, %v1958
  %v1960 = vsel %vm413, %v1958, %v1957
  %v1961 = vsel %vm151, 0.0, %v1959
  %v1962 = vsel %vm152, 0.0, %v1960
  %v1963 = vpack.c.bf16 %v1962, %v1961
  %s1964 = scalar_lea.vmem %s33, 128
  %v1965 = vld [vmem:[%s1964] sm:$0xf]
  %v1966 = vld [vmem:[%s1964 + $0x4] sm:$0xf]
  %v1967 = vld [vmem:[%s1964 + $0x8] sm:$0xf]
  %v1968 = vld [vmem:[%s1964 + $0xc] sm:$0xf]
  %v1969 = vld [vmem:[%s1964 + $0x10] sm:$0xf]
  %v1970 = vld [vmem:[%s1964 + $0x14] sm:$0xf]
  %v1971 = vld [vmem:[%s1964 + $0x18] sm:$0xf]
  %v1972 = vld [vmem:[%s1964 + $0x1c] sm:$0xf]
  %v1973 = vld [vmem:[%s1964 + $0x20] sm:$0xf]
  %v1974 = vld [vmem:[%s1964 + $0x24] sm:$0xf]
  %v1975 = vld [vmem:[%s1964 + $0x28] sm:$0xf]
  %v1976 = vld [vmem:[%s1964 + $0x2c] sm:$0xf]
  %v1977 = vld [vmem:[%s1964 + $0x30] sm:$0xf]
  %v1978 = vld [vmem:[%s1964 + $0x34] sm:$0xf]
  %v1979 = vld [vmem:[%s1964 + $0x38] sm:$0xf]
  %v1980 = vld [vmem:[%s1964 + $0x3c] sm:$0xf]
  %v1997 = vunpack.c.l.b16 %v1965
  %v1998 = vunpack.c.l.b16 %v1966
  %v1999 = vunpack.c.l.b16 %v1967
  %v2000 = vunpack.c.l.b16 %v1968
  %v2001 = vunpack.c.l.b16 %v1969
  %v2002 = vunpack.c.l.b16 %v1970
  %v2003 = vunpack.c.l.b16 %v1971
  %v2004 = vunpack.c.l.b16 %v1972
  %v2005 = vunpack.c.l.b16 %v1973
  %v2006 = vunpack.c.l.b16 %v1974
  %v2007 = vunpack.c.l.b16 %v1975
  %v2008 = vunpack.c.l.b16 %v1976
  %v2009 = vunpack.c.l.b16 %v1977
  %v2010 = vunpack.c.l.b16 %v1978
  %v2011 = vunpack.c.l.b16 %v1979
  %v2012 = vunpack.c.l.b16 %v1980
  %v2013 = vpack.c.b16 %v1998, %v1997
  %v2014 = vpack.c.b16 %v2000, %v1999
  %v2015 = vpack.c.b16 %v2002, %v2001
  %v2016 = vpack.c.b16 %v2004, %v2003
  %v2017 = vpack.c.b16 %v2006, %v2005
  %v2018 = vpack.c.b16 %v2008, %v2007
  %v2019 = vpack.c.b16 %v2010, %v2009
  %v2020 = vpack.c.b16 %v2012, %v2011
  %2029 = vmatprep.subr.bf16.mxu0 0
  %2030 = vmatpush1.bf16.msra.mxu0 %v2013
  %2031 = vmatprep.subr.bf16.mxu0 0
  %2032 = vmatpush1.bf16.msra.mxu0 %v2014
  %2033 = vmatprep.subr.bf16.mxu0 0
  %2034 = vmatpush1.bf16.msra.mxu0 %v2015
  %2035 = vmatprep.subr.bf16.mxu0 0
  %2036 = vmatpush1.bf16.msra.mxu0 %v2016
  %2037 = vmatprep.subr.bf16.mxu0 0
  %2038 = vmatpush1.bf16.msra.mxu0 %v2017
  %2039 = vmatprep.subr.bf16.mxu0 0
  %2040 = vmatpush1.bf16.msra.mxu0 %v2018
  %2041 = vmatprep.subr.bf16.mxu0 0
  %2042 = vmatpush1.bf16.msra.mxu0 %v2019
  %2043 = vmatprep.subr.bf16.mxu0 0
  %2044 = vmatpush1.bf16.msra.mxu0 %v2020
  %2045 = vmatprep.subr.bf16.mxu0 0
  %2046 = vmatpush1.bf16.msra.mxu0 0
  %2047 = vmatprep.subr.bf16.mxu0 0
  %2048 = vmatpush1.bf16.msra.mxu0 0
  %2049 = vmatprep.subr.bf16.mxu0 0
  %2050 = vmatpush1.bf16.msra.mxu0 0
  %2051 = vmatprep.subr.bf16.mxu0 0
  %2052 = vmatpush1.bf16.msra.mxu0 0
  %2053 = vmatprep.subr.bf16.mxu0 0
  %2054 = vmatpush1.bf16.msra.mxu0 0
  %2055 = vmatprep.subr.bf16.mxu0 0
  %2056 = vmatpush1.bf16.msra.mxu0 0
  %2057 = vmatprep.subr.bf16.mxu0 0
  %2058 = vmatpush1.bf16.msra.mxu0 0
  %2059 = vmatprep.subr.bf16.mxu0 0
  %2060 = vmatpush1.bf16.msra.mxu0 0
  %2061 = vmatprep.mubr.bf16.mxu0 0
  %2062 = vmatmul.mubr.bf16.gmra.mrb[0].mxu0 %v1963
  %v2063 = vpop.f32.mrb[0].mxu0
  %v2064 = vadd.f32 0.0, %v2063
  %v2065 = vpop.f32.mrb[0].mxu0
  %v2066 = vpop.f32.mrb[0].mxu0
  %v2067 = vadd.f32 0.0, %v2066
  %v2068 = vpop.f32.mrb[0].mxu0
  %2069 = vdwg.mxu0
  %v2070 = vadd.f32 %v1951, %v2064
  %v2071 = vadd.f32 %v1954, %v2067
  %v2072 = vld [vmem:[%s35] sm:$0x1]
  %v2074 = vlaneseq
  %v2075 = vshrl.u32 %v2074, 7
  %v2076 = vsub.s32 0, %v2075
  %v2077 = vrot.slane %v2072, %v2076
  %v2079 = vadd.f32 %v2070, %v2077
  %v2080 = vadd.f32 %v2071, %v2077
  %v2081 = vmax.f32 %v2079, 0.0
  %v2082 = vmax.f32 %v2080, 0.0
  %v2083 = vrot.slane %v2081, 7
  %v2084 = vrot.slane %v2082, 7
  %v2085 = vsel %vm404, %v2083, %v2084
  %v2086 = vsel %vm404, %v2084, %v2083
  %v2087 = vsel %vm149, 0.0, %v2086
  %v2088 = vsel %vm150, 0.0, %v2085
  %v2089 = vpack.c.bf16 %v2088, %v2087
  %v2090 = vld [vmem:[%s37] sm:$0xf]
  %v2091 = vld [vmem:[%s37 + $0x4] sm:$0xf]
  %v2092 = vld [vmem:[%s37 + $0x8] sm:$0xf]
  %v2093 = vld [vmem:[%s37 + $0xc] sm:$0xf]
  %v2094 = vld [vmem:[%s37 + $0x10] sm:$0xf]
  %v2095 = vld [vmem:[%s37 + $0x14] sm:$0xf]
  %v2096 = vld [vmem:[%s37 + $0x18] sm:$0xf]
  %v2097 = vld [vmem:[%s37 + $0x1c] sm:$0xf]
  %v2098 = vld [vmem:[%s37 + $0x20] sm:$0xf]
  %v2099 = vld [vmem:[%s37 + $0x24] sm:$0xf]
  %v2100 = vld [vmem:[%s37 + $0x28] sm:$0xf]
  %v2101 = vld [vmem:[%s37 + $0x2c] sm:$0xf]
  %v2102 = vld [vmem:[%s37 + $0x30] sm:$0xf]
  %v2103 = vld [vmem:[%s37 + $0x34] sm:$0xf]
  %v2104 = vld [vmem:[%s37 + $0x38] sm:$0xf]
  %v2105 = vld [vmem:[%s37 + $0x3c] sm:$0xf]
  %v2106 = vpack.c.bf16 %v2082, %v2081
  %s2107 = scalar_lea.vmem %s37, 64
  %v2108 = vld [vmem:[%s2107] sm:$0xf]
  %v2109 = vld [vmem:[%s2107 + $0x4] sm:$0xf]
  %v2110 = vld [vmem:[%s2107 + $0x8] sm:$0xf]
  %v2111 = vld [vmem:[%s2107 + $0xc] sm:$0xf]
  %v2112 = vld [vmem:[%s2107 + $0x10] sm:$0xf]
  %v2113 = vld [vmem:[%s2107 + $0x14] sm:$0xf]
  %v2114 = vld [vmem:[%s2107 + $0x18] sm:$0xf]
  %v2115 = vld [vmem:[%s2107 + $0x1c] sm:$0xf]
  %v2116 = vld [vmem:[%s2107 + $0x20] sm:$0xf]
  %v2117 = vld [vmem:[%s2107 + $0x24] sm:$0xf]
  %v2118 = vld [vmem:[%s2107 + $0x28] sm:$0xf]
  %v2119 = vld [vmem:[%s2107 + $0x2c] sm:$0xf]
  %v2120 = vld [vmem:[%s2107 + $0x30] sm:$0xf]
  %v2121 = vld [vmem:[%s2107 + $0x34] sm:$0xf]
  %v2122 = vld [vmem:[%s2107 + $0x38] sm:$0xf]
  %v2123 = vld [vmem:[%s2107 + $0x3c] sm:$0xf]
  %v2140 = vunpack.c.l.b16 %v2108
  %v2141 = vunpack.c.l.b16 %v2109
  %v2142 = vunpack.c.l.b16 %v2110
  %v2143 = vunpack.c.l.b16 %v2111
  %v2144 = vunpack.c.l.b16 %v2112
  %v2145 = vunpack.c.l.b16 %v2113
  %v2146 = vunpack.c.l.b16 %v2114
  %v2147 = vunpack.c.l.b16 %v2115
  %v2148 = vunpack.c.l.b16 %v2116
  %v2149 = vunpack.c.l.b16 %v2117
  %v2150 = vunpack.c.l.b16 %v2118
  %v2151 = vunpack.c.l.b16 %v2119
  %v2152 = vunpack.c.l.b16 %v2120
  %v2153 = vunpack.c.l.b16 %v2121
  %v2154 = vunpack.c.l.b16 %v2122
  %v2155 = vunpack.c.l.b16 %v2123
  %v2156 = vpack.c.b16 %v2141, %v2140
  %v2157 = vpack.c.b16 %v2143, %v2142
  %v2158 = vpack.c.b16 %v2145, %v2144
  %v2159 = vpack.c.b16 %v2147, %v2146
  %v2160 = vpack.c.b16 %v2149, %v2148
  %v2161 = vpack.c.b16 %v2151, %v2150
  %v2162 = vpack.c.b16 %v2153, %v2152
  %v2163 = vpack.c.b16 %v2155, %v2154
  %2172 = vmatprep.subr.bf16.mxu0 0
  %2173 = vmatpush1.bf16.msra.mxu0 %v2156
  %2174 = vmatprep.subr.bf16.mxu0 0
  %2175 = vmatpush1.bf16.msra.mxu0 %v2157
  %2176 = vmatprep.subr.bf16.mxu0 0
  %2177 = vmatpush1.bf16.msra.mxu0 %v2158
  %2178 = vmatprep.subr.bf16.mxu0 0
  %2179 = vmatpush1.bf16.msra.mxu0 %v2159
  %2180 = vmatprep.subr.bf16.mxu0 0
  %2181 = vmatpush1.bf16.msra.mxu0 %v2160
  %2182 = vmatprep.subr.bf16.mxu0 0
  %2183 = vmatpush1.bf16.msra.mxu0 %v2161
  %2184 = vmatprep.subr.bf16.mxu0 0
  %2185 = vmatpush1.bf16.msra.mxu0 %v2162
  %2186 = vmatprep.subr.bf16.mxu0 0
  %2187 = vmatpush1.bf16.msra.mxu0 %v2163
  %2188 = vmatprep.subr.bf16.mxu0 0
  %2189 = vmatpush1.bf16.msra.mxu0 0
  %2190 = vmatprep.subr.bf16.mxu0 0
  %2191 = vmatpush1.bf16.msra.mxu0 0
  %2192 = vmatprep.subr.bf16.mxu0 0
  %2193 = vmatpush1.bf16.msra.mxu0 0
  %2194 = vmatprep.subr.bf16.mxu0 0
  %2195 = vmatpush1.bf16.msra.mxu0 0
  %2196 = vmatprep.subr.bf16.mxu0 0
  %2197 = vmatpush1.bf16.msra.mxu0 0
  %2198 = vmatprep.subr.bf16.mxu0 0
  %2199 = vmatpush1.bf16.msra.mxu0 0
  %2200 = vmatprep.subr.bf16.mxu0 0
  %2201 = vmatpush1.bf16.msra.mxu0 0
  %2202 = vmatprep.subr.bf16.mxu0 0
  %2203 = vmatpush1.bf16.msra.mxu0 0
  %2204 = vmatprep.mubr.bf16.mxu0 0
  %2205 = vmatmul.mubr.bf16.gmra.mrb[0].mxu0 %v2106
  %v2206 = vpop.f32.mrb[0].mxu0
  %v2207 = vadd.f32 0.0, %v2206
  %v2208 = vpop.f32.mrb[0].mxu0
  %v2209 = vpop.f32.mrb[0].mxu0
  %v2210 = vadd.f32 0.0, %v2209
  %v2211 = vpop.f32.mrb[0].mxu0
  %2212 = vdwg.mxu0
  %v2229 = vunpack.c.l.b16 %v2090
  %v2230 = vunpack.c.l.b16 %v2091
  %v2231 = vunpack.c.l.b16 %v2092
  %v2232 = vunpack.c.l.b16 %v2093
  %v2233 = vunpack.c.l.b16 %v2094
  %v2234 = vunpack.c.l.b16 %v2095
  %v2235 = vunpack.c.l.b16 %v2096
  %v2236 = vunpack.c.l.b16 %v2097
  %v2237 = vunpack.c.l.b16 %v2098
  %v2238 = vunpack.c.l.b16 %v2099
  %v2239 = vunpack.c.l.b16 %v2100
  %v2240 = vunpack.c.l.b16 %v2101
  %v2241 = vunpack.c.l.b16 %v2102
  %v2242 = vunpack.c.l.b16 %v2103
  %v2243 = vunpack.c.l.b16 %v2104
  %v2244 = vunpack.c.l.b16 %v2105
  %v2245 = vpack.c.b16 %v2230, %v2229
  %v2246 = vpack.c.b16 %v2232, %v2231
  %v2247 = vpack.c.b16 %v2234, %v2233
  %v2248 = vpack.c.b16 %v2236, %v2235
  %v2249 = vpack.c.b16 %v2238, %v2237
  %v2250 = vpack.c.b16 %v2240, %v2239
  %v2251 = vpack.c.b16 %v2242, %v2241
  %v2252 = vpack.c.b16 %v2244, %v2243
  %2261 = vmatprep.subr.bf16.mxu0 0
  %2262 = vmatpush1.bf16.msra.mxu0 %v2245
  %2263 = vmatprep.subr.bf16.mxu0 0
  %2264 = vmatpush1.bf16.msra.mxu0 %v2246
  %2265 = vmatprep.subr.bf16.mxu0 0
  %2266 = vmatpush1.bf16.msra.mxu0 %v2247
  %2267 = vmatprep.subr.bf16.mxu0 0
  %2268 = vmatpush1.bf16.msra.mxu0 %v2248
  %2269 = vmatprep.subr.bf16.mxu0 0
  %2270 = vmatpush1.bf16.msra.mxu0 %v2249
  %2271 = vmatprep.subr.bf16.mxu0 0
  %2272 = vmatpush1.bf16.msra.mxu0 %v2250
  %2273 = vmatprep.subr.bf16.mxu0 0
  %2274 = vmatpush1.bf16.msra.mxu0 %v2251
  %2275 = vmatprep.subr.bf16.mxu0 0
  %2276 = vmatpush1.bf16.msra.mxu0 %v2252
  %2277 = vmatprep.subr.bf16.mxu0 0
  %2278 = vmatpush1.bf16.msra.mxu0 0
  %2279 = vmatprep.subr.bf16.mxu0 0
  %2280 = vmatpush1.bf16.msra.mxu0 0
  %2281 = vmatprep.subr.bf16.mxu0 0
  %2282 = vmatpush1.bf16.msra.mxu0 0
  %2283 = vmatprep.subr.bf16.mxu0 0
  %2284 = vmatpush1.bf16.msra.mxu0 0
  %2285 = vmatprep.subr.bf16.mxu0 0
  %2286 = vmatpush1.bf16.msra.mxu0 0
  %2287 = vmatprep.subr.bf16.mxu0 0
  %2288 = vmatpush1.bf16.msra.mxu0 0
  %2289 = vmatprep.subr.bf16.mxu0 0
  %2290 = vmatpush1.bf16.msra.mxu0 0
  %2291 = vmatprep.subr.bf16.mxu0 0
  %2292 = vmatpush1.bf16.msra.mxu0 0
  %2293 = vmatprep.mubr.bf16.mxu0 0
  %2294 = vmatmul.mubr.bf16.gmra.mrb[0].mxu0 %v2089
  %v2295 = vpop.f32.mrb[0].mxu0
  %v2296 = vadd.f32 %v2207, %v2295
  %v2297 = vpop.f32.mrb[0].mxu0
  %v2298 = vpop.f32.mrb[0].mxu0
  %v2299 = vadd.f32 %v2210, %v2298
  %v2300 = vpop.f32.mrb[0].mxu0
  %2301 = vdwg.mxu0
  %v2302 = vrot.slane %v2081, 1
  %v2303 = vrot.slane %v2082, 1
  %v2304 = vsel %vm413, %v2302, %v2303
  %v2305 = vsel %vm413, %v2303, %v2302
  %v2306 = vsel %vm151, 0.0, %v2304
  %v2307 = vsel %vm152, 0.0, %v2305
  %v2308 = vpack.c.bf16 %v2307, %v2306
  %s2309 = scalar_lea.vmem %s37, 128
  %v2310 = vld [vmem:[%s2309] sm:$0xf]
  %v2311 = vld [vmem:[%s2309 + $0x4] sm:$0xf]
  %v2312 = vld [vmem:[%s2309 + $0x8] sm:$0xf]
  %v2313 = vld [vmem:[%s2309 + $0xc] sm:$0xf]
  %v2314 = vld [vmem:[%s2309 + $0x10] sm:$0xf]
  %v2315 = vld [vmem:[%s2309 + $0x14] sm:$0xf]
  %v2316 = vld [vmem:[%s2309 + $0x18] sm:$0xf]
  %v2317 = vld [vmem:[%s2309 + $0x1c] sm:$0xf]
  %v2318 = vld [vmem:[%s2309 + $0x20] sm:$0xf]
  %v2319 = vld [vmem:[%s2309 + $0x24] sm:$0xf]
  %v2320 = vld [vmem:[%s2309 + $0x28] sm:$0xf]
  %v2321 = vld [vmem:[%s2309 + $0x2c] sm:$0xf]
  %v2322 = vld [vmem:[%s2309 + $0x30] sm:$0xf]
  %v2323 = vld [vmem:[%s2309 + $0x34] sm:$0xf]
  %v2324 = vld [vmem:[%s2309 + $0x38] sm:$0xf]
  %v2325 = vld [vmem:[%s2309 + $0x3c] sm:$0xf]
  %v2342 = vunpack.c.l.b16 %v2310
  %v2343 = vunpack.c.l.b16 %v2311
  %v2344 = vunpack.c.l.b16 %v2312
  %v2345 = vunpack.c.l.b16 %v2313
  %v2346 = vunpack.c.l.b16 %v2314
  %v2347 = vunpack.c.l.b16 %v2315
  %v2348 = vunpack.c.l.b16 %v2316
  %v2349 = vunpack.c.l.b16 %v2317
  %v2350 = vunpack.c.l.b16 %v2318
  %v2351 = vunpack.c.l.b16 %v2319
  %v2352 = vunpack.c.l.b16 %v2320
  %v2353 = vunpack.c.l.b16 %v2321
  %v2354 = vunpack.c.l.b16 %v2322
  %v2355 = vunpack.c.l.b16 %v2323
  %v2356 = vunpack.c.l.b16 %v2324
  %v2357 = vunpack.c.l.b16 %v2325
  %v2358 = vpack.c.b16 %v2343, %v2342
  %v2359 = vpack.c.b16 %v2345, %v2344
  %v2360 = vpack.c.b16 %v2347, %v2346
  %v2361 = vpack.c.b16 %v2349, %v2348
  %v2362 = vpack.c.b16 %v2351, %v2350
  %v2363 = vpack.c.b16 %v2353, %v2352
  %v2364 = vpack.c.b16 %v2355, %v2354
  %v2365 = vpack.c.b16 %v2357, %v2356
  %2374 = vmatprep.subr.bf16.mxu0 0
  %2375 = vmatpush1.bf16.msra.mxu0 %v2358
  %2376 = vmatprep.subr.bf16.mxu0 0
  %2377 = vmatpush1.bf16.msra.mxu0 %v2359
  %2378 = vmatprep.subr.bf16.mxu0 0
  %2379 = vmatpush1.bf16.msra.mxu0 %v2360
  %2380 = vmatprep.subr.bf16.mxu0 0
  %2381 = vmatpush1.bf16.msra.mxu0 %v2361
  %2382 = vmatprep.subr.bf16.mxu0 0
  %2383 = vmatpush1.bf16.msra.mxu0 %v2362
  %2384 = vmatprep.subr.bf16.mxu0 0
  %2385 = vmatpush1.bf16.msra.mxu0 %v2363
  %2386 = vmatprep.subr.bf16.mxu0 0
  %2387 = vmatpush1.bf16.msra.mxu0 %v2364
  %2388 = vmatprep.subr.bf16.mxu0 0
  %2389 = vmatpush1.bf16.msra.mxu0 %v2365
  %2390 = vmatprep.subr.bf16.mxu0 0
  %2391 = vmatpush1.bf16.msra.mxu0 0
  %2392 = vmatprep.subr.bf16.mxu0 0
  %2393 = vmatpush1.bf16.msra.mxu0 0
  %2394 = vmatprep.subr.bf16.mxu0 0
  %2395 = vmatpush1.bf16.msra.mxu0 0
  %2396 = vmatprep.subr.bf16.mxu0 0
  %2397 = vmatpush1.bf16.msra.mxu0 0
  %2398 = vmatprep.subr.bf16.mxu0 0
  %2399 = vmatpush1.bf16.msra.mxu0 0
  %2400 = vmatprep.subr.bf16.mxu0 0
  %2401 = vmatpush1.bf16.msra.mxu0 0
  %2402 = vmatprep.subr.bf16.mxu0 0
  %2403 = vmatpush1.bf16.msra.mxu0 0
  %2404 = vmatprep.subr.bf16.mxu0 0
  %2405 = vmatpush1.bf16.msra.mxu0 0
  %2406 = vmatprep.mubr.bf16.mxu0 0
  %2407 = vmatmul.mubr.bf16.gmra.mrb[0].mxu0 %v2308
  %v2408 = vpop.f32.mrb[0].mxu0
  %v2409 = vadd.f32 0.0, %v2408
  %v2410 = vpop.f32.mrb[0].mxu0
  %v2411 = vpop.f32.mrb[0].mxu0
  %v2412 = vadd.f32 0.0, %v2411
  %v2413 = vpop.f32.mrb[0].mxu0
  %2414 = vdwg.mxu0
  %v2415 = vadd.f32 %v2296, %v2409
  %v2416 = vadd.f32 %v2299, %v2412
  %v2417 = vld [vmem:[%s39] sm:$0x1]
  %v2419 = vlaneseq
  %v2420 = vshrl.u32 %v2419, 7
  %v2421 = vsub.s32 0, %v2420
  %v2422 = vrot.slane %v2417, %v2421
  %v2424 = vadd.f32 %v2415, %v2422
  %v2425 = vadd.f32 %v2416, %v2422
  %v2426 = vmax.f32 %v2424, 0.0
  %v2427 = vmax.f32 %v2425, 0.0
  %v2428 = vpack.c.bf16 %v2427, %v2426
  %v2429 = vld [vmem:[%s41] sm:$0xf]
  %v2430 = vld [vmem:[%s41 + $0x4] sm:$0xf]
  %v2431 = vld [vmem:[%s41 + $0x8] sm:$0xf]
  %v2432 = vld [vmem:[%s41 + $0xc] sm:$0xf]
  %v2433 = vld [vmem:[%s41 + $0x10] sm:$0xf]
  %v2434 = vld [vmem:[%s41 + $0x14] sm:$0xf]
  %v2435 = vld [vmem:[%s41 + $0x18] sm:$0xf]
  %v2436 = vld [vmem:[%s41 + $0x1c] sm:$0xf]
  %v2437 = vld [vmem:[%s41 + $0x20] sm:$0xf]
  %v2438 = vld [vmem:[%s41 + $0x24] sm:$0xf]
  %v2439 = vld [vmem:[%s41 + $0x28] sm:$0xf]
  %v2440 = vld [vmem:[%s41 + $0x2c] sm:$0xf]
  %v2441 = vld [vmem:[%s41 + $0x30] sm:$0xf]
  %v2442 = vld [vmem:[%s41 + $0x34] sm:$0xf]
  %v2443 = vld [vmem:[%s41 + $0x38] sm:$0xf]
  %v2444 = vld [vmem:[%s41 + $0x3c] sm:$0xf]
  %v2461 = vunpack.c.l.b16 %v2429
  %v2462 = vunpack.c.l.b16 %v2430
  %v2463 = vunpack.c.l.b16 %v2431
  %v2464 = vunpack.c.l.b16 %v2432
  %v2465 = vunpack.c.l.b16 %v2433
  %v2466 = vunpack.c.l.b16 %v2434
  %v2467 = vunpack.c.l.b16 %v2435
  %v2468 = vunpack.c.l.b16 %v2436
  %v2469 = vunpack.c.l.b16 %v2437
  %v2470 = vunpack.c.l.b16 %v2438
  %v2471 = vunpack.c.l.b16 %v2439
  %v2472 = vunpack.c.l.b16 %v2440
  %v2473 = vunpack.c.l.b16 %v2441
  %v2474 = vunpack.c.l.b16 %v2442
  %v2475 = vunpack.c.l.b16 %v2443
  %v2476 = vunpack.c.l.b16 %v2444
  %v2477 = vpack.c.b16 %v2462, %v2461
  %v2478 = vpack.c.b16 %v2464, %v2463
  %v2479 = vpack.c.b16 %v2466, %v2465
  %v2480 = vpack.c.b16 %v2468, %v2467
  %v2481 = vpack.c.b16 %v2470, %v2469
  %v2482 = vpack.c.b16 %v2472, %v2471
  %v2483 = vpack.c.b16 %v2474, %v2473
  %v2484 = vpack.c.b16 %v2476, %v2475
  %2493 = vmatprep.subr.bf16.mxu0 0
  %2494 = vmatpush1.bf16.msra.mxu0 %v2477
  %2495 = vmatprep.subr.bf16.mxu0 0
  %2496 = vmatpush1.bf16.msra.mxu0 %v2478
  %2497 = vmatprep.subr.bf16.mxu0 0
  %2498 = vmatpush1.bf16.msra.mxu0 %v2479
  %2499 = vmatprep.subr.bf16.mxu0 0
  %2500 = vmatpush1.bf16.msra.mxu0 %v2480
  %2501 = vmatprep.subr.bf16.mxu0 0
  %2502 = vmatpush1.bf16.msra.mxu0 %v2481
  %2503 = vmatprep.subr.bf16.mxu0 0
  %2504 = vmatpush1.bf16.msra.mxu0 %v2482
  %2505 = vmatprep.subr.bf16.mxu0 0
  %2506 = vmatpush1.bf16.msra.mxu0 %v2483
  %2507 = vmatprep.subr.bf16.mxu0 0
  %2508 = vmatpush1.bf16.msra.mxu0 %v2484
  %2509 = vmatprep.subr.bf16.mxu0 0
  %2510 = vmatpush1.bf16.msra.mxu0 0
  %2511 = vmatprep.subr.bf16.mxu0 0
  %2512 = vmatpush1.bf16.msra.mxu0 0
  %2513 = vmatprep.subr.bf16.mxu0 0
  %2514 = vmatpush1.bf16.msra.mxu0 0
  %2515 = vmatprep.subr.bf16.mxu0 0
  %2516 = vmatpush1.bf16.msra.mxu0 0
  %2517 = vmatprep.subr.bf16.mxu0 0
  %2518 = vmatpush1.bf16.msra.mxu0 0
  %2519 = vmatprep.subr.bf16.mxu0 0
  %2520 = vmatpush1.bf16.msra.mxu0 0
  %2521 = vmatprep.subr.bf16.mxu0 0
  %2522 = vmatpush1.bf16.msra.mxu0 0
  %2523 = vmatprep.subr.bf16.mxu0 0
  %2524 = vmatpush1.bf16.msra.mxu0 0
  %2525 = vmatprep.mubr.bf16.mxu0 0
  %2526 = vmatmul.mubr.bf16.gmra.mrb[0].mxu0 %v2428
  %v2527 = vpop.f32.mrb[0].mxu0
  %v2528 = vadd.f32 0.0, %v2527
  %v2529 = vpop.f32.mrb[0].mxu0
  %v2530 = vpop.f32.mrb[0].mxu0
  %v2531 = vadd.f32 0.0, %v2530
  %v2532 = vpop.f32.mrb[0].mxu0
  %2533 = vdwg.mxu0
  %v2534 = vadd.f32 %v2079, %v2528
  %v2535 = vadd.f32 %v2080, %v2531
  %v2536 = vld [vmem:[%s43] sm:$0x1]
  %v2538 = vlaneseq
  %v2539 = vshrl.u32 %v2538, 7
  %v2540 = vsub.s32 0, %v2539
  %v2541 = vrot.slane %v2536, %v2540
  %v2543 = vadd.f32 %v2534, %v2541
  %v2544 = vadd.f32 %v2535, %v2541
  %v2545 = vmax.f32 %v2543, 0.0
  %v2546 = vmax.f32 %v2544, 0.0
  %v2547 = vrot.slane %v2545, 7
  %v2548 = vrot.slane %v2546, 7
  %v2549 = vsel %vm404, %v2547, %v2548
  %v2550 = vsel %vm404, %v2548, %v2547
  %v2551 = vsel %vm149, 0.0, %v2550
  %v2552 = vsel %vm150, 0.0, %v2549
  %v2553 = vpack.c.bf16 %v2552, %v2551
  %v2554 = vld [vmem:[%s45] sm:$0xf]
  %v2555 = vld [vmem:[%s45 + $0x4] sm:$0xf]
  %v2556 = vld [vmem:[%s45 + $0x8] sm:$0xf]
  %v2557 = vld [vmem:[%s45 + $0xc] sm:$0xf]
  %v2558 = vld [vmem:[%s45 + $0x10] sm:$0xf]
  %v2559 = vld [vmem:[%s45 + $0x14] sm:$0xf]
  %v2560 = vld [vmem:[%s45 + $0x18] sm:$0xf]
  %v2561 = vld [vmem:[%s45 + $0x1c] sm:$0xf]
  %v2562 = vld [vmem:[%s45 + $0x20] sm:$0xf]
  %v2563 = vld [vmem:[%s45 + $0x24] sm:$0xf]
  %v2564 = vld [vmem:[%s45 + $0x28] sm:$0xf]
  %v2565 = vld [vmem:[%s45 + $0x2c] sm:$0xf]
  %v2566 = vld [vmem:[%s45 + $0x30] sm:$0xf]
  %v2567 = vld [vmem:[%s45 + $0x34] sm:$0xf]
  %v2568 = vld [vmem:[%s45 + $0x38] sm:$0xf]
  %v2569 = vld [vmem:[%s45 + $0x3c] sm:$0xf]
  %v2570 = vpack.c.bf16 %v2546, %v2545
  %s2571 = scalar_lea.vmem %s45, 64
  %v2572 = vld [vmem:[%s2571] sm:$0xf]
  %v2573 = vld [vmem:[%s2571 + $0x4] sm:$0xf]
  %v2574 = vld [vmem:[%s2571 + $0x8] sm:$0xf]
  %v2575 = vld [vmem:[%s2571 + $0xc] sm:$0xf]
  %v2576 = vld [vmem:[%s2571 + $0x10] sm:$0xf]
  %v2577 = vld [vmem:[%s2571 + $0x14] sm:$0xf]
  %v2578 = vld [vmem:[%s2571 + $0x18] sm:$0xf]
  %v2579 = vld [vmem:[%s2571 + $0x1c] sm:$0xf]
  %v2580 = vld [vmem:[%s2571 + $0x20] sm:$0xf]
  %v2581 = vld [vmem:[%s2571 + $0x24] sm:$0xf]
  %v2582 = vld [vmem:[%s2571 + $0x28] sm:$0xf]
  %v2583 = vld [vmem:[%s2571 + $0x2c] sm:$0xf]
  %v2584 = vld [vmem:[%s2571 + $0x30] sm:$0xf]
  %v2585 = vld [vmem:[%s2571 + $0x34] sm:$0xf]
  %v2586 = vld [vmem:[%s2571 + $0x38] sm:$0xf]
  %v2587 = vld [vmem:[%s2571 + $0x3c] sm:$0xf]
  %v2604 = vunpack.c.l.b16 %v2572
  %v2605 = vunpack.c.l.b16 %v2573
  %v2606 = vunpack.c.l.b16 %v2574
  %v2607 = vunpack.c.l.b16 %v2575
  %v2608 = vunpack.c.l.b16 %v2576
  %v2609 = vunpack.c.l.b16 %v2577
  %v2610 = vunpack.c.l.b16 %v2578
  %v2611 = vunpack.c.l.b16 %v2579
  %v2612 = vunpack.c.l.b16 %v2580
  %v2613 = vunpack.c.l.b16 %v2581
  %v2614 = vunpack.c.l.b16 %v2582
  %v2615 = vunpack.c.l.b16 %v2583
  %v2616 = vunpack.c.l.b16 %v2584
  %v2617 = vunpack.c.l.b16 %v2585
  %v2618 = vunpack.c.l.b16 %v2586
  %v2619 = vunpack.c.l.b16 %v2587
  %v2620 = vpack.c.b16 %v2605, %v2604
  %v2621 = vpack.c.b16 %v2607, %v2606
  %v2622 = vpack.c.b16 %v2609, %v2608
  %v2623 = vpack.c.b16 %v2611, %v2610
  %v2624 = vpack.c.b16 %v2613, %v2612
  %v2625 = vpack.c.b16 %v2615, %v2614
  %v2626 = vpack.c.b16 %v2617, %v2616
  %v2627 = vpack.c.b16 %v2619, %v2618
  %2636 = vmatprep.subr.bf16.mxu0 0
  %2637 = vmatpush1.bf16.msra.mxu0 %v2620
  %2638 = vmatprep.subr.bf16.mxu0 0
  %2639 = vmatpush1.bf16.msra.mxu0 %v2621
  %2640 = vmatprep.subr.bf16.mxu0 0
  %2641 = vmatpush1.bf16.msra.mxu0 %v2622
  %2642 = vmatprep.subr.bf16.mxu0 0
  %2643 = vmatpush1.bf16.msra.mxu0 %v2623
  %2644 = vmatprep.subr.bf16.mxu0 0
  %2645 = vmatpush1.bf16.msra.mxu0 %v2624
  %2646 = vmatprep.subr.bf16.mxu0 0
  %2647 = vmatpush1.bf16.msra.mxu0 %v2625
  %2648 = vmatprep.subr.bf16.mxu0 0
  %2649 = vmatpush1.bf16.msra.mxu0 %v2626
  %2650 = vmatprep.subr.bf16.mxu0 0
  %2651 = vmatpush1.bf16.msra.mxu0 %v2627
  %2652 = vmatprep.subr.bf16.mxu0 0
  %2653 = vmatpush1.bf16.msra.mxu0 0
  %2654 = vmatprep.subr.bf16.mxu0 0
  %2655 = vmatpush1.bf16.msra.mxu0 0
  %2656 = vmatprep.subr.bf16.mxu0 0
  %2657 = vmatpush1.bf16.msra.mxu0 0
  %2658 = vmatprep.subr.bf16.mxu0 0
  %2659 = vmatpush1.bf16.msra.mxu0 0
  %2660 = vmatprep.subr.bf16.mxu0 0
  %2661 = vmatpush1.bf16.msra.mxu0 0
  %2662 = vmatprep.subr.bf16.mxu0 0
  %2663 = vmatpush1.bf16.msra.mxu0 0
  %2664 = vmatprep.subr.bf16.mxu0 0
  %2665 = vmatpush1.bf16.msra.mxu0 0
  %2666 = vmatprep.subr.bf16.mxu0 0
  %2667 = vmatpush1.bf16.msra.mxu0 0
  %2668 = vmatprep.mubr.bf16.mxu0 0
  %2669 = vmatmul.mubr.bf16.gmra.mrb[0].mxu0 %v2570
  %v2670 = vpop.f32.mrb[0].mxu0
  %v2671 = vadd.f32 0.0, %v2670
  %v2672 = vpop.f32.mrb[0].mxu0
  %v2673 = vpop.f32.mrb[0].mxu0
  %v2674 = vadd.f32 0.0, %v2673
  %v2675 = vpop.f32.mrb[0].mxu0
  %2676 = vdwg.mxu0
  %v2693 = vunpack.c.l.b16 %v2554
  %v2694 = vunpack.c.l.b16 %v2555
  %v2695 = vunpack.c.l.b16 %v2556
  %v2696 = vunpack.c.l.b16 %v2557
  %v2697 = vunpack.c.l.b16 %v2558
  %v2698 = vunpack.c.l.b16 %v2559
  %v2699 = vunpack.c.l.b16 %v2560
  %v2700 = vunpack.c.l.b16 %v2561
  %v2701 = vunpack.c.l.b16 %v2562
  %v2702 = vunpack.c.l.b16 %v2563
  %v2703 = vunpack.c.l.b16 %v2564
  %v2704 = vunpack.c.l.b16 %v2565
  %v2705 = vunpack.c.l.b16 %v2566
  %v2706 = vunpack.c.l.b16 %v2567
  %v2707 = vunpack.c.l.b16 %v2568
  %v2708 = vunpack.c.l.b16 %v2569
  %v2709 = vpack.c.b16 %v2694, %v2693
  %v2710 = vpack.c.b16 %v2696, %v2695
  %v2711 = vpack.c.b16 %v2698, %v2697
  %v2712 = vpack.c.b16 %v2700, %v2699
  %v2713 = vpack.c.b16 %v2702, %v2701
  %v2714 = vpack.c.b16 %v2704, %v2703
  %v2715 = vpack.c.b16 %v2706, %v2705
  %v2716 = vpack.c.b16 %v2708, %v2707
  %2725 = vmatprep.subr.bf16.mxu0 0
  %2726 = vmatpush1.bf16.msra.mxu0 %v2709
  %2727 = vmatprep.subr.bf16.mxu0 0
  %2728 = vmatpush1.bf16.msra.mxu0 %v2710
  %2729 = vmatprep.subr.bf16.mxu0 0
  %2730 = vmatpush1.bf16.msra.mxu0 %v2711
  %2731 = vmatprep.subr.bf16.mxu0 0
  %2732 = vmatpush1.bf16.msra.mxu0 %v2712
  %2733 = vmatprep.subr.bf16.mxu0 0
  %2734 = vmatpush1.bf16.msra.mxu0 %v2713
  %2735 = vmatprep.subr.bf16.mxu0 0
  %2736 = vmatpush1.bf16.msra.mxu0 %v2714
  %2737 = vmatprep.subr.bf16.mxu0 0
  %2738 = vmatpush1.bf16.msra.mxu0 %v2715
  %2739 = vmatprep.subr.bf16.mxu0 0
  %2740 = vmatpush1.bf16.msra.mxu0 %v2716
  %2741 = vmatprep.subr.bf16.mxu0 0
  %2742 = vmatpush1.bf16.msra.mxu0 0
  %2743 = vmatprep.subr.bf16.mxu0 0
  %2744 = vmatpush1.bf16.msra.mxu0 0
  %2745 = vmatprep.subr.bf16.mxu0 0
  %2746 = vmatpush1.bf16.msra.mxu0 0
  %2747 = vmatprep.subr.bf16.mxu0 0
  %2748 = vmatpush1.bf16.msra.mxu0 0
  %2749 = vmatprep.subr.bf16.mxu0 0
  %2750 = vmatpush1.bf16.msra.mxu0 0
  %2751 = vmatprep.subr.bf16.mxu0 0
  %2752 = vmatpush1.bf16.msra.mxu0 0
  %2753 = vmatprep.subr.bf16.mxu0 0
  %2754 = vmatpush1.bf16.msra.mxu0 0
  %2755 = vmatprep.subr.bf16.mxu0 0
  %2756 = vmatpush1.bf16.msra.mxu0 0
  %2757 = vmatprep.mubr.bf16.mxu0 0
  %2758 = vmatmul.mubr.bf16.gmra.mrb[0].mxu0 %v2553
  %v2759 = vpop.f32.mrb[0].mxu0
  %v2760 = vadd.f32 %v2671, %v2759
  %v2761 = vpop.f32.mrb[0].mxu0
  %v2762 = vpop.f32.mrb[0].mxu0
  %v2763 = vadd.f32 %v2674, %v2762
  %v2764 = vpop.f32.mrb[0].mxu0
  %2765 = vdwg.mxu0
  %v2766 = vrot.slane %v2545, 1
  %v2767 = vrot.slane %v2546, 1
  %v2768 = vsel %vm413, %v2766, %v2767
  %v2769 = vsel %vm413, %v2767, %v2766
  %v2770 = vsel %vm151, 0.0, %v2768
  %v2771 = vsel %vm152, 0.0, %v2769
  %v2772 = vpack.c.bf16 %v2771, %v2770
  %s2773 = scalar_lea.vmem %s45, 128
  %v2774 = vld [vmem:[%s2773] sm:$0xf]
  %v2775 = vld [vmem:[%s2773 + $0x4] sm:$0xf]
  %v2776 = vld [vmem:[%s2773 + $0x8] sm:$0xf]
  %v2777 = vld [vmem:[%s2773 + $0xc] sm:$0xf]
  %v2778 = vld [vmem:[%s2773 + $0x10] sm:$0xf]
  %v2779 = vld [vmem:[%s2773 + $0x14] sm:$0xf]
  %v2780 = vld [vmem:[%s2773 + $0x18] sm:$0xf]
  %v2781 = vld [vmem:[%s2773 + $0x1c] sm:$0xf]
  %v2782 = vld [vmem:[%s2773 + $0x20] sm:$0xf]
  %v2783 = vld [vmem:[%s2773 + $0x24] sm:$0xf]
  %v2784 = vld [vmem:[%s2773 + $0x28] sm:$0xf]
  %v2785 = vld [vmem:[%s2773 + $0x2c] sm:$0xf]
  %v2786 = vld [vmem:[%s2773 + $0x30] sm:$0xf]
  %v2787 = vld [vmem:[%s2773 + $0x34] sm:$0xf]
  %v2788 = vld [vmem:[%s2773 + $0x38] sm:$0xf]
  %v2789 = vld [vmem:[%s2773 + $0x3c] sm:$0xf]
  %v2806 = vunpack.c.l.b16 %v2774
  %v2807 = vunpack.c.l.b16 %v2775
  %v2808 = vunpack.c.l.b16 %v2776
  %v2809 = vunpack.c.l.b16 %v2777
  %v2810 = vunpack.c.l.b16 %v2778
  %v2811 = vunpack.c.l.b16 %v2779
  %v2812 = vunpack.c.l.b16 %v2780
  %v2813 = vunpack.c.l.b16 %v2781
  %v2814 = vunpack.c.l.b16 %v2782
  %v2815 = vunpack.c.l.b16 %v2783
  %v2816 = vunpack.c.l.b16 %v2784
  %v2817 = vunpack.c.l.b16 %v2785
  %v2818 = vunpack.c.l.b16 %v2786
  %v2819 = vunpack.c.l.b16 %v2787
  %v2820 = vunpack.c.l.b16 %v2788
  %v2821 = vunpack.c.l.b16 %v2789
  %v2822 = vpack.c.b16 %v2807, %v2806
  %v2823 = vpack.c.b16 %v2809, %v2808
  %v2824 = vpack.c.b16 %v2811, %v2810
  %v2825 = vpack.c.b16 %v2813, %v2812
  %v2826 = vpack.c.b16 %v2815, %v2814
  %v2827 = vpack.c.b16 %v2817, %v2816
  %v2828 = vpack.c.b16 %v2819, %v2818
  %v2829 = vpack.c.b16 %v2821, %v2820
  %2838 = vmatprep.subr.bf16.mxu0 0
  %2839 = vmatpush1.bf16.msra.mxu0 %v2822
  %2840 = vmatprep.subr.bf16.mxu0 0
  %2841 = vmatpush1.bf16.msra.mxu0 %v2823
  %2842 = vmatprep.subr.bf16.mxu0 0
  %2843 = vmatpush1.bf16.msra.mxu0 %v2824
  %2844 = vmatprep.subr.bf16.mxu0 0
  %2845 = vmatpush1.bf16.msra.mxu0 %v2825
  %2846 = vmatprep.subr.bf16.mxu0 0
  %2847 = vmatpush1.bf16.msra.mxu0 %v2826
  %2848 = vmatprep.subr.bf16.mxu0 0
  %2849 = vmatpush1.bf16.msra.mxu0 %v2827
  %2850 = vmatprep.subr.bf16.mxu0 0
  %2851 = vmatpush1.bf16.msra.mxu0 %v2828
  %2852 = vmatprep.subr.bf16.mxu0 0
  %2853 = vmatpush1.bf16.msra.mxu0 %v2829
  %2854 = vmatprep.subr.bf16.mxu0 0
  %2855 = vmatpush1.bf16.msra.mxu0 0
  %2856 = vmatprep.subr.bf16.mxu0 0
  %2857 = vmatpush1.bf16.msra.mxu0 0
  %2858 = vmatprep.subr.bf16.mxu0 0
  %2859 = vmatpush1.bf16.msra.mxu0 0
  %2860 = vmatprep.subr.bf16.mxu0 0
  %2861 = vmatpush1.bf16.msra.mxu0 0
  %2862 = vmatprep.subr.bf16.mxu0 0
  %2863 = vmatpush1.bf16.msra.mxu0 0
  %2864 = vmatprep.subr.bf16.mxu0 0
  %2865 = vmatpush1.bf16.msra.mxu0 0
  %2866 = vmatprep.subr.bf16.mxu0 0
  %2867 = vmatpush1.bf16.msra.mxu0 0
  %2868 = vmatprep.subr.bf16.mxu0 0
  %2869 = vmatpush1.bf16.msra.mxu0 0
  %2870 = vmatprep.mubr.bf16.mxu0 0
  %2871 = vmatmul.mubr.bf16.gmra.mrb[0].mxu0 %v2772
  %v2872 = vpop.f32.mrb[0].mxu0
  %v2873 = vadd.f32 0.0, %v2872
  %v2874 = vpop.f32.mrb[0].mxu0
  %v2875 = vpop.f32.mrb[0].mxu0
  %v2876 = vadd.f32 0.0, %v2875
  %v2877 = vpop.f32.mrb[0].mxu0
  %2878 = vdwg.mxu0
  %v2879 = vadd.f32 %v2760, %v2873
  %v2880 = vadd.f32 %v2763, %v2876
  %v2881 = vld [vmem:[%s47] sm:$0x1]
  %v2883 = vlaneseq
  %v2884 = vshrl.u32 %v2883, 7
  %v2885 = vsub.s32 0, %v2884
  %v2886 = vrot.slane %v2881, %v2885
  %v2888 = vadd.f32 %v2879, %v2886
  %v2889 = vadd.f32 %v2880, %v2886
  %v2890 = vmax.f32 %v2888, 0.0
  %v2891 = vmax.f32 %v2889, 0.0
  %v2892 = vpack.c.bf16 %v2891, %v2890
  %v2893 = vld [vmem:[%s49] sm:$0xf]
  %v2894 = vld [vmem:[%s49 + $0x4] sm:$0xf]
  %v2895 = vld [vmem:[%s49 + $0x8] sm:$0xf]
  %v2896 = vld [vmem:[%s49 + $0xc] sm:$0xf]
  %v2897 = vld [vmem:[%s49 + $0x10] sm:$0xf]
  %v2898 = vld [vmem:[%s49 + $0x14] sm:$0xf]
  %v2899 = vld [vmem:[%s49 + $0x18] sm:$0xf]
  %v2900 = vld [vmem:[%s49 + $0x1c] sm:$0xf]
  %v2901 = vld [vmem:[%s49 + $0x20] sm:$0xf]
  %v2902 = vld [vmem:[%s49 + $0x24] sm:$0xf]
  %v2903 = vld [vmem:[%s49 + $0x28] sm:$0xf]
  %v2904 = vld [vmem:[%s49 + $0x2c] sm:$0xf]
  %v2905 = vld [vmem:[%s49 + $0x30] sm:$0xf]
  %v2906 = vld [vmem:[%s49 + $0x34] sm:$0xf]
  %v2907 = vld [vmem:[%s49 + $0x38] sm:$0xf]
  %v2908 = vld [vmem:[%s49 + $0x3c] sm:$0xf]
  %v2925 = vunpack.c.l.b16 %v2893
  %v2926 = vunpack.c.l.b16 %v2894
  %v2927 = vunpack.c.l.b16 %v2895
  %v2928 = vunpack.c.l.b16 %v2896
  %v2929 = vunpack.c.l.b16 %v2897
  %v2930 = vunpack.c.l.b16 %v2898
  %v2931 = vunpack.c.l.b16 %v2899
  %v2932 = vunpack.c.l.b16 %v2900
  %v2933 = vunpack.c.l.b16 %v2901
  %v2934 = vunpack.c.l.b16 %v2902
  %v2935 = vunpack.c.l.b16 %v2903
  %v2936 = vunpack.c.l.b16 %v2904
  %v2937 = vunpack.c.l.b16 %v2905
  %v2938 = vunpack.c.l.b16 %v2906
  %v2939 = vunpack.c.l.b16 %v2907
  %v2940 = vunpack.c.l.b16 %v2908
  %v2941 = vpack.c.b16 %v2926, %v2925
  %v2942 = vpack.c.b16 %v2928, %v2927
  %v2943 = vpack.c.b16 %v2930, %v2929
  %v2944 = vpack.c.b16 %v2932, %v2931
  %v2945 = vpack.c.b16 %v2934, %v2933
  %v2946 = vpack.c.b16 %v2936, %v2935
  %v2947 = vpack.c.b16 %v2938, %v2937
  %v2948 = vpack.c.b16 %v2940, %v2939
  %2957 = vmatprep.subr.bf16.mxu0 0
  %2958 = vmatpush1.bf16.msra.mxu0 %v2941
  %2959 = vmatprep.subr.bf16.mxu0 0
  %2960 = vmatpush1.bf16.msra.mxu0 %v2942
  %2961 = vmatprep.subr.bf16.mxu0 0
  %2962 = vmatpush1.bf16.msra.mxu0 %v2943
  %2963 = vmatprep.subr.bf16.mxu0 0
  %2964 = vmatpush1.bf16.msra.mxu0 %v2944
  %2965 = vmatprep.subr.bf16.mxu0 0
  %2966 = vmatpush1.bf16.msra.mxu0 %v2945
  %2967 = vmatprep.subr.bf16.mxu0 0
  %2968 = vmatpush1.bf16.msra.mxu0 %v2946
  %2969 = vmatprep.subr.bf16.mxu0 0
  %2970 = vmatpush1.bf16.msra.mxu0 %v2947
  %2971 = vmatprep.subr.bf16.mxu0 0
  %2972 = vmatpush1.bf16.msra.mxu0 %v2948
  %2973 = vmatprep.subr.bf16.mxu0 0
  %2974 = vmatpush1.bf16.msra.mxu0 0
  %2975 = vmatprep.subr.bf16.mxu0 0
  %2976 = vmatpush1.bf16.msra.mxu0 0
  %2977 = vmatprep.subr.bf16.mxu0 0
  %2978 = vmatpush1.bf16.msra.mxu0 0
  %2979 = vmatprep.subr.bf16.mxu0 0
  %2980 = vmatpush1.bf16.msra.mxu0 0
  %2981 = vmatprep.subr.bf16.mxu0 0
  %2982 = vmatpush1.bf16.msra.mxu0 0
  %2983 = vmatprep.subr.bf16.mxu0 0
  %2984 = vmatpush1.bf16.msra.mxu0 0
  %2985 = vmatprep.subr.bf16.mxu0 0
  %2986 = vmatpush1.bf16.msra.mxu0 0
  %2987 = vmatprep.subr.bf16.mxu0 0
  %2988 = vmatpush1.bf16.msra.mxu0 0
  %2989 = vmatprep.mubr.bf16.mxu0 0
  %2990 = vmatmul.mubr.bf16.gmra.mrb[0].mxu0 %v2892
  %v2991 = vpop.f32.mrb[0].mxu0
  %v2992 = vadd.f32 0.0, %v2991
  %v2993 = vpop.f32.mrb[0].mxu0
  %v2994 = vpop.f32.mrb[0].mxu0
  %v2995 = vadd.f32 0.0, %v2994
  %v2996 = vpop.f32.mrb[0].mxu0
  %2997 = vdwg.mxu0
  %v2998 = vadd.f32 %v2543, %v2992
  %v2999 = vadd.f32 %v2544, %v2995
  %v3000 = vld [vmem:[%s51] sm:$0x1]
  %v3002 = vlaneseq
  %v3003 = vshrl.u32 %v3002, 7
  %v3004 = vsub.s32 0, %v3003
  %v3005 = vrot.slane %v3000, %v3004
  %v3007 = vadd.f32 %v2998, %v3005
  %v3008 = vadd.f32 %v2999, %v3005
  %v3009 = vmax.f32 %v3007, 0.0
  %v3010 = vmax.f32 %v3008, 0.0
  %v3011 = vrot.slane %v3009, 7
  %v3012 = vrot.slane %v3010, 7
  %v3013 = vsel %vm404, %v3011, %v3012
  %v3014 = vsel %vm404, %v3012, %v3011
  %v3015 = vsel %vm149, 0.0, %v3014
  %v3016 = vsel %vm150, 0.0, %v3013
  %v3017 = vpack.c.bf16 %v3016, %v3015
  %v3018 = vld [vmem:[%s53] sm:$0xf]
  %v3019 = vld [vmem:[%s53 + $0x4] sm:$0xf]
  %v3020 = vld [vmem:[%s53 + $0x8] sm:$0xf]
  %v3021 = vld [vmem:[%s53 + $0xc] sm:$0xf]
  %v3022 = vld [vmem:[%s53 + $0x10] sm:$0xf]
  %v3023 = vld [vmem:[%s53 + $0x14] sm:$0xf]
  %v3024 = vld [vmem:[%s53 + $0x18] sm:$0xf]
  %v3025 = vld [vmem:[%s53 + $0x1c] sm:$0xf]
  %v3026 = vld [vmem:[%s53 + $0x20] sm:$0xf]
  %v3027 = vld [vmem:[%s53 + $0x24] sm:$0xf]
  %v3028 = vld [vmem:[%s53 + $0x28] sm:$0xf]
  %v3029 = vld [vmem:[%s53 + $0x2c] sm:$0xf]
  %v3030 = vld [vmem:[%s53 + $0x30] sm:$0xf]
  %v3031 = vld [vmem:[%s53 + $0x34] sm:$0xf]
  %v3032 = vld [vmem:[%s53 + $0x38] sm:$0xf]
  %v3033 = vld [vmem:[%s53 + $0x3c] sm:$0xf]
  %v3034 = vpack.c.bf16 %v3010, %v3009
  %s3035 = scalar_lea.vmem %s53, 64
  %v3036 = vld [vmem:[%s3035] sm:$0xf]
  %v3037 = vld [vmem:[%s3035 + $0x4] sm:$0xf]
  %v3038 = vld [vmem:[%s3035 + $0x8] sm:$0xf]
  %v3039 = vld [vmem:[%s3035 + $0xc] sm:$0xf]
  %v3040 = vld [vmem:[%s3035 + $0x10] sm:$0xf]
  %v3041 = vld [vmem:[%s3035 + $0x14] sm:$0xf]
  %v3042 = vld [vmem:[%s3035 + $0x18] sm:$0xf]
  %v3043 = vld [vmem:[%s3035 + $0x1c] sm:$0xf]
  %v3044 = vld [vmem:[%s3035 + $0x20] sm:$0xf]
  %v3045 = vld [vmem:[%s3035 + $0x24] sm:$0xf]
  %v3046 = vld [vmem:[%s3035 + $0x28] sm:$0xf]
  %v3047 = vld [vmem:[%s3035 + $0x2c] sm:$0xf]
  %v3048 = vld [vmem:[%s3035 + $0x30] sm:$0xf]
  %v3049 = vld [vmem:[%s3035 + $0x34] sm:$0xf]
  %v3050 = vld [vmem:[%s3035 + $0x38] sm:$0xf]
  %v3051 = vld [vmem:[%s3035 + $0x3c] sm:$0xf]
  %v3068 = vunpack.c.l.b16 %v3036
  %v3069 = vunpack.c.l.b16 %v3037
  %v3070 = vunpack.c.l.b16 %v3038
  %v3071 = vunpack.c.l.b16 %v3039
  %v3072 = vunpack.c.l.b16 %v3040
  %v3073 = vunpack.c.l.b16 %v3041
  %v3074 = vunpack.c.l.b16 %v3042
  %v3075 = vunpack.c.l.b16 %v3043
  %v3076 = vunpack.c.l.b16 %v3044
  %v3077 = vunpack.c.l.b16 %v3045
  %v3078 = vunpack.c.l.b16 %v3046
  %v3079 = vunpack.c.l.b16 %v3047
  %v3080 = vunpack.c.l.b16 %v3048
  %v3081 = vunpack.c.l.b16 %v3049
  %v3082 = vunpack.c.l.b16 %v3050
  %v3083 = vunpack.c.l.b16 %v3051
  %v3084 = vpack.c.b16 %v3069, %v3068
  %v3085 = vpack.c.b16 %v3071, %v3070
  %v3086 = vpack.c.b16 %v3073, %v3072
  %v3087 = vpack.c.b16 %v3075, %v3074
  %v3088 = vpack.c.b16 %v3077, %v3076
  %v3089 = vpack.c.b16 %v3079, %v3078
  %v3090 = vpack.c.b16 %v3081, %v3080
  %v3091 = vpack.c.b16 %v3083, %v3082
  %3100 = vmatprep.subr.bf16.mxu0 0
  %3101 = vmatpush1.bf16.msra.mxu0 %v3084
  %3102 = vmatprep.subr.bf16.mxu0 0
  %3103 = vmatpush1.bf16.msra.mxu0 %v3085
  %3104 = vmatprep.subr.bf16.mxu0 0
  %3105 = vmatpush1.bf16.msra.mxu0 %v3086
  %3106 = vmatprep.subr.bf16.mxu0 0
  %3107 = vmatpush1.bf16.msra.mxu0 %v3087
  %3108 = vmatprep.subr.bf16.mxu0 0
  %3109 = vmatpush1.bf16.msra.mxu0 %v3088
  %3110 = vmatprep.subr.bf16.mxu0 0
  %3111 = vmatpush1.bf16.msra.mxu0 %v3089
  %3112 = vmatprep.subr.bf16.mxu0 0
  %3113 = vmatpush1.bf16.msra.mxu0 %v3090
  %3114 = vmatprep.subr.bf16.mxu0 0
  %3115 = vmatpush1.bf16.msra.mxu0 %v3091
  %3116 = vmatprep.subr.bf16.mxu0 0
  %3117 = vmatpush1.bf16.msra.mxu0 0
  %3118 = vmatprep.subr.bf16.mxu0 0
  %3119 = vmatpush1.bf16.msra.mxu0 0
  %3120 = vmatprep.subr.bf16.mxu0 0
  %3121 = vmatpush1.bf16.msra.mxu0 0
  %3122 = vmatprep.subr.bf16.mxu0 0
  %3123 = vmatpush1.bf16.msra.mxu0 0
  %3124 = vmatprep.subr.bf16.mxu0 0
  %3125 = vmatpush1.bf16.msra.mxu0 0
  %3126 = vmatprep.subr.bf16.mxu0 0
  %3127 = vmatpush1.bf16.msra.mxu0 0
  %3128 = vmatprep.subr.bf16.mxu0 0
  %3129 = vmatpush1.bf16.msra.mxu0 0
  %3130 = vmatprep.subr.bf16.mxu0 0
  %3131 = vmatpush1.bf16.msra.mxu0 0
  %3132 = vmatprep.mubr.bf16.mxu0 0
  %3133 = vmatmul.mubr.bf16.gmra.mrb[0].mxu0 %v3034
  %v3134 = vpop.f32.mrb[0].mxu0
  %v3135 = vadd.f32 0.0, %v3134
  %v3136 = vpop.f32.mrb[0].mxu0
  %v3137 = vpop.f32.mrb[0].mxu0
  %v3138 = vadd.f32 0.0, %v3137
  %v3139 = vpop.f32.mrb[0].mxu0
  %3140 = vdwg.mxu0
  %v3157 = vunpack.c.l.b16 %v3018
  %v3158 = vunpack.c.l.b16 %v3019
  %v3159 = vunpack.c.l.b16 %v3020
  %v3160 = vunpack.c.l.b16 %v3021
  %v3161 = vunpack.c.l.b16 %v3022
  %v3162 = vunpack.c.l.b16 %v3023
  %v3163 = vunpack.c.l.b16 %v3024
  %v3164 = vunpack.c.l.b16 %v3025
  %v3165 = vunpack.c.l.b16 %v3026
  %v3166 = vunpack.c.l.b16 %v3027
  %v3167 = vunpack.c.l.b16 %v3028
  %v3168 = vunpack.c.l.b16 %v3029
  %v3169 = vunpack.c.l.b16 %v3030
  %v3170 = vunpack.c.l.b16 %v3031
  %v3171 = vunpack.c.l.b16 %v3032
  %v3172 = vunpack.c.l.b16 %v3033
  %v3173 = vpack.c.b16 %v3158, %v3157
  %v3174 = vpack.c.b16 %v3160, %v3159
  %v3175 = vpack.c.b16 %v3162, %v3161
  %v3176 = vpack.c.b16 %v3164, %v3163
  %v3177 = vpack.c.b16 %v3166, %v3165
  %v3178 = vpack.c.b16 %v3168, %v3167
  %v3179 = vpack.c.b16 %v3170, %v3169
  %v3180 = vpack.c.b16 %v3172, %v3171
  %3189 = vmatprep.subr.bf16.mxu0 0
  %3190 = vmatpush1.bf16.msra.mxu0 %v3173
  %3191 = vmatprep.subr.bf16.mxu0 0
  %3192 = vmatpush1.bf16.msra.mxu0 %v3174
  %3193 = vmatprep.subr.bf16.mxu0 0
  %3194 = vmatpush1.bf16.msra.mxu0 %v3175
  %3195 = vmatprep.subr.bf16.mxu0 0
  %3196 = vmatpush1.bf16.msra.mxu0 %v3176
  %3197 = vmatprep.subr.bf16.mxu0 0
  %3198 = vmatpush1.bf16.msra.mxu0 %v3177
  %3199 = vmatprep.subr.bf16.mxu0 0
  %3200 = vmatpush1.bf16.msra.mxu0 %v3178
  %3201 = vmatprep.subr.bf16.mxu0 0
  %3202 = vmatpush1.bf16.msra.mxu0 %v3179
  %3203 = vmatprep.subr.bf16.mxu0 0
  %3204 = vmatpush1.bf16.msra.mxu0 %v3180
  %3205 = vmatprep.subr.bf16.mxu0 0
  %3206 = vmatpush1.bf16.msra.mxu0 0
  %3207 = vmatprep.subr.bf16.mxu0 0
  %3208 = vmatpush1.bf16.msra.mxu0 0
  %3209 = vmatprep.subr.bf16.mxu0 0
  %3210 = vmatpush1.bf16.msra.mxu0 0
  %3211 = vmatprep.subr.bf16.mxu0 0
  %3212 = vmatpush1.bf16.msra.mxu0 0
  %3213 = vmatprep.subr.bf16.mxu0 0
  %3214 = vmatpush1.bf16.msra.mxu0 0
  %3215 = vmatprep.subr.bf16.mxu0 0
  %3216 = vmatpush1.bf16.msra.mxu0 0
  %3217 = vmatprep.subr.bf16.mxu0 0
  %3218 = vmatpush1.bf16.msra.mxu0 0
  %3219 = vmatprep.subr.bf16.mxu0 0
  %3220 = vmatpush1.bf16.msra.mxu0 0
  %3221 = vmatprep.mubr.bf16.mxu0 0
  %3222 = vmatmul.mubr.bf16.gmra.mrb[0].mxu0 %v3017
  %v3223 = vpop.f32.mrb[0].mxu0
  %v3224 = vadd.f32 %v3135, %v3223
  %v3225 = vpop.f32.mrb[0].mxu0
  %v3226 = vpop.f32.mrb[0].mxu0
  %v3227 = vadd.f32 %v3138, %v3226
  %v3228 = vpop.f32.mrb[0].mxu0
  %3229 = vdwg.mxu0
  %v3230 = vrot.slane %v3009, 1
  %v3231 = vrot.slane %v3010, 1
  %v3232 = vsel %vm413, %v3230, %v3231
  %v3233 = vsel %vm413, %v3231, %v3230
  %v3234 = vsel %vm151, 0.0, %v3232
  %v3235 = vsel %vm152, 0.0, %v3233
  %v3236 = vpack.c.bf16 %v3235, %v3234
  %s3237 = scalar_lea.vmem %s53, 128
  %v3238 = vld [vmem:[%s3237] sm:$0xf]
  %v3239 = vld [vmem:[%s3237 + $0x4] sm:$0xf]
  %v3240 = vld [vmem:[%s3237 + $0x8] sm:$0xf]
  %v3241 = vld [vmem:[%s3237 + $0xc] sm:$0xf]
  %v3242 = vld [vmem:[%s3237 + $0x10] sm:$0xf]
  %v3243 = vld [vmem:[%s3237 + $0x14] sm:$0xf]
  %v3244 = vld [vmem:[%s3237 + $0x18] sm:$0xf]
  %v3245 = vld [vmem:[%s3237 + $0x1c] sm:$0xf]
  %v3246 = vld [vmem:[%s3237 + $0x20] sm:$0xf]
  %v3247 = vld [vmem:[%s3237 + $0x24] sm:$0xf]
  %v3248 = vld [vmem:[%s3237 + $0x28] sm:$0xf]
  %v3249 = vld [vmem:[%s3237 + $0x2c] sm:$0xf]
  %v3250 = vld [vmem:[%s3237 + $0x30] sm:$0xf]
  %v3251 = vld [vmem:[%s3237 + $0x34] sm:$0xf]
  %v3252 = vld [vmem:[%s3237 + $0x38] sm:$0xf]
  %v3253 = vld [vmem:[%s3237 + $0x3c] sm:$0xf]
  %v3270 = vunpack.c.l.b16 %v3238
  %v3271 = vunpack.c.l.b16 %v3239
  %v3272 = vunpack.c.l.b16 %v3240
  %v3273 = vunpack.c.l.b16 %v3241
  %v3274 = vunpack.c.l.b16 %v3242
  %v3275 = vunpack.c.l.b16 %v3243
  %v3276 = vunpack.c.l.b16 %v3244
  %v3277 = vunpack.c.l.b16 %v3245
  %v3278 = vunpack.c.l.b16 %v3246
  %v3279 = vunpack.c.l.b16 %v3247
  %v3280 = vunpack.c.l.b16 %v3248
  %v3281 = vunpack.c.l.b16 %v3249
  %v3282 = vunpack.c.l.b16 %v3250
  %v3283 = vunpack.c.l.b16 %v3251
  %v3284 = vunpack.c.l.b16 %v3252
  %v3285 = vunpack.c.l.b16 %v3253
  %v3286 = vpack.c.b16 %v3271, %v3270
  %v3287 = vpack.c.b16 %v3273, %v3272
  %v3288 = vpack.c.b16 %v3275, %v3274
  %v3289 = vpack.c.b16 %v3277, %v3276
  %v3290 = vpack.c.b16 %v3279, %v3278
  %v3291 = vpack.c.b16 %v3281, %v3280
  %v3292 = vpack.c.b16 %v3283, %v3282
  %v3293 = vpack.c.b16 %v3285, %v3284
  %3302 = vmatprep.subr.bf16.mxu0 0
  %3303 = vmatpush1.bf16.msra.mxu0 %v3286
  %3304 = vmatprep.subr.bf16.mxu0 0
  %3305 = vmatpush1.bf16.msra.mxu0 %v3287
  %3306 = vmatprep.subr.bf16.mxu0 0
  %3307 = vmatpush1.bf16.msra.mxu0 %v3288
  %3308 = vmatprep.subr.bf16.mxu0 0
  %3309 = vmatpush1.bf16.msra.mxu0 %v3289
  %3310 = vmatprep.subr.bf16.mxu0 0
  %3311 = vmatpush1.bf16.msra.mxu0 %v3290
  %3312 = vmatprep.subr.bf16.mxu0 0
  %3313 = vmatpush1.bf16.msra.mxu0 %v3291
  %3314 = vmatprep.subr.bf16.mxu0 0
  %3315 = vmatpush1.bf16.msra.mxu0 %v3292
  %3316 = vmatprep.subr.bf16.mxu0 0
  %3317 = vmatpush1.bf16.msra.mxu0 %v3293
  %3318 = vmatprep.subr.bf16.mxu0 0
  %3319 = vmatpush1.bf16.msra.mxu0 0
  %3320 = vmatprep.subr.bf16.mxu0 0
  %3321 = vmatpush1.bf16.msra.mxu0 0
  %3322 = vmatprep.subr.bf16.mxu0 0
  %3323 = vmatpush1.bf16.msra.mxu0 0
  %3324 = vmatprep.subr.bf16.mxu0 0
  %3325 = vmatpush1.bf16.msra.mxu0 0
  %3326 = vmatprep.subr.bf16.mxu0 0
  %3327 = vmatpush1.bf16.msra.mxu0 0
  %3328 = vmatprep.subr.bf16.mxu0 0
  %3329 = vmatpush1.bf16.msra.mxu0 0
  %3330 = vmatprep.subr.bf16.mxu0 0
  %3331 = vmatpush1.bf16.msra.mxu0 0
  %3332 = vmatprep.subr.bf16.mxu0 0
  %3333 = vmatpush1.bf16.msra.mxu0 0
  %3334 = vmatprep.mubr.bf16.mxu0 0
  %3335 = vmatmul.mubr.bf16.gmra.mrb[0].mxu0 %v3236
  %v3336 = vpop.f32.mrb[0].mxu0
  %v3337 = vadd.f32 0.0, %v3336
  %v3338 = vpop.f32.mrb[0].mxu0
  %v3339 = vpop.f32.mrb[0].mxu0
  %v3340 = vadd.f32 0.0, %v3339
  %v3341 = vpop.f32.mrb[0].mxu0
  %3342 = vdwg.mxu0
  %v3343 = vadd.f32 %v3224, %v3337
  %v3344 = vadd.f32 %v3227, %v3340
  %v3345 = vld [vmem:[%s55] sm:$0x1]
  %v3347 = vlaneseq
  %v3348 = vshrl.u32 %v3347, 7
  %v3349 = vsub.s32 0, %v3348
  %v3350 = vrot.slane %v3345, %v3349
  %v3352 = vadd.f32 %v3343, %v3350
  %v3353 = vadd.f32 %v3344, %v3350
  %3354 = vst.msk [vmem:[%s57] sm:$0xff] %vm156, %v3352
  %3355 = vst.msk [vmem:[%s57 + $0x8] sm:$0xff] %vm156, %v3353
  // Predicated region
  $region114: #{vqvae_freq_forward.1} parent=0 // pred_check
    _
  $region115: #{vqvae_freq_forward.1} parent=0 // pred_check_branch
    %3357 = sbr.rel (0) target = $region117
  $region116: #{vqvae_freq_forward.1} parent=0 // pred_region
    _
  $region117: #{vqvae_freq_forward.1} parent=0 // pred_fallthru
    _
  // Predicated region
  $region118: #{vqvae_freq_forward.1} parent=0 // pred_check
    _
  $region119: #{vqvae_freq_forward.1} parent=0 // pred_check_branch
    %3359 = sbr.rel (0) target = $region121
  $region120: #{vqvae_freq_forward.1} parent=0 // pred_region
    _
  $region121: #{vqvae_freq_forward.1} parent=0 // pred_fallthru
    _
  // Predicated region
  $region122: #{vqvae_freq_forward.1} parent=0 // pred_check
    _
  $region123: #{vqvae_freq_forward.1} parent=0 // pred_check_branch
    %3361 = sbr.rel (0) target = $region125
  $region124: #{vqvae_freq_forward.1} parent=0 // pred_region
    _
  $region125: #{vqvae_freq_forward.1} parent=0 // pred_fallthru
    _
  // Predicated region
  $region126: #{vqvae_freq_forward.1} parent=0 // pred_check
    _
  $region127: #{vqvae_freq_forward.1} parent=0 // pred_check_branch
    %3363 = sbr.rel (0) target = $region129
  $region128: #{vqvae_freq_forward.1} parent=0 // pred_region
    _
  $region129: #{vqvae_freq_forward.1} parent=0 // pred_fallthru
    _

</llo_original>
